<compile_context>
chip_gen: v5e
topology: v5e:2x2
jax: 0.10.0
libtpu: 0.0.40
codegen_flags: <defaults>
</compile_context>

<pallas_src>
import jax
import jax.numpy as jnp
from jax import lax
from jax.experimental import pallas as pl
from jax.experimental.pallas import tpu as pltpu


def _round_up(x, m):
    return (x + m - 1) // m * m


def _vmem_tile_bytes(shape, dtype):
    """Approximate VMEM footprint of one buffer ((8,128) tile padding included)."""
    shape = tuple(shape)
    if len(shape) == 1:
        shape = (1,) + shape
    lead = 1
    for d in shape[:-2]:
        lead *= int(d)
    sub = _round_up(int(shape[-2]), 8)
    lane = _round_up(int(shape[-1]), 128)
    return lead * sub * lane * jnp.dtype(dtype).itemsize


def _make_gru_stack_kernel(num_layers, seq_len, chunk_len, batch_pad,
                           hidden_pads, gi_width, matmul_dtype, has_tail):
    """Fused kernel for a stack of single-layer GRUs, one time-chunk per grid step.

    Ref layout (positional):
      x_ref (Tc*Bp, D0),
      [wih_t (Din_pad,3Hp), whh_t (Hp,3Hp), b_gi (1,3Hp), b_hn (1,Hp), h0 (Bp,Hp)] * L,
      y_ref (Tc*Bp, Hp_last), [hN (Bp,Hp)] * L,                       # outputs
      gi_scr (Tc*Bp, gi_width), [h_state (Bp,Hp)] * L,                # scratch
      [act_scr (Tc*Bp, Hp)] * (L-1)
    """
    n_per_layer = 5
    Bp = batch_pad
    Tc = chunk_len

    def kernel(*refs):
        x_ref = refs[0]
        layer_refs = refs[1:1 + n_per_layer * num_layers]
        o0 = 1 + n_per_layer * num_layers
        y_ref = refs[o0]
        hN_refs = refs[o0 + 1:o0 + 1 + num_layers]
        s0 = o0 + 1 + num_layers
        gi_scr = refs[s0]
        h_state = refs[s0 + 1:s0 + 1 + num_layers]
        act_scr = refs[s0 + 1 + num_layers:]

        c = pl.program_id(0)
        last_chunk = pl.num_programs(0) - 1

        for l in range(num_layers):
            wih_ref, whh_ref, bgi_ref, bhn_ref, h0_ref = (
                layer_refs[n_per_layer * l:n_per_layer * (l + 1)])
            Hp = hidden_pads[l]
            src_ref = x_ref if l == 0 else act_scr[l - 1]
            dst_ref = y_ref if l == num_layers - 1 else act_scr[l]

            # h carried across chunks in persistent VMEM scratch; seed at chunk 0.
            @pl.when(c == 0)
            def _init(h_st=h_state[l], h0r=h0_ref):
                h_st[...] = h0r[...]

            # --- input projection for the whole chunk: one big MXU matmul ---
            src = src_ref[...]
            gi = jnp.dot(src.astype(matmul_dtype),
                         wih_ref[...].astype(matmul_dtype),
                         preferred_element_type=jnp.float32) + bgi_ref[...]
            if 3 * Hp == gi_width:
                gi_scr[...] = gi
            else:
                gi_scr[:, :3 * Hp] = gi

            whh = whh_ref[...]                                   # (Hp, 3Hp) f32
            b_hn_b = jnp.broadcast_to(bhn_ref[...], (Bp, Hp))    # hoisted broadcast

            h_init = h_state[l][...]

            def step(t, h, _Hp=Hp, _dst=dst_ref, _whh=whh, _bhn=b_hn_b):
                row = pl.multiple_of(t * Bp, Bp)
                # Only h @ W_hh^T stays on the serial path (f32: no drift compounding).
                gh = jnp.dot(h, _whh, preferred_element_type=jnp.float32)
                gi_t = gi_scr[pl.ds(row, Bp), :3 * _Hp]
                r = jax.nn.sigmoid(gi_t[:, :_Hp] + gh[:, :_Hp])
                z = jax.nn.sigmoid(gi_t[:, _Hp:2 * _Hp] + gh[:, _Hp:2 * _Hp])
                n = jnp.tanh(gi_t[:, 2 * _Hp:3 * _Hp]
                             + r * (gh[:, 2 * _Hp:3 * _Hp] + _bhn))
                h_new = n + z * (h - n)
                if has_tail:
                    valid = (c * Tc + t) < seq_len
                    h_new = jnp.where(valid, h_new, h)
                _dst[pl.ds(row, Bp), :] = h_new
                return h_new

            if Tc <= 16:
                h = h_init
                for t in range(Tc):          # short chunks: fully unrolled
                    h = step(t, h)
            else:
                h = lax.fori_loop(0, Tc, step, h_init, unroll=8)

            h_state[l][...] = h

            @pl.when(c == last_chunk)
            def _final(hN=hN_refs[l], hv=h):
                hN[...] = hv                  # final state written exactly once

    return kernel


def gru_layer_forward(x, params_list, h0_list=None, matmul_dtype=jnp.float32,
                      time_chunk=32):
    """Pallas equivalent of GRU_Layer.forward(x, h).

    x: (S, B, D0) float32.
    params_list[l]: dict with PyTorch-layout w_ih (3H, Din), w_hh (3H, H),
                    b_ih (3H,), b_hh (3H,).
    h0_list: optional list of (B, H) initial states (None -> zeros).
    Returns (y (S, B, H_last), [h_n (B, H_l) per layer]).
    """
    x = jnp.asarray(x, jnp.float32)
    S, B, D0 = x.shape
    L = len(params_list)
    hidden = [int(p["w_hh"].shape[1]) for p in params_list]
    hidden_pads = [_round_up(h, 128) for h in hidden]    # lane-aligned gate blocks
    Hp_last = hidden_pads[-1]

    # Batch padded to a sublane multiple -> every per-step slice/store is aligned.
    Bp = _round_up(B, 8)

    # Time chunking: small sequences run as one fully-unrolled chunk; longer ones
    # stream in chunks of `time_chunk` steps through a 1-D "arbitrary" grid.
    Tc = S if S <= 16 else time_chunk
    S_pad = _round_up(S, Tc)
    num_chunks = S_pad // Tc
    has_tail = S_pad != S

    # Flatten time into the sublane dim: (S_pad*Bp, D0) dense slab.
    x_pad = jnp.zeros((S_pad, Bp, D0), jnp.float32).at[:S, :B, :].set(x)
    x2 = x_pad.reshape(S_pad * Bp, D0)

    flat_inputs = [x2]
    in_specs = [pl.BlockSpec((Tc * Bp, D0), lambda c: (c, 0))]

    in_dims = [D0] + hidden_pads[:-1]   # per-layer (padded) input width
    for l, p in enumerate(params_list):
        H, Hp = hidden[l], hidden_pads[l]
        rows_pad = in_dims[l]
        w_ih = jnp.asarray(p["w_ih"], jnp.float32)   # (3H, Din)
        w_hh = jnp.asarray(p["w_hh"], jnp.float32)   # (3H, H)
        b_ih = jnp.asarray(p["b_ih"], jnp.float32)   # (3H,)
        b_hh = jnp.asarray(p["b_hh"], jnp.float32)   # (3H,)

        def pad_gates_T(w, rpad, _H=H, _Hp=Hp):
            # (3H, Din) -> (rpad, 3Hp): transpose, lane-pad each gate block to Hp.
            blocks = []
            for g in range(3):
                wg = w[g * _H:(g + 1) * _H, :].T              # (Din, H)
                wg = jnp.pad(wg, ((0, rpad - wg.shape[0]), (0, _Hp - _H)))
                blocks.append(wg)
            return jnp.concatenate(blocks, axis=1)

        wih_t = pad_gates_T(w_ih, rows_pad)                    # (rows_pad, 3Hp)
        whh_t = pad_gates_T(w_hh, Hp)                          # (Hp, 3Hp)

        # r/z input+hidden biases fold into one constant; b_hn stays separate.
        b_r = b_ih[:H] + b_hh[:H]
        b_z = b_ih[H:2 * H] + b_hh[H:2 * H]
        b_in = b_ih[2 * H:]
        b_gi = jnp.concatenate([jnp.pad(b_r, (0, Hp - H)),
                                jnp.pad(b_z, (0, Hp - H)),
                                jnp.pad(b_in, (0, Hp - H))]).reshape(1, 3 * Hp)
        b_hn = jnp.pad(b_hh[2 * H:], (0, Hp - H)).reshape(1, Hp)

        if h0_list is None:
            h0 = jnp.zeros((Bp, Hp), jnp.float32)
        else:
            h0 = jnp.zeros((Bp, Hp), jnp.float32).at[:B, :H].set(
                jnp.asarray(h0_list[l], jnp.float32))

        flat_inputs += [wih_t, whh_t, b_gi, b_hn, h0]
        # Constant index_map -> weights/biases/h0 fetched once, not re-DMAed.
        in_specs += [pl.BlockSpec(tuple(wih_t.shape), lambda c: (0, 0)),
                     pl.BlockSpec(tuple(whh_t.shape), lambda c: (0, 0)),
                     pl.BlockSpec(tuple(b_gi.shape), lambda c: (0, 0)),
                     pl.BlockSpec(tuple(b_hn.shape), lambda c: (0, 0)),
                     pl.BlockSpec(tuple(h0.shape), lambda c: (0, 0))]

    out_shape = tuple(
        [jax.ShapeDtypeStruct((S_pad * Bp, Hp_last), jnp.float32)]
        + [jax.ShapeDtypeStruct((Bp, Hp), jnp.float32) for Hp in hidden_pads])
    out_specs = tuple(
        [pl.BlockSpec((Tc * Bp, Hp_last), lambda c: (c, 0))]
        + [pl.BlockSpec((Bp, Hp), lambda c: (0, 0)) for Hp in hidden_pads])

    gi_width = 3 * max(hidden_pads)
    scratch_shapes = (
        [pltpu.VMEM((Tc * Bp, gi_width), jnp.float32)]                # gi
        + [pltpu.VMEM((Bp, Hp), jnp.float32) for Hp in hidden_pads]   # carried h
        + [pltpu.VMEM((Tc * Bp, Hp), jnp.float32)                     # inter-layer act
           for Hp in hidden_pads[:-1]])

    # VMEM budget estimate (tile-padded), double-buffered pipeline blocks + scratch.
    est = 2 * _vmem_tile_bytes((Tc * Bp, D0), jnp.float32)
    est += 2 * _vmem_tile_bytes((Tc * Bp, Hp_last), jnp.float32)
    for arr in flat_inputs[1:]:
        est += 2 * _vmem_tile_bytes(arr.shape, arr.dtype)
    for Hp in hidden_pads:
        est += 2 * _vmem_tile_bytes((Bp, Hp), jnp.float32)
    est += _vmem_tile_bytes((Tc * Bp, gi_width), jnp.float32)
    for Hp in hidden_pads:
        est += _vmem_tile_bytes((Bp, Hp), jnp.float32)
    for Hp in hidden_pads[:-1]:
        est += _vmem_tile_bytes((Tc * Bp, Hp), jnp.float32)
    vmem_limit = int(min(max(est + (4 << 20), 16 << 20), 64 << 20))

    kernel = _make_gru_stack_kernel(L, S, Tc, Bp, hidden_pads, gi_width,
                                    matmul_dtype, has_tail)

    outs = pl.pallas_call(
        kernel,
        out_shape=out_shape,
        grid_spec=pltpu.PrefetchScalarGridSpec(
            num_scalar_prefetch=0,
            grid=(num_chunks,),
            in_specs=in_specs,
            out_specs=out_specs,
            scratch_shapes=scratch_shapes),
        compiler_params=pltpu.CompilerParams(
            dimension_semantics=("arbitrary",),
            vmem_limit_bytes=vmem_limit),
    )(*flat_inputs)

    y = outs[0].reshape(S_pad, Bp, Hp_last)[:S, :B, :hidden[-1]]
    states = [h[:B, :hidden[l]] for l, h in enumerate(outs[1:])]
    return y, states


def init_gru_params(key, input_dim, hidden_dim):
    """Deterministic init matching PyTorch nn.GRU parameter shapes."""
    k1, k2, k3, k4 = jax.random.split(key, 4)
    bound = 1.0 / jnp.sqrt(jnp.float32(hidden_dim))
    w_ih = jax.random.uniform(k1, (3 * hidden_dim, input_dim),
                              jnp.float32, -bound, bound)
    w_hh = jax.random.uniform(k2, (3 * hidden_dim, hidden_dim),
                              jnp.float32, -bound, bound)
    b_ih = jax.random.uniform(k3, (3 * hidden_dim,), jnp.float32, -bound, bound)
    b_hh = jax.random.uniform(k4, (3 * hidden_dim,), jnp.float32, -bound, bound)
    return dict(w_ih=w_ih, w_hh=w_hh, b_ih=b_ih, b_hh=b_hh)


# ---- pure-JAX reference (for correctness check) ----
def _gru_layer_ref(x, p):
    H = p["w_hh"].shape[1]

    def step(h, x_t):
        gi = x_t @ p["w_ih"].T + p["b_ih"]
        gh = h @ p["w_hh"].T + p["b_hh"]
        i_r, i_z, i_n = gi[:, :H], gi[:, H:2 * H], gi[:, 2 * H:]
        h_r, h_z, h_n = gh[:, :H], gh[:, H:2 * H], gh[:, 2 * H:]
        r = jax.nn.sigmoid(i_r + h_r)
        z = jax.nn.sigmoid(i_z + h_z)
        n = jnp.tanh(i_n + r * h_n)
        h_new = (1.0 - z) * n + z * h
        return h_new, h_new

    h0 = jnp.zeros((x.shape[1], H), jnp.float32)
    h_n, y = jax.lax.scan(step, h0, x)
    return y, h_n


def gru_layer_forward_ref(x, params_list):
    states = []
    for p in params_list:
        x, s = _gru_layer_ref(x, p)
        states.append(s)
    return x, states


if __name__ == "__main__":
    # Module config: GRU_Layer(embedding_dim=16, layer=[32, 32])
    embedding_dim = 16
    layer_dims = [32, 32]

    key = jax.random.PRNGKey(0)
    kx, kx2, kp = jax.random.split(key, 3)

    dims = [embedding_dim] + layer_dims
    param_keys = jax.random.split(kp, len(layer_dims))
    params_list = [init_gru_params(param_keys[i], dims[i], dims[i + 1])
                   for i in range(len(layer_dims))]

    # --- small case (seq=8, batch=2): single chunk, fully unrolled time loop ---
    seq_len, batch = 8, 2
    x = jax.random.normal(kx, (seq_len, batch, embedding_dim), jnp.float32)
    y, states = gru_layer_forward(x, params_list)
    y = jax.block_until_ready(y)
    states = [jax.block_until_ready(s) for s in states]

    y_ref, states_ref = gru_layer_forward_ref(x, params_list)
    assert y.shape == y_ref.shape
    assert jnp.allclose(y, y_ref, atol=1e-4, rtol=1e-4)
    for s, sr in zip(states, states_ref):
        assert s.shape == sr.shape
        assert jnp.allclose(s, sr, atol=1e-4, rtol=1e-4)

    # --- longer case (seq=40): exercises chunked grid + fori_loop + tail guard ---
    seq_len2 = 40
    x2 = jax.random.normal(kx2, (seq_len2, batch, embedding_dim), jnp.float32)
    y2, states2 = gru_layer_forward(x2, params_list)
    y2 = jax.block_until_ready(y2)
    y2_ref, states2_ref = gru_layer_forward_ref(x2, params_list)
    assert y2.shape == y2_ref.shape
    assert jnp.allclose(y2, y2_ref, atol=5e-4, rtol=5e-4)
    for s, sr in zip(states2, states2_ref):
        assert jnp.allclose(s, sr, atol=5e-4, rtol=5e-4)

    print("KERNEL_OK")
</pallas_src>

<mosaic_0001>
module attributes {stable_mosaic.version = 11 : i64} {
  func.func @kernel(%arg0: i32, %arg1: memref<64x16xf32, #tpu.memory_space<vmem>>, %arg2: memref<16x384xf32, #tpu.memory_space<vmem>>, %arg3: memref<128x384xf32, #tpu.memory_space<vmem>>, %arg4: memref<1x384xf32, #tpu.memory_space<vmem>>, %arg5: memref<1x128xf32, #tpu.memory_space<vmem>>, %arg6: memref<8x128xf32, #tpu.memory_space<vmem>>, %arg7: memref<128x384xf32, #tpu.memory_space<vmem>>, %arg8: memref<128x384xf32, #tpu.memory_space<vmem>>, %arg9: memref<1x384xf32, #tpu.memory_space<vmem>>, %arg10: memref<1x128xf32, #tpu.memory_space<vmem>>, %arg11: memref<8x128xf32, #tpu.memory_space<vmem>>, %arg12: memref<64x128xf32, #tpu.memory_space<vmem>>, %arg13: memref<8x128xf32, #tpu.memory_space<vmem>>, %arg14: memref<8x128xf32, #tpu.memory_space<vmem>>, %arg15: memref<64x384xf32, #tpu.memory_space<vmem>>, %arg16: memref<8x128xf32, #tpu.memory_space<vmem>>, %arg17: memref<8x128xf32, #tpu.memory_space<vmem>>, %arg18: memref<64x128xf32, #tpu.memory_space<vmem>>) attributes {dimension_semantics = [#tpu.dimension_semantics<arbitrary>], iteration_bounds = array<i64: 1>, scalar_prefetch = 0 : i64, scratch_operands = 4 : i64, tpu.core_type = #tpu.core_type<tc>, window_params = [{transform_indices = @transform_0, window_bounds = array<i64: 64, 16>}, {pipeline_mode = #tpu.pipeline_mode<synchronous>, transform_indices = @transform_1, window_bounds = array<i64: 16, 384>}, {pipeline_mode = #tpu.pipeline_mode<synchronous>, transform_indices = @transform_2, window_bounds = array<i64: 128, 384>}, {pipeline_mode = #tpu.pipeline_mode<synchronous>, transform_indices = @transform_3, window_bounds = array<i64: 1, 384>}, {pipeline_mode = #tpu.pipeline_mode<synchronous>, transform_indices = @transform_4, window_bounds = array<i64: 1, 128>}, {pipeline_mode = #tpu.pipeline_mode<synchronous>, transform_indices = @transform_5, window_bounds = array<i64: 8, 128>}, {pipeline_mode = #tpu.pipeline_mode<synchronous>, transform_indices = @transform_6, window_bounds = array<i64: 128, 384>}, {pipeline_mode = #tpu.pipeline_mode<synchronous>, transform_indices = @transform_7, window_bounds = array<i64: 128, 384>}, {pipeline_mode = #tpu.pipeline_mode<synchronous>, transform_indices = @transform_8, window_bounds = array<i64: 1, 384>}, {pipeline_mode = #tpu.pipeline_mode<synchronous>, transform_indices = @transform_9, window_bounds = array<i64: 1, 128>}, {pipeline_mode = #tpu.pipeline_mode<synchronous>, transform_indices = @transform_10, window_bounds = array<i64: 8, 128>}, {transform_indices = @transform_11, window_bounds = array<i64: 64, 128>}, {pipeline_mode = #tpu.pipeline_mode<synchronous>, transform_indices = @transform_12, window_bounds = array<i64: 8, 128>}, {pipeline_mode = #tpu.pipeline_mode<synchronous>, transform_indices = @transform_13, window_bounds = array<i64: 8, 128>}]} {
    %c0_i32 = arith.constant 0 : i32
    %0 = arith.cmpi eq, %arg0, %c0_i32 : i32
    %1 = arith.extui %0 : i1 to i32
    %c0_i32_0 = arith.constant 0 : i32
    %2 = arith.cmpi ne, %1, %c0_i32_0 : i32
    scf.if %2 {
      %c0_128 = arith.constant 0 : index
      %c0_129 = arith.constant 0 : index
      %534 = vector.load %arg6[%c0_128, %c0_129] : memref<8x128xf32, #tpu.memory_space<vmem>>, vector<8x128xf32>
      %c0_130 = arith.constant 0 : index
      %c0_131 = arith.constant 0 : index
      %535 = vector.load %arg16[%c0_130, %c0_131] : memref<8x128xf32, #tpu.memory_space<vmem>>, vector<8x128xf32>
      tpu.vector_store %arg16[%c0_130, %c0_131], %534 {strides = array<i32>} : memref<8x128xf32, #tpu.memory_space<vmem>>, vector<8x128xf32>,
    } else {
    }
    %c0 = arith.constant 0 : index
    %c0_1 = arith.constant 0 : index
    %3 = vector.load %arg1[%c0, %c0_1] : memref<64x16xf32, #tpu.memory_space<vmem>>, vector<64x16xf32>
    %c0_2 = arith.constant 0 : index
    %c0_3 = arith.constant 0 : index
    %4 = vector.load %arg2[%c0_2, %c0_3] : memref<16x384xf32, #tpu.memory_space<vmem>>, vector<16x384xf32>
    %cst = arith.constant dense<0.000000e+00> : vector<64x384xf32>
    %5 = tpu.matmul %3, %4, %cst {dimension_numbers = #tpu.dot_dimension_numbers<[1], [0], [0], [1], [0, 0, 1, 1], [], []>} : vector<64x16xf32>, vector<16x384xf32>, vector<64x384xf32> -> vector<64x384xf32>
    %c0_4 = arith.constant 0 : index
    %c0_5 = arith.constant 0 : index
    %6 = vector.load %arg4[%c0_4, %c0_5] : memref<1x384xf32, #tpu.memory_space<vmem>>, vector<1x384xf32>
    %7 = vector.broadcast %6 : vector<1x384xf32> to vector<64x384xf32>
    %8 = arith.addf %5, %7 : vector<64x384xf32>
    %c0_6 = arith.constant 0 : index
    %c0_7 = arith.constant 0 : index
    %9 = vector.load %arg15[%c0_6, %c0_7] : memref<64x384xf32, #tpu.memory_space<vmem>>, vector<64x384xf32>
    tpu.vector_store %arg15[%c0_6, %c0_7], %8 {strides = array<i32>} : memref<64x384xf32, #tpu.memory_space<vmem>>, vector<64x384xf32>,
    %c0_8 = arith.constant 0 : index
    %c0_9 = arith.constant 0 : index
    %10 = vector.load %arg3[%c0_8, %c0_9] : memref<128x384xf32, #tpu.memory_space<vmem>>, vector<128x384xf32>
    %c0_10 = arith.constant 0 : index
    %c0_11 = arith.constant 0 : index
    %11 = vector.load %arg5[%c0_10, %c0_11] : memref<1x128xf32, #tpu.memory_space<vmem>>, vector<1x128xf32>
    %12 = vector.shape_cast %11 : vector<1x128xf32> to vector<1x128xf32>
    %13 = vector.broadcast %12 : vector<1x128xf32> to vector<8x128xf32>
    %c0_12 = arith.constant 0 : index
    %c0_13 = arith.constant 0 : index
    %14 = vector.load %arg16[%c0_12, %c0_13] : memref<8x128xf32, #tpu.memory_space<vmem>>, vector<8x128xf32>
    %c0_i32_14 = arith.constant 0 : i32
    %15 = tpu.assume_multiple %c0_i32_14, 8 : i32
    %cst_15 = arith.constant dense<0.000000e+00> : vector<8x384xf32>
    %16 = tpu.matmul %14, %10, %cst_15 {dimension_numbers = #tpu.dot_dimension_numbers<[1], [0], [0], [1], [0, 0, 1, 1], [], []>} : vector<8x128xf32>, vector<128x384xf32>, vector<8x384xf32> -> vector<8x384xf32>
    %17 = arith.index_cast %15 : i32 to index
    %c0_16 = arith.constant 0 : index
    %18 = vector.load %arg15[%17, %c0_16] : memref<64x384xf32, #tpu.memory_space<vmem>>, vector<8x384xf32>
    %19 = vector.extract_strided_slice %18 {offsets = [0, 0], sizes = [8, 128], strides = [1, 1]} : vector<8x384xf32> to vector<8x128xf32>
    %20 = vector.extract_strided_slice %16 {offsets = [0, 0], sizes = [8, 128], strides = [1, 1]} : vector<8x384xf32> to vector<8x128xf32>
    %21 = arith.addf %19, %20 : vector<8x128xf32>
    %22 = arith.negf %21 : vector<8x128xf32>
    %23 = math.exp %22 : vector<8x128xf32>
    %cst_17 = arith.constant 1.000000e+00 : f32
    %24 = vector.broadcast %cst_17 : f32 to vector<8x128xf32>
    %25 = arith.addf %24, %23 : vector<8x128xf32>
    %26 = arith.divf %24, %25 : vector<8x128xf32>
    %27 = vector.extract_strided_slice %18 {offsets = [0, 128], sizes = [8, 128], strides = [1, 1]} : vector<8x384xf32> to vector<8x128xf32>
    %28 = vector.extract_strided_slice %16 {offsets = [0, 128], sizes = [8, 128], strides = [1, 1]} : vector<8x384xf32> to vector<8x128xf32>
    %29 = arith.addf %27, %28 : vector<8x128xf32>
    %30 = arith.negf %29 : vector<8x128xf32>
    %31 = math.exp %30 : vector<8x128xf32>
    %cst_18 = arith.constant 1.000000e+00 : f32
    %32 = vector.broadcast %cst_18 : f32 to vector<8x128xf32>
    %33 = arith.addf %32, %31 : vector<8x128xf32>
    %34 = arith.divf %32, %33 : vector<8x128xf32>
    %35 = vector.extract_strided_slice %18 {offsets = [0, 256], sizes = [8, 128], strides = [1, 1]} : vector<8x384xf32> to vector<8x128xf32>
    %36 = vector.extract_strided_slice %16 {offsets = [0, 256], sizes = [8, 128], strides = [1, 1]} : vector<8x384xf32> to vector<8x128xf32>
    %37 = arith.addf %36, %13 : vector<8x128xf32>
    %38 = arith.mulf %26, %37 : vector<8x128xf32>
    %39 = arith.addf %35, %38 : vector<8x128xf32>
    %40 = math.tanh %39 : vector<8x128xf32>
    %41 = arith.subf %14, %40 : vector<8x128xf32>
    %42 = arith.mulf %34, %41 : vector<8x128xf32>
    %43 = arith.addf %40, %42 : vector<8x128xf32>
    %44 = arith.index_cast %15 : i32 to index
    %c0_19 = arith.constant 0 : index
    %45 = vector.load %arg18[%44, %c0_19] : memref<64x128xf32, #tpu.memory_space<vmem>>, vector<8x128xf32>
    tpu.vector_store %arg18[%44, %c0_19], %43 {strides = array<i32>} : memref<64x128xf32, #tpu.memory_space<vmem>>, vector<8x128xf32>,
    %c8_i32 = arith.constant 8 : i32
    %46 = tpu.assume_multiple %c8_i32, 8 : i32
    %cst_20 = arith.constant dense<0.000000e+00> : vector<8x384xf32>
    %47 = tpu.matmul %43, %10, %cst_20 {dimension_numbers = #tpu.dot_dimension_numbers<[1], [0], [0], [1], [0, 0, 1, 1], [], []>} : vector<8x128xf32>, vector<128x384xf32>, vector<8x384xf32> -> vector<8x384xf32>
    %48 = arith.index_cast %46 : i32 to index
    %c0_21 = arith.constant 0 : index
    %49 = vector.load %arg15[%48, %c0_21] : memref<64x384xf32, #tpu.memory_space<vmem>>, vector<8x384xf32>
    %50 = vector.extract_strided_slice %49 {offsets = [0, 0], sizes = [8, 128], strides = [1, 1]} : vector<8x384xf32> to vector<8x128xf32>
    %51 = vector.extract_strided_slice %47 {offsets = [0, 0], sizes = [8, 128], strides = [1, 1]} : vector<8x384xf32> to vector<8x128xf32>
    %52 = arith.addf %50, %51 : vector<8x128xf32>
    %53 = arith.negf %52 : vector<8x128xf32>
    %54 = math.exp %53 : vector<8x128xf32>
    %cst_22 = arith.constant 1.000000e+00 : f32
    %55 = vector.broadcast %cst_22 : f32 to vector<8x128xf32>
    %56 = arith.addf %55, %54 : vector<8x128xf32>
    %57 = arith.divf %55, %56 : vector<8x128xf32>
    %58 = vector.extract_strided_slice %49 {offsets = [0, 128], sizes = [8, 128], strides = [1, 1]} : vector<8x384xf32> to vector<8x128xf32>
    %59 = vector.extract_strided_slice %47 {offsets = [0, 128], sizes = [8, 128], strides = [1, 1]} : vector<8x384xf32> to vector<8x128xf32>
    %60 = arith.addf %58, %59 : vector<8x128xf32>
    %61 = arith.negf %60 : vector<8x128xf32>
    %62 = math.exp %61 : vector<8x128xf32>
    %cst_23 = arith.constant 1.000000e+00 : f32
    %63 = vector.broadcast %cst_23 : f32 to vector<8x128xf32>
    %64 = arith.addf %63, %62 : vector<8x128xf32>
    %65 = arith.divf %63, %64 : vector<8x128xf32>
    %66 = vector.extract_strided_slice %49 {offsets = [0, 256], sizes = [8, 128], strides = [1, 1]} : vector<8x384xf32> to vector<8x128xf32>
    %67 = vector.extract_strided_slice %47 {offsets = [0, 256], sizes = [8, 128], strides = [1, 1]} : vector<8x384xf32> to vector<8x128xf32>
    %68 = arith.addf %67, %13 : vector<8x128xf32>
    %69 = arith.mulf %57, %68 : vector<8x128xf32>
    %70 = arith.addf %66, %69 : vector<8x128xf32>
    %71 = math.tanh %70 : vector<8x128xf32>
    %72 = arith.subf %43, %71 : vector<8x128xf32>
    %73 = arith.mulf %65, %72 : vector<8x128xf32>
    %74 = arith.addf %71, %73 : vector<8x128xf32>
    %75 = arith.index_cast %46 : i32 to index
    %c0_24 = arith.constant 0 : index
    %76 = vector.load %arg18[%75, %c0_24] : memref<64x128xf32, #tpu.memory_space<vmem>>, vector<8x128xf32>
    tpu.vector_store %arg18[%75, %c0_24], %74 {strides = array<i32>} : memref<64x128xf32, #tpu.memory_space<vmem>>, vector<8x128xf32>,
    %c16_i32 = arith.constant 16 : i32
    %77 = tpu.assume_multiple %c16_i32, 8 : i32
    %cst_25 = arith.constant dense<0.000000e+00> : vector<8x384xf32>
    %78 = tpu.matmul %74, %10, %cst_25 {dimension_numbers = #tpu.dot_dimension_numbers<[1], [0], [0], [1], [0, 0, 1, 1], [], []>} : vector<8x128xf32>, vector<128x384xf32>, vector<8x384xf32> -> vector<8x384xf32>
    %79 = arith.index_cast %77 : i32 to index
    %c0_26 = arith.constant 0 : index
    %80 = vector.load %arg15[%79, %c0_26] : memref<64x384xf32, #tpu.memory_space<vmem>>, vector<8x384xf32>
    %81 = vector.extract_strided_slice %80 {offsets = [0, 0], sizes = [8, 128], strides = [1, 1]} : vector<8x384xf32> to vector<8x128xf32>
    %82 = vector.extract_strided_slice %78 {offsets = [0, 0], sizes = [8, 128], strides = [1, 1]} : vector<8x384xf32> to vector<8x128xf32>
    %83 = arith.addf %81, %82 : vector<8x128xf32>
    %84 = arith.negf %83 : vector<8x128xf32>
    %85 = math.exp %84 : vector<8x128xf32>
    %cst_27 = arith.constant 1.000000e+00 : f32
    %86 = vector.broadcast %cst_27 : f32 to vector<8x128xf32>
    %87 = arith.addf %86, %85 : vector<8x128xf32>
    %88 = arith.divf %86, %87 : vector<8x128xf32>
    %89 = vector.extract_strided_slice %80 {offsets = [0, 128], sizes = [8, 128], strides = [1, 1]} : vector<8x384xf32> to vector<8x128xf32>
    %90 = vector.extract_strided_slice %78 {offsets = [0, 128], sizes = [8, 128], strides = [1, 1]} : vector<8x384xf32> to vector<8x128xf32>
    %91 = arith.addf %89, %90 : vector<8x128xf32>
    %92 = arith.negf %91 : vector<8x128xf32>
    %93 = math.exp %92 : vector<8x128xf32>
    %cst_28 = arith.constant 1.000000e+00 : f32
    %94 = vector.broadcast %cst_28 : f32 to vector<8x128xf32>
    %95 = arith.addf %94, %93 : vector<8x128xf32>
    %96 = arith.divf %94, %95 : vector<8x128xf32>
    %97 = vector.extract_strided_slice %80 {offsets = [0, 256], sizes = [8, 128], strides = [1, 1]} : vector<8x384xf32> to vector<8x128xf32>
    %98 = vector.extract_strided_slice %78 {offsets = [0, 256], sizes = [8, 128], strides = [1, 1]} : vector<8x384xf32> to vector<8x128xf32>
    %99 = arith.addf %98, %13 : vector<8x128xf32>
    %100 = arith.mulf %88, %99 : vector<8x128xf32>
    %101 = arith.addf %97, %100 : vector<8x128xf32>
    %102 = math.tanh %101 : vector<8x128xf32>
    %103 = arith.subf %74, %102 : vector<8x128xf32>
    %104 = arith.mulf %96, %103 : vector<8x128xf32>
    %105 = arith.addf %102, %104 : vector<8x128xf32>
    %106 = arith.index_cast %77 : i32 to index
    %c0_29 = arith.constant 0 : index
    %107 = vector.load %arg18[%106, %c0_29] : memref<64x128xf32, #tpu.memory_space<vmem>>, vector<8x128xf32>
    tpu.vector_store %arg18[%106, %c0_29], %105 {strides = array<i32>} : memref<64x128xf32, #tpu.memory_space<vmem>>, vector<8x128xf32>,
    %c24_i32 = arith.constant 24 : i32
    %108 = tpu.assume_multiple %c24_i32, 8 : i32
    %cst_30 = arith.constant dense<0.000000e+00> : vector<8x384xf32>
    %109 = tpu.matmul %105, %10, %cst_30 {dimension_numbers = #tpu.dot_dimension_numbers<[1], [0], [0], [1], [0, 0, 1, 1], [], []>} : vector<8x128xf32>, vector<128x384xf32>, vector<8x384xf32> -> vector<8x384xf32>
    %110 = arith.index_cast %108 : i32 to index
    %c0_31 = arith.constant 0 : index
    %111 = vector.load %arg15[%110, %c0_31] : memref<64x384xf32, #tpu.memory_space<vmem>>, vector<8x384xf32>
    %112 = vector.extract_strided_slice %111 {offsets = [0, 0], sizes = [8, 128], strides = [1, 1]} : vector<8x384xf32> to vector<8x128xf32>
    %113 = vector.extract_strided_slice %109 {offsets = [0, 0], sizes = [8, 128], strides = [1, 1]} : vector<8x384xf32> to vector<8x128xf32>
    %114 = arith.addf %112, %113 : vector<8x128xf32>
    %115 = arith.negf %114 : vector<8x128xf32>
    %116 = math.exp %115 : vector<8x128xf32>
    %cst_32 = arith.constant 1.000000e+00 : f32
    %117 = vector.broadcast %cst_32 : f32 to vector<8x128xf32>
    %118 = arith.addf %117, %116 : vector<8x128xf32>
    %119 = arith.divf %117, %118 : vector<8x128xf32>
    %120 = vector.extract_strided_slice %111 {offsets = [0, 128], sizes = [8, 128], strides = [1, 1]} : vector<8x384xf32> to vector<8x128xf32>
    %121 = vector.extract_strided_slice %109 {offsets = [0, 128], sizes = [8, 128], strides = [1, 1]} : vector<8x384xf32> to vector<8x128xf32>
    %122 = arith.addf %120, %121 : vector<8x128xf32>
    %123 = arith.negf %122 : vector<8x128xf32>
    %124 = math.exp %123 : vector<8x128xf32>
    %cst_33 = arith.constant 1.000000e+00 : f32
    %125 = vector.broadcast %cst_33 : f32 to vector<8x128xf32>
    %126 = arith.addf %125, %124 : vector<8x128xf32>
    %127 = arith.divf %125, %126 : vector<8x128xf32>
    %128 = vector.extract_strided_slice %111 {offsets = [0, 256], sizes = [8, 128], strides = [1, 1]} : vector<8x384xf32> to vector<8x128xf32>
    %129 = vector.extract_strided_slice %109 {offsets = [0, 256], sizes = [8, 128], strides = [1, 1]} : vector<8x384xf32> to vector<8x128xf32>
    %130 = arith.addf %129, %13 : vector<8x128xf32>
    %131 = arith.mulf %119, %130 : vector<8x128xf32>
    %132 = arith.addf %128, %131 : vector<8x128xf32>
    %133 = math.tanh %132 : vector<8x128xf32>
    %134 = arith.subf %105, %133 : vector<8x128xf32>
    %135 = arith.mulf %127, %134 : vector<8x128xf32>
    %136 = arith.addf %133, %135 : vector<8x128xf32>
    %137 = arith.index_cast %108 : i32 to index
    %c0_34 = arith.constant 0 : index
    %138 = vector.load %arg18[%137, %c0_34] : memref<64x128xf32, #tpu.memory_space<vmem>>, vector<8x128xf32>
    tpu.vector_store %arg18[%137, %c0_34], %136 {strides = array<i32>} : memref<64x128xf32, #tpu.memory_space<vmem>>, vector<8x128xf32>,
    %c32_i32 = arith.constant 32 : i32
    %139 = tpu.assume_multiple %c32_i32, 8 : i32
    %cst_35 = arith.constant dense<0.000000e+00> : vector<8x384xf32>
    %140 = tpu.matmul %136, %10, %cst_35 {dimension_numbers = #tpu.dot_dimension_numbers<[1], [0], [0], [1], [0, 0, 1, 1], [], []>} : vector<8x128xf32>, vector<128x384xf32>, vector<8x384xf32> -> vector<8x384xf32>
    %141 = arith.index_cast %139 : i32 to index
    %c0_36 = arith.constant 0 : index
    %142 = vector.load %arg15[%141, %c0_36] : memref<64x384xf32, #tpu.memory_space<vmem>>, vector<8x384xf32>
    %143 = vector.extract_strided_slice %142 {offsets = [0, 0], sizes = [8, 128], strides = [1, 1]} : vector<8x384xf32> to vector<8x128xf32>
    %144 = vector.extract_strided_slice %140 {offsets = [0, 0], sizes = [8, 128], strides = [1, 1]} : vector<8x384xf32> to vector<8x128xf32>
    %145 = arith.addf %143, %144 : vector<8x128xf32>
    %146 = arith.negf %145 : vector<8x128xf32>
    %147 = math.exp %146 : vector<8x128xf32>
    %cst_37 = arith.constant 1.000000e+00 : f32
    %148 = vector.broadcast %cst_37 : f32 to vector<8x128xf32>
    %149 = arith.addf %148, %147 : vector<8x128xf32>
    %150 = arith.divf %148, %149 : vector<8x128xf32>
    %151 = vector.extract_strided_slice %142 {offsets = [0, 128], sizes = [8, 128], strides = [1, 1]} : vector<8x384xf32> to vector<8x128xf32>
    %152 = vector.extract_strided_slice %140 {offsets = [0, 128], sizes = [8, 128], strides = [1, 1]} : vector<8x384xf32> to vector<8x128xf32>
    %153 = arith.addf %151, %152 : vector<8x128xf32>
    %154 = arith.negf %153 : vector<8x128xf32>
    %155 = math.exp %154 : vector<8x128xf32>
    %cst_38 = arith.constant 1.000000e+00 : f32
    %156 = vector.broadcast %cst_38 : f32 to vector<8x128xf32>
    %157 = arith.addf %156, %155 : vector<8x128xf32>
    %158 = arith.divf %156, %157 : vector<8x128xf32>
    %159 = vector.extract_strided_slice %142 {offsets = [0, 256], sizes = [8, 128], strides = [1, 1]} : vector<8x384xf32> to vector<8x128xf32>
    %160 = vector.extract_strided_slice %140 {offsets = [0, 256], sizes = [8, 128], strides = [1, 1]} : vector<8x384xf32> to vector<8x128xf32>
    %161 = arith.addf %160, %13 : vector<8x128xf32>
    %162 = arith.mulf %150, %161 : vector<8x128xf32>
    %163 = arith.addf %159, %162 : vector<8x128xf32>
    %164 = math.tanh %163 : vector<8x128xf32>
    %165 = arith.subf %136, %164 : vector<8x128xf32>
    %166 = arith.mulf %158, %165 : vector<8x128xf32>
    %167 = arith.addf %164, %166 : vector<8x128xf32>
    %168 = arith.index_cast %139 : i32 to index
    %c0_39 = arith.constant 0 : index
    %169 = vector.load %arg18[%168, %c0_39] : memref<64x128xf32, #tpu.memory_space<vmem>>, vector<8x128xf32>
    tpu.vector_store %arg18[%168, %c0_39], %167 {strides = array<i32>} : memref<64x128xf32, #tpu.memory_space<vmem>>, vector<8x128xf32>,
    %c40_i32 = arith.constant 40 : i32
    %170 = tpu.assume_multiple %c40_i32, 8 : i32
    %cst_40 = arith.constant dense<0.000000e+00> : vector<8x384xf32>
    %171 = tpu.matmul %167, %10, %cst_40 {dimension_numbers = #tpu.dot_dimension_numbers<[1], [0], [0], [1], [0, 0, 1, 1], [], []>} : vector<8x128xf32>, vector<128x384xf32>, vector<8x384xf32> -> vector<8x384xf32>
    %172 = arith.index_cast %170 : i32 to index
    %c0_41 = arith.constant 0 : index
    %173 = vector.load %arg15[%172, %c0_41] : memref<64x384xf32, #tpu.memory_space<vmem>>, vector<8x384xf32>
    %174 = vector.extract_strided_slice %173 {offsets = [0, 0], sizes = [8, 128], strides = [1, 1]} : vector<8x384xf32> to vector<8x128xf32>
    %175 = vector.extract_strided_slice %171 {offsets = [0, 0], sizes = [8, 128], strides = [1, 1]} : vector<8x384xf32> to vector<8x128xf32>
    %176 = arith.addf %174, %175 : vector<8x128xf32>
    %177 = arith.negf %176 : vector<8x128xf32>
    %178 = math.exp %177 : vector<8x128xf32>
    %cst_42 = arith.constant 1.000000e+00 : f32
    %179 = vector.broadcast %cst_42 : f32 to vector<8x128xf32>
    %180 = arith.addf %179, %178 : vector<8x128xf32>
    %181 = arith.divf %179, %180 : vector<8x128xf32>
    %182 = vector.extract_strided_slice %173 {offsets = [0, 128], sizes = [8, 128], strides = [1, 1]} : vector<8x384xf32> to vector<8x128xf32>
    %183 = vector.extract_strided_slice %171 {offsets = [0, 128], sizes = [8, 128], strides = [1, 1]} : vector<8x384xf32> to vector<8x128xf32>
    %184 = arith.addf %182, %183 : vector<8x128xf32>
    %185 = arith.negf %184 : vector<8x128xf32>
    %186 = math.exp %185 : vector<8x128xf32>
    %cst_43 = arith.constant 1.000000e+00 : f32
    %187 = vector.broadcast %cst_43 : f32 to vector<8x128xf32>
    %188 = arith.addf %187, %186 : vector<8x128xf32>
    %189 = arith.divf %187, %188 : vector<8x128xf32>
    %190 = vector.extract_strided_slice %173 {offsets = [0, 256], sizes = [8, 128], strides = [1, 1]} : vector<8x384xf32> to vector<8x128xf32>
    %191 = vector.extract_strided_slice %171 {offsets = [0, 256], sizes = [8, 128], strides = [1, 1]} : vector<8x384xf32> to vector<8x128xf32>
    %192 = arith.addf %191, %13 : vector<8x128xf32>
    %193 = arith.mulf %181, %192 : vector<8x128xf32>
    %194 = arith.addf %190, %193 : vector<8x128xf32>
    %195 = math.tanh %194 : vector<8x128xf32>
    %196 = arith.subf %167, %195 : vector<8x128xf32>
    %197 = arith.mulf %189, %196 : vector<8x128xf32>
    %198 = arith.addf %195, %197 : vector<8x128xf32>
    %199 = arith.index_cast %170 : i32 to index
    %c0_44 = arith.constant 0 : index
    %200 = vector.load %arg18[%199, %c0_44] : memref<64x128xf32, #tpu.memory_space<vmem>>, vector<8x128xf32>
    tpu.vector_store %arg18[%199, %c0_44], %198 {strides = array<i32>} : memref<64x128xf32, #tpu.memory_space<vmem>>, vector<8x128xf32>,
    %c48_i32 = arith.constant 48 : i32
    %201 = tpu.assume_multiple %c48_i32, 8 : i32
    %cst_45 = arith.constant dense<0.000000e+00> : vector<8x384xf32>
    %202 = tpu.matmul %198, %10, %cst_45 {dimension_numbers = #tpu.dot_dimension_numbers<[1], [0], [0], [1], [0, 0, 1, 1], [], []>} : vector<8x128xf32>, vector<128x384xf32>, vector<8x384xf32> -> vector<8x384xf32>
    %203 = arith.index_cast %201 : i32 to index
    %c0_46 = arith.constant 0 : index
    %204 = vector.load %arg15[%203, %c0_46] : memref<64x384xf32, #tpu.memory_space<vmem>>, vector<8x384xf32>
    %205 = vector.extract_strided_slice %204 {offsets = [0, 0], sizes = [8, 128], strides = [1, 1]} : vector<8x384xf32> to vector<8x128xf32>
    %206 = vector.extract_strided_slice %202 {offsets = [0, 0], sizes = [8, 128], strides = [1, 1]} : vector<8x384xf32> to vector<8x128xf32>
    %207 = arith.addf %205, %206 : vector<8x128xf32>
    %208 = arith.negf %207 : vector<8x128xf32>
    %209 = math.exp %208 : vector<8x128xf32>
    %cst_47 = arith.constant 1.000000e+00 : f32
    %210 = vector.broadcast %cst_47 : f32 to vector<8x128xf32>
    %211 = arith.addf %210, %209 : vector<8x128xf32>
    %212 = arith.divf %210, %211 : vector<8x128xf32>
    %213 = vector.extract_strided_slice %204 {offsets = [0, 128], sizes = [8, 128], strides = [1, 1]} : vector<8x384xf32> to vector<8x128xf32>
    %214 = vector.extract_strided_slice %202 {offsets = [0, 128], sizes = [8, 128], strides = [1, 1]} : vector<8x384xf32> to vector<8x128xf32>
    %215 = arith.addf %213, %214 : vector<8x128xf32>
    %216 = arith.negf %215 : vector<8x128xf32>
    %217 = math.exp %216 : vector<8x128xf32>
    %cst_48 = arith.constant 1.000000e+00 : f32
    %218 = vector.broadcast %cst_48 : f32 to vector<8x128xf32>
    %219 = arith.addf %218, %217 : vector<8x128xf32>
    %220 = arith.divf %218, %219 : vector<8x128xf32>
    %221 = vector.extract_strided_slice %204 {offsets = [0, 256], sizes = [8, 128], strides = [1, 1]} : vector<8x384xf32> to vector<8x128xf32>
    %222 = vector.extract_strided_slice %202 {offsets = [0, 256], sizes = [8, 128], strides = [1, 1]} : vector<8x384xf32> to vector<8x128xf32>
    %223 = arith.addf %222, %13 : vector<8x128xf32>
    %224 = arith.mulf %212, %223 : vector<8x128xf32>
    %225 = arith.addf %221, %224 : vector<8x128xf32>
    %226 = math.tanh %225 : vector<8x128xf32>
    %227 = arith.subf %198, %226 : vector<8x128xf32>
    %228 = arith.mulf %220, %227 : vector<8x128xf32>
    %229 = arith.addf %226, %228 : vector<8x128xf32>
    %230 = arith.index_cast %201 : i32 to index
    %c0_49 = arith.constant 0 : index
    %231 = vector.load %arg18[%230, %c0_49] : memref<64x128xf32, #tpu.memory_space<vmem>>, vector<8x128xf32>
    tpu.vector_store %arg18[%230, %c0_49], %229 {strides = array<i32>} : memref<64x128xf32, #tpu.memory_space<vmem>>, vector<8x128xf32>,
    %c56_i32 = arith.constant 56 : i32
    %232 = tpu.assume_multiple %c56_i32, 8 : i32
    %cst_50 = arith.constant dense<0.000000e+00> : vector<8x384xf32>
    %233 = tpu.matmul %229, %10, %cst_50 {dimension_numbers = #tpu.dot_dimension_numbers<[1], [0], [0], [1], [0, 0, 1, 1], [], []>} : vector<8x128xf32>, vector<128x384xf32>, vector<8x384xf32> -> vector<8x384xf32>
    %234 = arith.index_cast %232 : i32 to index
    %c0_51 = arith.constant 0 : index
    %235 = vector.load %arg15[%234, %c0_51] : memref<64x384xf32, #tpu.memory_space<vmem>>, vector<8x384xf32>
    %236 = vector.extract_strided_slice %235 {offsets = [0, 0], sizes = [8, 128], strides = [1, 1]} : vector<8x384xf32> to vector<8x128xf32>
    %237 = vector.extract_strided_slice %233 {offsets = [0, 0], sizes = [8, 128], strides = [1, 1]} : vector<8x384xf32> to vector<8x128xf32>
    %238 = arith.addf %236, %237 : vector<8x128xf32>
    %239 = arith.negf %238 : vector<8x128xf32>
    %240 = math.exp %239 : vector<8x128xf32>
    %cst_52 = arith.constant 1.000000e+00 : f32
    %241 = vector.broadcast %cst_52 : f32 to vector<8x128xf32>
    %242 = arith.addf %241, %240 : vector<8x128xf32>
    %243 = arith.divf %241, %242 : vector<8x128xf32>
    %244 = vector.extract_strided_slice %235 {offsets = [0, 128], sizes = [8, 128], strides = [1, 1]} : vector<8x384xf32> to vector<8x128xf32>
    %245 = vector.extract_strided_slice %233 {offsets = [0, 128], sizes = [8, 128], strides = [1, 1]} : vector<8x384xf32> to vector<8x128xf32>
    %246 = arith.addf %244, %245 : vector<8x128xf32>
    %247 = arith.negf %246 : vector<8x128xf32>
    %248 = math.exp %247 : vector<8x128xf32>
    %cst_53 = arith.constant 1.000000e+00 : f32
    %249 = vector.broadcast %cst_53 : f32 to vector<8x128xf32>
    %250 = arith.addf %249, %248 : vector<8x128xf32>
    %251 = arith.divf %249, %250 : vector<8x128xf32>
    %252 = vector.extract_strided_slice %235 {offsets = [0, 256], sizes = [8, 128], strides = [1, 1]} : vector<8x384xf32> to vector<8x128xf32>
    %253 = vector.extract_strided_slice %233 {offsets = [0, 256], sizes = [8, 128], strides = [1, 1]} : vector<8x384xf32> to vector<8x128xf32>
    %254 = arith.addf %253, %13 : vector<8x128xf32>
    %255 = arith.mulf %243, %254 : vector<8x128xf32>
    %256 = arith.addf %252, %255 : vector<8x128xf32>
    %257 = math.tanh %256 : vector<8x128xf32>
    %258 = arith.subf %229, %257 : vector<8x128xf32>
    %259 = arith.mulf %251, %258 : vector<8x128xf32>
    %260 = arith.addf %257, %259 : vector<8x128xf32>
    %261 = arith.index_cast %232 : i32 to index
    %c0_54 = arith.constant 0 : index
    %262 = vector.load %arg18[%261, %c0_54] : memref<64x128xf32, #tpu.memory_space<vmem>>, vector<8x128xf32>
    tpu.vector_store %arg18[%261, %c0_54], %260 {strides = array<i32>} : memref<64x128xf32, #tpu.memory_space<vmem>>, vector<8x128xf32>,
    %c0_55 = arith.constant 0 : index
    %c0_56 = arith.constant 0 : index
    %263 = vector.load %arg16[%c0_55, %c0_56] : memref<8x128xf32, #tpu.memory_space<vmem>>, vector<8x128xf32>
    tpu.vector_store %arg16[%c0_55, %c0_56], %260 {strides = array<i32>} : memref<8x128xf32, #tpu.memory_space<vmem>>, vector<8x128xf32>,
    %c0_i32_57 = arith.constant 0 : i32
    %264 = arith.cmpi eq, %arg0, %c0_i32_57 : i32
    %265 = arith.extui %264 : i1 to i32
    %c0_i32_58 = arith.constant 0 : i32
    %266 = arith.cmpi ne, %265, %c0_i32_58 : i32
    scf.if %266 {
      %c0_128 = arith.constant 0 : index
      %c0_129 = arith.constant 0 : index
      %534 = vector.load %arg13[%c0_128, %c0_129] : memref<8x128xf32, #tpu.memory_space<vmem>>, vector<8x128xf32>
      tpu.vector_store %arg13[%c0_128, %c0_129], %260 {strides = array<i32>} : memref<8x128xf32, #tpu.memory_space<vmem>>, vector<8x128xf32>,
    } else {
    }
    %c0_i32_59 = arith.constant 0 : i32
    %267 = arith.cmpi eq, %arg0, %c0_i32_59 : i32
    %268 = arith.extui %267 : i1 to i32
    %c0_i32_60 = arith.constant 0 : i32
    %269 = arith.cmpi ne, %268, %c0_i32_60 : i32
    scf.if %269 {
      %c0_128 = arith.constant 0 : index
      %c0_129 = arith.constant 0 : index
      %534 = vector.load %arg11[%c0_128, %c0_129] : memref<8x128xf32, #tpu.memory_space<vmem>>, vector<8x128xf32>
      %c0_130 = arith.constant 0 : index
      %c0_131 = arith.constant 0 : index
      %535 = vector.load %arg17[%c0_130, %c0_131] : memref<8x128xf32, #tpu.memory_space<vmem>>, vector<8x128xf32>
      tpu.vector_store %arg17[%c0_130, %c0_131], %534 {strides = array<i32>} : memref<8x128xf32, #tpu.memory_space<vmem>>, vector<8x128xf32>,
    } else {
    }
    %c0_61 = arith.constant 0 : index
    %c0_62 = arith.constant 0 : index
    %270 = vector.load %arg18[%c0_61, %c0_62] : memref<64x128xf32, #tpu.memory_space<vmem>>, vector<64x128xf32>
    %c0_63 = arith.constant 0 : index
    %c0_64 = arith.constant 0 : index
    %271 = vector.load %arg7[%c0_63, %c0_64] : memref<128x384xf32, #tpu.memory_space<vmem>>, vector<128x384xf32>
    %cst_65 = arith.constant dense<0.000000e+00> : vector<64x384xf32>
    %272 = tpu.matmul %270, %271, %cst_65 {dimension_numbers = #tpu.dot_dimension_numbers<[1], [0], [0], [1], [0, 0, 1, 1], [], []>} : vector<64x128xf32>, vector<128x384xf32>, vector<64x384xf32> -> vector<64x384xf32>
    %c0_66 = arith.constant 0 : index
    %c0_67 = arith.constant 0 : index
    %273 = vector.load %arg9[%c0_66, %c0_67] : memref<1x384xf32, #tpu.memory_space<vmem>>, vector<1x384xf32>
    %274 = vector.broadcast %273 : vector<1x384xf32> to vector<64x384xf32>
    %275 = arith.addf %272, %274 : vector<64x384xf32>
    %c0_68 = arith.constant 0 : index
    %c0_69 = arith.constant 0 : index
    %276 = vector.load %arg15[%c0_68, %c0_69] : memref<64x384xf32, #tpu.memory_space<vmem>>, vector<64x384xf32>
    tpu.vector_store %arg15[%c0_68, %c0_69], %275 {strides = array<i32>} : memref<64x384xf32, #tpu.memory_space<vmem>>, vector<64x384xf32>,
    %c0_70 = arith.constant 0 : index
    %c0_71 = arith.constant 0 : index
    %277 = vector.load %arg8[%c0_70, %c0_71] : memref<128x384xf32, #tpu.memory_space<vmem>>, vector<128x384xf32>
    %c0_72 = arith.constant 0 : index
    %c0_73 = arith.constant 0 : index
    %278 = vector.load %arg10[%c0_72, %c0_73] : memref<1x128xf32, #tpu.memory_space<vmem>>, vector<1x128xf32>
    %279 = vector.shape_cast %278 : vector<1x128xf32> to vector<1x128xf32>
    %280 = vector.broadcast %279 : vector<1x128xf32> to vector<8x128xf32>
    %c0_74 = arith.constant 0 : index
    %c0_75 = arith.constant 0 : index
    %281 = vector.load %arg17[%c0_74, %c0_75] : memref<8x128xf32, #tpu.memory_space<vmem>>, vector<8x128xf32>
    %c0_i32_76 = arith.constant 0 : i32
    %282 = tpu.assume_multiple %c0_i32_76, 8 : i32
    %cst_77 = arith.constant dense<0.000000e+00> : vector<8x384xf32>
    %283 = tpu.matmul %281, %277, %cst_77 {dimension_numbers = #tpu.dot_dimension_numbers<[1], [0], [0], [1], [0, 0, 1, 1], [], []>} : vector<8x128xf32>, vector<128x384xf32>, vector<8x384xf32> -> vector<8x384xf32>
    %284 = arith.index_cast %282 : i32 to index
    %c0_78 = arith.constant 0 : index
    %285 = vector.load %arg15[%284, %c0_78] : memref<64x384xf32, #tpu.memory_space<vmem>>, vector<8x384xf32>
    %286 = vector.extract_strided_slice %285 {offsets = [0, 0], sizes = [8, 128], strides = [1, 1]} : vector<8x384xf32> to vector<8x128xf32>
    %287 = vector.extract_strided_slice %283 {offsets = [0, 0], sizes = [8, 128], strides = [1, 1]} : vector<8x384xf32> to vector<8x128xf32>
    %288 = arith.addf %286, %287 : vector<8x128xf32>
    %289 = arith.negf %288 : vector<8x128xf32>
    %290 = math.exp %289 : vector<8x128xf32>
    %cst_79 = arith.constant 1.000000e+00 : f32
    %291 = vector.broadcast %cst_79 : f32 to vector<8x128xf32>
    %292 = arith.addf %291, %290 : vector<8x128xf32>
    %293 = arith.divf %291, %292 : vector<8x128xf32>
    %294 = vector.extract_strided_slice %285 {offsets = [0, 128], sizes = [8, 128], strides = [1, 1]} : vector<8x384xf32> to vector<8x128xf32>
    %295 = vector.extract_strided_slice %283 {offsets = [0, 128], sizes = [8, 128], strides = [1, 1]} : vector<8x384xf32> to vector<8x128xf32>
    %296 = arith.addf %294, %295 : vector<8x128xf32>
    %297 = arith.negf %296 : vector<8x128xf32>
    %298 = math.exp %297 : vector<8x128xf32>
    %cst_80 = arith.constant 1.000000e+00 : f32
    %299 = vector.broadcast %cst_80 : f32 to vector<8x128xf32>
    %300 = arith.addf %299, %298 : vector<8x128xf32>
    %301 = arith.divf %299, %300 : vector<8x128xf32>
    %302 = vector.extract_strided_slice %285 {offsets = [0, 256], sizes = [8, 128], strides = [1, 1]} : vector<8x384xf32> to vector<8x128xf32>
    %303 = vector.extract_strided_slice %283 {offsets = [0, 256], sizes = [8, 128], strides = [1, 1]} : vector<8x384xf32> to vector<8x128xf32>
    %304 = arith.addf %303, %280 : vector<8x128xf32>
    %305 = arith.mulf %293, %304 : vector<8x128xf32>
    %306 = arith.addf %302, %305 : vector<8x128xf32>
    %307 = math.tanh %306 : vector<8x128xf32>
    %308 = arith.subf %281, %307 : vector<8x128xf32>
    %309 = arith.mulf %301, %308 : vector<8x128xf32>
    %310 = arith.addf %307, %309 : vector<8x128xf32>
    %311 = arith.index_cast %282 : i32 to index
    %c0_81 = arith.constant 0 : index
    %312 = vector.load %arg12[%311, %c0_81] : memref<64x128xf32, #tpu.memory_space<vmem>>, vector<8x128xf32>
    tpu.vector_store %arg12[%311, %c0_81], %310 {strides = array<i32>} : memref<64x128xf32, #tpu.memory_space<vmem>>, vector<8x128xf32>,
    %c8_i32_82 = arith.constant 8 : i32
    %313 = tpu.assume_multiple %c8_i32_82, 8 : i32
    %cst_83 = arith.constant dense<0.000000e+00> : vector<8x384xf32>
    %314 = tpu.matmul %310, %277, %cst_83 {dimension_numbers = #tpu.dot_dimension_numbers<[1], [0], [0], [1], [0, 0, 1, 1], [], []>} : vector<8x128xf32>, vector<128x384xf32>, vector<8x384xf32> -> vector<8x384xf32>
    %315 = arith.index_cast %313 : i32 to index
    %c0_84 = arith.constant 0 : index
    %316 = vector.load %arg15[%315, %c0_84] : memref<64x384xf32, #tpu.memory_space<vmem>>, vector<8x384xf32>
    %317 = vector.extract_strided_slice %316 {offsets = [0, 0], sizes = [8, 128], strides = [1, 1]} : vector<8x384xf32> to vector<8x128xf32>
    %318 = vector.extract_strided_slice %314 {offsets = [0, 0], sizes = [8, 128], strides = [1, 1]} : vector<8x384xf32> to vector<8x128xf32>
    %319 = arith.addf %317, %318 : vector<8x128xf32>
    %320 = arith.negf %319 : vector<8x128xf32>
    %321 = math.exp %320 : vector<8x128xf32>
    %cst_85 = arith.constant 1.000000e+00 : f32
    %322 = vector.broadcast %cst_85 : f32 to vector<8x128xf32>
    %323 = arith.addf %322, %321 : vector<8x128xf32>
    %324 = arith.divf %322, %323 : vector<8x128xf32>
    %325 = vector.extract_strided_slice %316 {offsets = [0, 128], sizes = [8, 128], strides = [1, 1]} : vector<8x384xf32> to vector<8x128xf32>
    %326 = vector.extract_strided_slice %314 {offsets = [0, 128], sizes = [8, 128], strides = [1, 1]} : vector<8x384xf32> to vector<8x128xf32>
    %327 = arith.addf %325, %326 : vector<8x128xf32>
    %328 = arith.negf %327 : vector<8x128xf32>
    %329 = math.exp %328 : vector<8x128xf32>
    %cst_86 = arith.constant 1.000000e+00 : f32
    %330 = vector.broadcast %cst_86 : f32 to vector<8x128xf32>
    %331 = arith.addf %330, %329 : vector<8x128xf32>
    %332 = arith.divf %330, %331 : vector<8x128xf32>
    %333 = vector.extract_strided_slice %316 {offsets = [0, 256], sizes = [8, 128], strides = [1, 1]} : vector<8x384xf32> to vector<8x128xf32>
    %334 = vector.extract_strided_slice %314 {offsets = [0, 256], sizes = [8, 128], strides = [1, 1]} : vector<8x384xf32> to vector<8x128xf32>
    %335 = arith.addf %334, %280 : vector<8x128xf32>
    %336 = arith.mulf %324, %335 : vector<8x128xf32>
    %337 = arith.addf %333, %336 : vector<8x128xf32>
    %338 = math.tanh %337 : vector<8x128xf32>
    %339 = arith.subf %310, %338 : vector<8x128xf32>
    %340 = arith.mulf %332, %339 : vector<8x128xf32>
    %341 = arith.addf %338, %340 : vector<8x128xf32>
    %342 = arith.index_cast %313 : i32 to index
    %c0_87 = arith.constant 0 : index
    %343 = vector.load %arg12[%342, %c0_87] : memref<64x128xf32, #tpu.memory_space<vmem>>, vector<8x128xf32>
    tpu.vector_store %arg12[%342, %c0_87], %341 {strides = array<i32>} : memref<64x128xf32, #tpu.memory_space<vmem>>, vector<8x128xf32>,
    %c16_i32_88 = arith.constant 16 : i32
    %344 = tpu.assume_multiple %c16_i32_88, 8 : i32
    %cst_89 = arith.constant dense<0.000000e+00> : vector<8x384xf32>
    %345 = tpu.matmul %341, %277, %cst_89 {dimension_numbers = #tpu.dot_dimension_numbers<[1], [0], [0], [1], [0, 0, 1, 1], [], []>} : vector<8x128xf32>, vector<128x384xf32>, vector<8x384xf32> -> vector<8x384xf32>
    %346 = arith.index_cast %344 : i32 to index
    %c0_90 = arith.constant 0 : index
    %347 = vector.load %arg15[%346, %c0_90] : memref<64x384xf32, #tpu.memory_space<vmem>>, vector<8x384xf32>
    %348 = vector.extract_strided_slice %347 {offsets = [0, 0], sizes = [8, 128], strides = [1, 1]} : vector<8x384xf32> to vector<8x128xf32>
    %349 = vector.extract_strided_slice %345 {offsets = [0, 0], sizes = [8, 128], strides = [1, 1]} : vector<8x384xf32> to vector<8x128xf32>
    %350 = arith.addf %348, %349 : vector<8x128xf32>
    %351 = arith.negf %350 : vector<8x128xf32>
    %352 = math.exp %351 : vector<8x128xf32>
    %cst_91 = arith.constant 1.000000e+00 : f32
    %353 = vector.broadcast %cst_91 : f32 to vector<8x128xf32>
    %354 = arith.addf %353, %352 : vector<8x128xf32>
    %355 = arith.divf %353, %354 : vector<8x128xf32>
    %356 = vector.extract_strided_slice %347 {offsets = [0, 128], sizes = [8, 128], strides = [1, 1]} : vector<8x384xf32> to vector<8x128xf32>
    %357 = vector.extract_strided_slice %345 {offsets = [0, 128], sizes = [8, 128], strides = [1, 1]} : vector<8x384xf32> to vector<8x128xf32>
    %358 = arith.addf %356, %357 : vector<8x128xf32>
    %359 = arith.negf %358 : vector<8x128xf32>
    %360 = math.exp %359 : vector<8x128xf32>
    %cst_92 = arith.constant 1.000000e+00 : f32
    %361 = vector.broadcast %cst_92 : f32 to vector<8x128xf32>
    %362 = arith.addf %361, %360 : vector<8x128xf32>
    %363 = arith.divf %361, %362 : vector<8x128xf32>
    %364 = vector.extract_strided_slice %347 {offsets = [0, 256], sizes = [8, 128], strides = [1, 1]} : vector<8x384xf32> to vector<8x128xf32>
    %365 = vector.extract_strided_slice %345 {offsets = [0, 256], sizes = [8, 128], strides = [1, 1]} : vector<8x384xf32> to vector<8x128xf32>
    %366 = arith.addf %365, %280 : vector<8x128xf32>
    %367 = arith.mulf %355, %366 : vector<8x128xf32>
    %368 = arith.addf %364, %367 : vector<8x128xf32>
    %369 = math.tanh %368 : vector<8x128xf32>
    %370 = arith.subf %341, %369 : vector<8x128xf32>
    %371 = arith.mulf %363, %370 : vector<8x128xf32>
    %372 = arith.addf %369, %371 : vector<8x128xf32>
    %373 = arith.index_cast %344 : i32 to index
    %c0_93 = arith.constant 0 : index
    %374 = vector.load %arg12[%373, %c0_93] : memref<64x128xf32, #tpu.memory_space<vmem>>, vector<8x128xf32>
    tpu.vector_store %arg12[%373, %c0_93], %372 {strides = array<i32>} : memref<64x128xf32, #tpu.memory_space<vmem>>, vector<8x128xf32>,
    %c24_i32_94 = arith.constant 24 : i32
    %375 = tpu.assume_multiple %c24_i32_94, 8 : i32
    %cst_95 = arith.constant dense<0.000000e+00> : vector<8x384xf32>
    %376 = tpu.matmul %372, %277, %cst_95 {dimension_numbers = #tpu.dot_dimension_numbers<[1], [0], [0], [1], [0, 0, 1, 1], [], []>} : vector<8x128xf32>, vector<128x384xf32>, vector<8x384xf32> -> vector<8x384xf32>
    %377 = arith.index_cast %375 : i32 to index
    %c0_96 = arith.constant 0 : index
    %378 = vector.load %arg15[%377, %c0_96] : memref<64x384xf32, #tpu.memory_space<vmem>>, vector<8x384xf32>
    %379 = vector.extract_strided_slice %378 {offsets = [0, 0], sizes = [8, 128], strides = [1, 1]} : vector<8x384xf32> to vector<8x128xf32>
    %380 = vector.extract_strided_slice %376 {offsets = [0, 0], sizes = [8, 128], strides = [1, 1]} : vector<8x384xf32> to vector<8x128xf32>
    %381 = arith.addf %379, %380 : vector<8x128xf32>
    %382 = arith.negf %381 : vector<8x128xf32>
    %383 = math.exp %382 : vector<8x128xf32>
    %cst_97 = arith.constant 1.000000e+00 : f32
    %384 = vector.broadcast %cst_97 : f32 to vector<8x128xf32>
    %385 = arith.addf %384, %383 : vector<8x128xf32>
    %386 = arith.divf %384, %385 : vector<8x128xf32>
    %387 = vector.extract_strided_slice %378 {offsets = [0, 128], sizes = [8, 128], strides = [1, 1]} : vector<8x384xf32> to vector<8x128xf32>
    %388 = vector.extract_strided_slice %376 {offsets = [0, 128], sizes = [8, 128], strides = [1, 1]} : vector<8x384xf32> to vector<8x128xf32>
    %389 = arith.addf %387, %388 : vector<8x128xf32>
    %390 = arith.negf %389 : vector<8x128xf32>
    %391 = math.exp %390 : vector<8x128xf32>
    %cst_98 = arith.constant 1.000000e+00 : f32
    %392 = vector.broadcast %cst_98 : f32 to vector<8x128xf32>
    %393 = arith.addf %392, %391 : vector<8x128xf32>
    %394 = arith.divf %392, %393 : vector<8x128xf32>
    %395 = vector.extract_strided_slice %378 {offsets = [0, 256], sizes = [8, 128], strides = [1, 1]} : vector<8x384xf32> to vector<8x128xf32>
    %396 = vector.extract_strided_slice %376 {offsets = [0, 256], sizes = [8, 128], strides = [1, 1]} : vector<8x384xf32> to vector<8x128xf32>
    %397 = arith.addf %396, %280 : vector<8x128xf32>
    %398 = arith.mulf %386, %397 : vector<8x128xf32>
    %399 = arith.addf %395, %398 : vector<8x128xf32>
    %400 = math.tanh %399 : vector<8x128xf32>
    %401 = arith.subf %372, %400 : vector<8x128xf32>
    %402 = arith.mulf %394, %401 : vector<8x128xf32>
    %403 = arith.addf %400, %402 : vector<8x128xf32>
    %404 = arith.index_cast %375 : i32 to index
    %c0_99 = arith.constant 0 : index
    %405 = vector.load %arg12[%404, %c0_99] : memref<64x128xf32, #tpu.memory_space<vmem>>, vector<8x128xf32>
    tpu.vector_store %arg12[%404, %c0_99], %403 {strides = array<i32>} : memref<64x128xf32, #tpu.memory_space<vmem>>, vector<8x128xf32>,
    %c32_i32_100 = arith.constant 32 : i32
    %406 = tpu.assume_multiple %c32_i32_100, 8 : i32
    %cst_101 = arith.constant dense<0.000000e+00> : vector<8x384xf32>
    %407 = tpu.matmul %403, %277, %cst_101 {dimension_numbers = #tpu.dot_dimension_numbers<[1], [0], [0], [1], [0, 0, 1, 1], [], []>} : vector<8x128xf32>, vector<128x384xf32>, vector<8x384xf32> -> vector<8x384xf32>
    %408 = arith.index_cast %406 : i32 to index
    %c0_102 = arith.constant 0 : index
    %409 = vector.load %arg15[%408, %c0_102] : memref<64x384xf32, #tpu.memory_space<vmem>>, vector<8x384xf32>
    %410 = vector.extract_strided_slice %409 {offsets = [0, 0], sizes = [8, 128], strides = [1, 1]} : vector<8x384xf32> to vector<8x128xf32>
    %411 = vector.extract_strided_slice %407 {offsets = [0, 0], sizes = [8, 128], strides = [1, 1]} : vector<8x384xf32> to vector<8x128xf32>
    %412 = arith.addf %410, %411 : vector<8x128xf32>
    %413 = arith.negf %412 : vector<8x128xf32>
    %414 = math.exp %413 : vector<8x128xf32>
    %cst_103 = arith.constant 1.000000e+00 : f32
    %415 = vector.broadcast %cst_103 : f32 to vector<8x128xf32>
    %416 = arith.addf %415, %414 : vector<8x128xf32>
    %417 = arith.divf %415, %416 : vector<8x128xf32>
    %418 = vector.extract_strided_slice %409 {offsets = [0, 128], sizes = [8, 128], strides = [1, 1]} : vector<8x384xf32> to vector<8x128xf32>
    %419 = vector.extract_strided_slice %407 {offsets = [0, 128], sizes = [8, 128], strides = [1, 1]} : vector<8x384xf32> to vector<8x128xf32>
    %420 = arith.addf %418, %419 : vector<8x128xf32>
    %421 = arith.negf %420 : vector<8x128xf32>
    %422 = math.exp %421 : vector<8x128xf32>
    %cst_104 = arith.constant 1.000000e+00 : f32
    %423 = vector.broadcast %cst_104 : f32 to vector<8x128xf32>
    %424 = arith.addf %423, %422 : vector<8x128xf32>
    %425 = arith.divf %423, %424 : vector<8x128xf32>
    %426 = vector.extract_strided_slice %409 {offsets = [0, 256], sizes = [8, 128], strides = [1, 1]} : vector<8x384xf32> to vector<8x128xf32>
    %427 = vector.extract_strided_slice %407 {offsets = [0, 256], sizes = [8, 128], strides = [1, 1]} : vector<8x384xf32> to vector<8x128xf32>
    %428 = arith.addf %427, %280 : vector<8x128xf32>
    %429 = arith.mulf %417, %428 : vector<8x128xf32>
    %430 = arith.addf %426, %429 : vector<8x128xf32>
    %431 = math.tanh %430 : vector<8x128xf32>
    %432 = arith.subf %403, %431 : vector<8x128xf32>
    %433 = arith.mulf %425, %432 : vector<8x128xf32>
    %434 = arith.addf %431, %433 : vector<8x128xf32>
    %435 = arith.index_cast %406 : i32 to index
    %c0_105 = arith.constant 0 : index
    %436 = vector.load %arg12[%435, %c0_105] : memref<64x128xf32, #tpu.memory_space<vmem>>, vector<8x128xf32>
    tpu.vector_store %arg12[%435, %c0_105], %434 {strides = array<i32>} : memref<64x128xf32, #tpu.memory_space<vmem>>, vector<8x128xf32>,
    %c40_i32_106 = arith.constant 40 : i32
    %437 = tpu.assume_multiple %c40_i32_106, 8 : i32
    %cst_107 = arith.constant dense<0.000000e+00> : vector<8x384xf32>
    %438 = tpu.matmul %434, %277, %cst_107 {dimension_numbers = #tpu.dot_dimension_numbers<[1], [0], [0], [1], [0, 0, 1, 1], [], []>} : vector<8x128xf32>, vector<128x384xf32>, vector<8x384xf32> -> vector<8x384xf32>
    %439 = arith.index_cast %437 : i32 to index
    %c0_108 = arith.constant 0 : index
    %440 = vector.load %arg15[%439, %c0_108] : memref<64x384xf32, #tpu.memory_space<vmem>>, vector<8x384xf32>
    %441 = vector.extract_strided_slice %440 {offsets = [0, 0], sizes = [8, 128], strides = [1, 1]} : vector<8x384xf32> to vector<8x128xf32>
    %442 = vector.extract_strided_slice %438 {offsets = [0, 0], sizes = [8, 128], strides = [1, 1]} : vector<8x384xf32> to vector<8x128xf32>
    %443 = arith.addf %441, %442 : vector<8x128xf32>
    %444 = arith.negf %443 : vector<8x128xf32>
    %445 = math.exp %444 : vector<8x128xf32>
    %cst_109 = arith.constant 1.000000e+00 : f32
    %446 = vector.broadcast %cst_109 : f32 to vector<8x128xf32>
    %447 = arith.addf %446, %445 : vector<8x128xf32>
    %448 = arith.divf %446, %447 : vector<8x128xf32>
    %449 = vector.extract_strided_slice %440 {offsets = [0, 128], sizes = [8, 128], strides = [1, 1]} : vector<8x384xf32> to vector<8x128xf32>
    %450 = vector.extract_strided_slice %438 {offsets = [0, 128], sizes = [8, 128], strides = [1, 1]} : vector<8x384xf32> to vector<8x128xf32>
    %451 = arith.addf %449, %450 : vector<8x128xf32>
    %452 = arith.negf %451 : vector<8x128xf32>
    %453 = math.exp %452 : vector<8x128xf32>
    %cst_110 = arith.constant 1.000000e+00 : f32
    %454 = vector.broadcast %cst_110 : f32 to vector<8x128xf32>
    %455 = arith.addf %454, %453 : vector<8x128xf32>
    %456 = arith.divf %454, %455 : vector<8x128xf32>
    %457 = vector.extract_strided_slice %440 {offsets = [0, 256], sizes = [8, 128], strides = [1, 1]} : vector<8x384xf32> to vector<8x128xf32>
    %458 = vector.extract_strided_slice %438 {offsets = [0, 256], sizes = [8, 128], strides = [1, 1]} : vector<8x384xf32> to vector<8x128xf32>
    %459 = arith.addf %458, %280 : vector<8x128xf32>
    %460 = arith.mulf %448, %459 : vector<8x128xf32>
    %461 = arith.addf %457, %460 : vector<8x128xf32>
    %462 = math.tanh %461 : vector<8x128xf32>
    %463 = arith.subf %434, %462 : vector<8x128xf32>
    %464 = arith.mulf %456, %463 : vector<8x128xf32>
    %465 = arith.addf %462, %464 : vector<8x128xf32>
    %466 = arith.index_cast %437 : i32 to index
    %c0_111 = arith.constant 0 : index
    %467 = vector.load %arg12[%466, %c0_111] : memref<64x128xf32, #tpu.memory_space<vmem>>, vector<8x128xf32>
    tpu.vector_store %arg12[%466, %c0_111], %465 {strides = array<i32>} : memref<64x128xf32, #tpu.memory_space<vmem>>, vector<8x128xf32>,
    %c48_i32_112 = arith.constant 48 : i32
    %468 = tpu.assume_multiple %c48_i32_112, 8 : i32
    %cst_113 = arith.constant dense<0.000000e+00> : vector<8x384xf32>
    %469 = tpu.matmul %465, %277, %cst_113 {dimension_numbers = #tpu.dot_dimension_numbers<[1], [0], [0], [1], [0, 0, 1, 1], [], []>} : vector<8x128xf32>, vector<128x384xf32>, vector<8x384xf32> -> vector<8x384xf32>
    %470 = arith.index_cast %468 : i32 to index
    %c0_114 = arith.constant 0 : index
    %471 = vector.load %arg15[%470, %c0_114] : memref<64x384xf32, #tpu.memory_space<vmem>>, vector<8x384xf32>
    %472 = vector.extract_strided_slice %471 {offsets = [0, 0], sizes = [8, 128], strides = [1, 1]} : vector<8x384xf32> to vector<8x128xf32>
    %473 = vector.extract_strided_slice %469 {offsets = [0, 0], sizes = [8, 128], strides = [1, 1]} : vector<8x384xf32> to vector<8x128xf32>
    %474 = arith.addf %472, %473 : vector<8x128xf32>
    %475 = arith.negf %474 : vector<8x128xf32>
    %476 = math.exp %475 : vector<8x128xf32>
    %cst_115 = arith.constant 1.000000e+00 : f32
    %477 = vector.broadcast %cst_115 : f32 to vector<8x128xf32>
    %478 = arith.addf %477, %476 : vector<8x128xf32>
    %479 = arith.divf %477, %478 : vector<8x128xf32>
    %480 = vector.extract_strided_slice %471 {offsets = [0, 128], sizes = [8, 128], strides = [1, 1]} : vector<8x384xf32> to vector<8x128xf32>
    %481 = vector.extract_strided_slice %469 {offsets = [0, 128], sizes = [8, 128], strides = [1, 1]} : vector<8x384xf32> to vector<8x128xf32>
    %482 = arith.addf %480, %481 : vector<8x128xf32>
    %483 = arith.negf %482 : vector<8x128xf32>
    %484 = math.exp %483 : vector<8x128xf32>
    %cst_116 = arith.constant 1.000000e+00 : f32
    %485 = vector.broadcast %cst_116 : f32 to vector<8x128xf32>
    %486 = arith.addf %485, %484 : vector<8x128xf32>
    %487 = arith.divf %485, %486 : vector<8x128xf32>
    %488 = vector.extract_strided_slice %471 {offsets = [0, 256], sizes = [8, 128], strides = [1, 1]} : vector<8x384xf32> to vector<8x128xf32>
    %489 = vector.extract_strided_slice %469 {offsets = [0, 256], sizes = [8, 128], strides = [1, 1]} : vector<8x384xf32> to vector<8x128xf32>
    %490 = arith.addf %489, %280 : vector<8x128xf32>
    %491 = arith.mulf %479, %490 : vector<8x128xf32>
    %492 = arith.addf %488, %491 : vector<8x128xf32>
    %493 = math.tanh %492 : vector<8x128xf32>
    %494 = arith.subf %465, %493 : vector<8x128xf32>
    %495 = arith.mulf %487, %494 : vector<8x128xf32>
    %496 = arith.addf %493, %495 : vector<8x128xf32>
    %497 = arith.index_cast %468 : i32 to index
    %c0_117 = arith.constant 0 : index
    %498 = vector.load %arg12[%497, %c0_117] : memref<64x128xf32, #tpu.memory_space<vmem>>, vector<8x128xf32>
    tpu.vector_store %arg12[%497, %c0_117], %496 {strides = array<i32>} : memref<64x128xf32, #tpu.memory_space<vmem>>, vector<8x128xf32>,
    %c56_i32_118 = arith.constant 56 : i32
    %499 = tpu.assume_multiple %c56_i32_118, 8 : i32
    %cst_119 = arith.constant dense<0.000000e+00> : vector<8x384xf32>
    %500 = tpu.matmul %496, %277, %cst_119 {dimension_numbers = #tpu.dot_dimension_numbers<[1], [0], [0], [1], [0, 0, 1, 1], [], []>} : vector<8x128xf32>, vector<128x384xf32>, vector<8x384xf32> -> vector<8x384xf32>
    %501 = arith.index_cast %499 : i32 to index
    %c0_120 = arith.constant 0 : index
    %502 = vector.load %arg15[%501, %c0_120] : memref<64x384xf32, #tpu.memory_space<vmem>>, vector<8x384xf32>
    %503 = vector.extract_strided_slice %502 {offsets = [0, 0], sizes = [8, 128], strides = [1, 1]} : vector<8x384xf32> to vector<8x128xf32>
    %504 = vector.extract_strided_slice %500 {offsets = [0, 0], sizes = [8, 128], strides = [1, 1]} : vector<8x384xf32> to vector<8x128xf32>
    %505 = arith.addf %503, %504 : vector<8x128xf32>
    %506 = arith.negf %505 : vector<8x128xf32>
    %507 = math.exp %506 : vector<8x128xf32>
    %cst_121 = arith.constant 1.000000e+00 : f32
    %508 = vector.broadcast %cst_121 : f32 to vector<8x128xf32>
    %509 = arith.addf %508, %507 : vector<8x128xf32>
    %510 = arith.divf %508, %509 : vector<8x128xf32>
    %511 = vector.extract_strided_slice %502 {offsets = [0, 128], sizes = [8, 128], strides = [1, 1]} : vector<8x384xf32> to vector<8x128xf32>
    %512 = vector.extract_strided_slice %500 {offsets = [0, 128], sizes = [8, 128], strides = [1, 1]} : vector<8x384xf32> to vector<8x128xf32>
    %513 = arith.addf %511, %512 : vector<8x128xf32>
    %514 = arith.negf %513 : vector<8x128xf32>
    %515 = math.exp %514 : vector<8x128xf32>
    %cst_122 = arith.constant 1.000000e+00 : f32
    %516 = vector.broadcast %cst_122 : f32 to vector<8x128xf32>
    %517 = arith.addf %516, %515 : vector<8x128xf32>
    %518 = arith.divf %516, %517 : vector<8x128xf32>
    %519 = vector.extract_strided_slice %502 {offsets = [0, 256], sizes = [8, 128], strides = [1, 1]} : vector<8x384xf32> to vector<8x128xf32>
    %520 = vector.extract_strided_slice %500 {offsets = [0, 256], sizes = [8, 128], strides = [1, 1]} : vector<8x384xf32> to vector<8x128xf32>
    %521 = arith.addf %520, %280 : vector<8x128xf32>
    %522 = arith.mulf %510, %521 : vector<8x128xf32>
    %523 = arith.addf %519, %522 : vector<8x128xf32>
    %524 = math.tanh %523 : vector<8x128xf32>
    %525 = arith.subf %496, %524 : vector<8x128xf32>
    %526 = arith.mulf %518, %525 : vector<8x128xf32>
    %527 = arith.addf %524, %526 : vector<8x128xf32>
    %528 = arith.index_cast %499 : i32 to index
    %c0_123 = arith.constant 0 : index
    %529 = vector.load %arg12[%528, %c0_123] : memref<64x128xf32, #tpu.memory_space<vmem>>, vector<8x128xf32>
    tpu.vector_store %arg12[%528, %c0_123], %527 {strides = array<i32>} : memref<64x128xf32, #tpu.memory_space<vmem>>, vector<8x128xf32>,
    %c0_124 = arith.constant 0 : index
    %c0_125 = arith.constant 0 : index
    %530 = vector.load %arg17[%c0_124, %c0_125] : memref<8x128xf32, #tpu.memory_space<vmem>>, vector<8x128xf32>
    tpu.vector_store %arg17[%c0_124, %c0_125], %527 {strides = array<i32>} : memref<8x128xf32, #tpu.memory_space<vmem>>, vector<8x128xf32>,
    %c0_i32_126 = arith.constant 0 : i32
    %531 = arith.cmpi eq, %arg0, %c0_i32_126 : i32
    %532 = arith.extui %531 : i1 to i32
    %c0_i32_127 = arith.constant 0 : i32
    %533 = arith.cmpi ne, %532, %c0_i32_127 : i32
    scf.if %533 {
      %c0_128 = arith.constant 0 : index
      %c0_129 = arith.constant 0 : index
      %534 = vector.load %arg14[%c0_128, %c0_129] : memref<8x128xf32, #tpu.memory_space<vmem>>, vector<8x128xf32>
      tpu.vector_store %arg14[%c0_128, %c0_129], %527 {strides = array<i32>} : memref<8x128xf32, #tpu.memory_space<vmem>>, vector<8x128xf32>,
    } else {
    }
    return
  }
  func.func @transform_0(%arg0: i32) -> (i32, i32) {
    %c0_i32 = arith.constant 0 : i32
    %c0_i32_0 = arith.constant 0 : i32
    return %arg0, %c0_i32 : i32, i32
  }
  func.func @transform_1(%arg0: i32) -> (i32, i32) {
    %c0_i32 = arith.constant 0 : i32
    %c0_i32_0 = arith.constant 0 : i32
    %c0_i32_1 = arith.constant 0 : i32
    return %c0_i32, %c0_i32_0 : i32, i32
  }
  func.func @transform_2(%arg0: i32) -> (i32, i32) {
    %c0_i32 = arith.constant 0 : i32
    %c0_i32_0 = arith.constant 0 : i32
    %c0_i32_1 = arith.constant 0 : i32
    return %c0_i32, %c0_i32_0 : i32, i32
  }
  func.func @transform_3(%arg0: i32) -> (i32, i32) {
    %c0_i32 = arith.constant 0 : i32
    %c0_i32_0 = arith.constant 0 : i32
    %c0_i32_1 = arith.constant 0 : i32
    return %c0_i32, %c0_i32_0 : i32, i32
  }
  func.func @transform_4(%arg0: i32) -> (i32, i32) {
    %c0_i32 = arith.constant 0 : i32
    %c0_i32_0 = arith.constant 0 : i32
    %c0_i32_1 = arith.constant 0 : i32
    return %c0_i32, %c0_i32_0 : i32, i32
  }
  func.func @transform_5(%arg0: i32) -> (i32, i32) {
    %c0_i32 = arith.constant 0 : i32
    %c0_i32_0 = arith.constant 0 : i32
    %c0_i32_1 = arith.constant 0 : i32
    return %c0_i32, %c0_i32_0 : i32, i32
  }
  func.func @transform_6(%arg0: i32) -> (i32, i32) {
    %c0_i32 = arith.constant 0 : i32
    %c0_i32_0 = arith.constant 0 : i32
    %c0_i32_1 = arith.constant 0 : i32
    return %c0_i32, %c0_i32_0 : i32, i32
  }
  func.func @transform_7(%arg0: i32) -> (i32, i32) {
    %c0_i32 = arith.constant 0 : i32
    %c0_i32_0 = arith.constant 0 : i32
    %c0_i32_1 = arith.constant 0 : i32
    return %c0_i32, %c0_i32_0 : i32, i32
  }
  func.func @transform_8(%arg0: i32) -> (i32, i32) {
    %c0_i32 = arith.constant 0 : i32
    %c0_i32_0 = arith.constant 0 : i32
    %c0_i32_1 = arith.constant 0 : i32
    return %c0_i32, %c0_i32_0 : i32, i32
  }
  func.func @transform_9(%arg0: i32) -> (i32, i32) {
    %c0_i32 = arith.constant 0 : i32
    %c0_i32_0 = arith.constant 0 : i32
    %c0_i32_1 = arith.constant 0 : i32
    return %c0_i32, %c0_i32_0 : i32, i32
  }
  func.func @transform_10(%arg0: i32) -> (i32, i32) {
    %c0_i32 = arith.constant 0 : i32
    %c0_i32_0 = arith.constant 0 : i32
    %c0_i32_1 = arith.constant 0 : i32
    return %c0_i32, %c0_i32_0 : i32, i32
  }
  func.func @transform_11(%arg0: i32) -> (i32, i32) {
    %c0_i32 = arith.constant 0 : i32
    %c0_i32_0 = arith.constant 0 : i32
    return %arg0, %c0_i32 : i32, i32
  }
  func.func @transform_12(%arg0: i32) -> (i32, i32) {
    %c0_i32 = arith.constant 0 : i32
    %c0_i32_0 = arith.constant 0 : i32
    %c0_i32_1 = arith.constant 0 : i32
    return %c0_i32, %c0_i32_0 : i32, i32
  }
  func.func @transform_13(%arg0: i32) -> (i32, i32) {
    %c0_i32 = arith.constant 0 : i32
    %c0_i32_0 = arith.constant 0 : i32
    %c0_i32_1 = arith.constant 0 : i32
    return %c0_i32, %c0_i32_0 : i32, i32
  }
}

</mosaic_0001>

<llo_original>
// kernel: tpu_custom_call.1
$region0: #{tpu_custom_call.1}
  #allocation0 [shape = 'u32[]', space=smem, size = 0x4, offset = 0x4, fixed_abs, tag = 'smem constant byte address 0x4 - core index']
  #allocation1 [shape = 'u32[72,128]{1,0:T(1,128)}', space=vmem, size = 0x9000, scoped, tag = 'internal scratch']
  #allocation2 [shape = 'f32[64,384]{1,0:T(8,128)}', space=vmem, size = 0x18000, scoped, tag = 'scratch operand']
  #allocation3 [shape = 'f32[8,128]{1,0:T(8,128)}', space=vmem, size = 0x1000, scoped, tag = 'scratch operand']
  #allocation4 [shape = 'f32[8,128]{1,0:T(8,128)}', space=vmem, size = 0x1000, scoped, tag = 'scratch operand']
  #allocation5 [shape = 'f32[64,128]{1,0:T(8,128)}', space=vmem, size = 0x8000, scoped, tag = 'scratch operand']
  %s0 = inlined_call_operand.vmem [shape: f32[64,16], index: 0, kind: input, shape index: {}]
  %s1 = inlined_call_operand.vmem [shape: f32[16,384], index: 1, kind: input, shape index: {}]
  %s2 = inlined_call_operand.hbm [shape: f32[128,384], index: 2, kind: input, shape index: {}]
  %s3 = inlined_call_operand.vmem [shape: f32[1,384], index: 3, kind: input, shape index: {}]
  %s4 = inlined_call_operand.vmem [shape: f32[1,128], index: 4, kind: input, shape index: {}]
  %s5 = inlined_call_operand.vmem [shape: f32[8,128], index: 5, kind: input, shape index: {}]
  %s6 = inlined_call_operand.hbm [shape: f32[128,384], index: 6, kind: input, shape index: {}]
  %s7 = inlined_call_operand.hbm [shape: f32[128,384], index: 7, kind: input, shape index: {}]
  %s8 = inlined_call_operand.vmem [shape: f32[1,384], index: 8, kind: input, shape index: {}]
  %s9 = inlined_call_operand.vmem [shape: f32[1,128], index: 9, kind: input, shape index: {}]
  %s10 = inlined_call_operand.vmem [shape: f32[8,128], index: 10, kind: input, shape index: {}]
  %s11 = inlined_call_operand.hbm [shape: f32[64,128], index: 11, kind: output, shape index: {0}]
  %s12 = inlined_call_operand.hbm [shape: f32[8,128], index: 12, kind: output, shape index: {1}]
  %s13 = inlined_call_operand.hbm [shape: f32[8,128], index: 13, kind: output, shape index: {2}]
  %14 = xla_tuple %s11, %s12, %s13
  %s15 = sld [smem:[#allocation0]]
  $region94: #{tpu_custom_call.1} parent=0
    _
  %s17 = ssub.s32 1, %s15
  %s18 = scalar_select 0, %s17, %s15
  $region1: #{tpu_custom_call.1} parent=0
    #allocation6 [shape = 'u8[196608]{0}', space=vmem, size = 0x30000, scoped, tag = 'input window, operand 2, single buffered']
    #allocation7 [shape = 's32[1]{0}', space=sflag, size = 0x4, scoped, tag = 'scoped memory for tpu_custom_call.1']
    #allocation8 [shape = 's32[1]{0}', space=sflag, size = 0x4, scoped, tag = 'scoped memory for tpu_custom_call.1']
    #allocation9 [shape = 'u8[196608]{0}', space=vmem, size = 0x30000, scoped, tag = 'input window, operand 6, single buffered']
    #allocation10 [shape = 's32[1]{0}', space=sflag, size = 0x4, scoped, tag = 'scoped memory for tpu_custom_call.1']
    #allocation11 [shape = 'u8[196608]{0}', space=vmem, size = 0x30000, scoped, tag = 'input window, operand 7, single buffered']
    #allocation12 [shape = 'u8[32768]{0}', space=vmem, size = 0x8000, scoped, tag = 'output window, operand 0, single buffered']
    #allocation13 [shape = 'u8[4096]{0}', space=vmem, size = 0x1000, scoped, tag = 'output window, operand 1, single buffered']
    #allocation14 [shape = 's32[1]{0}', space=sflag, size = 0x4, scoped, tag = 'scoped memory for tpu_custom_call.1']
    #allocation15 [shape = 'u8[4096]{0}', space=vmem, size = 0x1000, scoped, tag = 'output window, operand 2, single buffered']
    %19 = vsyncpa [#allocation7], 0
    %20 = vsyncpa [#allocation10], 0
    %21 = vsyncpa [#allocation8], 0
    %22 = vsyncpa [#allocation14], 0
    // Predicated region
    $region2: #{tpu_custom_call.1} parent=1 // pred_check
      _
    $region3: #{tpu_custom_call.1} parent=1 // pred_check_branch
      %24 = sbr.rel (0) target = $region5
    $region4: #{tpu_custom_call.1} parent=1 // pred_region
      _
    $region5: #{tpu_custom_call.1} parent=1 // pred_fallthru
      _
    // Predicated region
    $region6: #{tpu_custom_call.1} parent=1 // pred_check
      _
    $region7: #{tpu_custom_call.1} parent=1 // pred_check_branch
      %26 = sbr.rel (0) target = $region9
    $region8: #{tpu_custom_call.1} parent=1 // pred_region
      _
    $region9: #{tpu_custom_call.1} parent=1 // pred_fallthru
      _
    // Predicated region
    $region10: #{tpu_custom_call.1} parent=1 // pred_check
      _
    $region11: #{tpu_custom_call.1} parent=1 // pred_check_branch
      %28 = sbr.rel (0) target = $region13
    $region12: #{tpu_custom_call.1} parent=1 // pred_region
      %30 = vsyncadd [#allocation7], 0
      %s31 = sshll.u32 %s2, 4
      %s32 = int_to_ptr.hbm [resolvable:$true] %s31
      %s33 = sshll.u32 [#allocation6], 4
      %s34 = int_to_ptr.vmem [resolvable:$true] %s33
      %39 = dma.hbm_to_vmem [thread:$0]  %s32, 6144, %s34, [#allocation7], 384, 384, 24
    $region13: #{tpu_custom_call.1} parent=1 // pred_fallthru
      _
    // Predicated region
    $region14: #{tpu_custom_call.1} parent=1 // pred_check
      _
    $region15: #{tpu_custom_call.1} parent=1 // pred_check_branch
      %41 = sbr.rel (0) target = $region17
    $region16: #{tpu_custom_call.1} parent=1 // pred_region
      _
    $region17: #{tpu_custom_call.1} parent=1 // pred_fallthru
      _
    // Predicated region
    $region18: #{tpu_custom_call.1} parent=1 // pred_check
      _
    $region19: #{tpu_custom_call.1} parent=1 // pred_check_branch
      %43 = sbr.rel (0) target = $region21
    $region20: #{tpu_custom_call.1} parent=1 // pred_region
      _
    $region21: #{tpu_custom_call.1} parent=1 // pred_fallthru
      _
    // Predicated region
    $region22: #{tpu_custom_call.1} parent=1 // pred_check
      _
    $region23: #{tpu_custom_call.1} parent=1 // pred_check_branch
      %45 = sbr.rel (0) target = $region25
    $region24: #{tpu_custom_call.1} parent=1 // pred_region
      _
    $region25: #{tpu_custom_call.1} parent=1 // pred_fallthru
      _
    // Predicated region
    $region26: #{tpu_custom_call.1} parent=1 // pred_check
      _
    $region27: #{tpu_custom_call.1} parent=1 // pred_check_branch
      %47 = sbr.rel (0) target = $region29
    $region28: #{tpu_custom_call.1} parent=1 // pred_region
      %49 = vsyncadd [#allocation10], 0
      %s50 = sshll.u32 %s6, 4
      %s51 = int_to_ptr.hbm [resolvable:$true] %s50
      %s52 = sshll.u32 [#allocation9], 4
      %s53 = int_to_ptr.vmem [resolvable:$true] %s52
      %58 = dma.hbm_to_vmem [thread:$0]  %s51, 6144, %s53, [#allocation10], 384, 384, 24
    $region29: #{tpu_custom_call.1} parent=1 // pred_fallthru
      _
    // Predicated region
    $region30: #{tpu_custom_call.1} parent=1 // pred_check
      _
    $region31: #{tpu_custom_call.1} parent=1 // pred_check_branch
      %60 = sbr.rel (0) target = $region33
    $region32: #{tpu_custom_call.1} parent=1 // pred_region
      %62 = vsyncadd [#allocation10], 0
      %s63 = sshll.u32 %s7, 4
      %s64 = int_to_ptr.hbm [resolvable:$true] %s63
      %s65 = sshll.u32 [#allocation11], 4
      %s66 = int_to_ptr.vmem [resolvable:$true] %s65
      %71 = dma.hbm_to_vmem [thread:$0]  %s64, 6144, %s66, [#allocation10], 384, 384, 24
    $region33: #{tpu_custom_call.1} parent=1 // pred_fallthru
      _
    // Predicated region
    $region34: #{tpu_custom_call.1} parent=1 // pred_check
      _
    $region35: #{tpu_custom_call.1} parent=1 // pred_check_branch
      %73 = sbr.rel (0) target = $region37
    $region36: #{tpu_custom_call.1} parent=1 // pred_region
      _
    $region37: #{tpu_custom_call.1} parent=1 // pred_fallthru
      _
    // Predicated region
    $region38: #{tpu_custom_call.1} parent=1 // pred_check
      _
    $region39: #{tpu_custom_call.1} parent=1 // pred_check_branch
      %75 = sbr.rel (0) target = $region41
    $region40: #{tpu_custom_call.1} parent=1 // pred_region
      _
    $region41: #{tpu_custom_call.1} parent=1 // pred_fallthru
      _
    // Predicated region
    $region42: #{tpu_custom_call.1} parent=1 // pred_check
      _
    $region43: #{tpu_custom_call.1} parent=1 // pred_check_branch
      %77 = sbr.rel (0) target = $region45
    $region44: #{tpu_custom_call.1} parent=1 // pred_region
      _
    $region45: #{tpu_custom_call.1} parent=1 // pred_fallthru
      _
    // Predicated region
    $region46: #{tpu_custom_call.1} parent=1 // pred_check
      _
    $region47: #{tpu_custom_call.1} parent=1 // pred_check_branch
      %79 = sbr.rel (0) target = $region49
    $region48: #{tpu_custom_call.1} parent=1 // pred_region
      %81 = dma.done [#allocation7], 6144
    $region49: #{tpu_custom_call.1} parent=1 // pred_fallthru
      _
    // Predicated region
    $region50: #{tpu_custom_call.1} parent=1 // pred_check
      _
    $region51: #{tpu_custom_call.1} parent=1 // pred_check_branch
      %83 = sbr.rel (0) target = $region53
    $region52: #{tpu_custom_call.1} parent=1 // pred_region
      %85 = dma.done [#allocation10], 6144
    $region53: #{tpu_custom_call.1} parent=1 // pred_fallthru
      _
    // Predicated region
    $region54: #{tpu_custom_call.1} parent=1 // pred_check
      _
    $region55: #{tpu_custom_call.1} parent=1 // pred_check_branch
      %87 = sbr.rel (0) target = $region57
    $region56: #{tpu_custom_call.1} parent=1 // pred_region
      %89 = dma.done [#allocation10], 6144
    $region57: #{tpu_custom_call.1} parent=1 // pred_fallthru
      _
    %p90 = scmp.eq.s32.totalorder 0, 0
    // Predicated region
    $region58: #{tpu_custom_call.1} parent=1 // pred_check
      %p91 = pneg %p90
    $region59: #{tpu_custom_call.1} parent=1 // pred_check_branch
      %93 = sbr.rel (%p91) target = $region61
    $region60: #{tpu_custom_call.1} parent=1 // pred_region
      %v94 = vld [vmem:[%s5] sm:$0xff]
      %95 = vst [vmem:[#allocation3] sm:$0xff] %v94
    $region61: #{tpu_custom_call.1} parent=1 // pred_fallthru
      _
    %v96 = vld [vmem:[%s0] sm:$0xff]
    %v97 = vld [vmem:[%s0 + $0x8] sm:$0xff]
    %v98 = vld [vmem:[%s0 + $0x10] sm:$0xff]
    %v99 = vld [vmem:[%s0 + $0x18] sm:$0xff]
    %v100 = vld [vmem:[%s0 + $0x20] sm:$0xff]
    %v101 = vld [vmem:[%s0 + $0x28] sm:$0xff]
    %v102 = vld [vmem:[%s0 + $0x30] sm:$0xff]
    %v103 = vld [vmem:[%s0 + $0x38] sm:$0xff]
    %v104 = vld [vmem:[%s1] sm:$0xff]
    %v105 = vld [vmem:[%s1 + $0x8] sm:$0xff]
    %v106 = vld [vmem:[%s1 + $0x10] sm:$0xff]
    %v107 = vld [vmem:[%s1 + $0x18] sm:$0xff]
    %v108 = vld [vmem:[%s1 + $0x20] sm:$0xff]
    %v109 = vld [vmem:[%s1 + $0x28] sm:$0xff]
    %v110 = vld [vmem:[%s3] sm:$0x7]
    %v112 = vperm.slane %v110, 0
    %v113 = vperm.slane %v110, 1
    %v114 = vperm.slane %v110, 2
    %vm118 = vcmask 130048
    %v120 = vsel %vm118, %v96, 0
    %v123 = vsel %vm118, %v97, 0
    %v126 = vsel %vm118, %v98, 0
    %v129 = vsel %vm118, %v99, 0
    %v132 = vsel %vm118, %v100, 0
    %v135 = vsel %vm118, %v101, 0
    %v138 = vsel %vm118, %v102, 0
    %v141 = vsel %vm118, %v103, 0
    %143 = vmatpush.msra.mxu0 0.0
    %144 = vmatpush.msra.mxu0 0.0
    %145 = vmatpush.msra.mxu0 0.0
    %146 = vmatpush.msra.mxu0 0.0
    %147 = vmatpush.msra.mxu0 0.0
    %148 = vmatpush.msra.mxu0 0.0
    %149 = vmatpush.msra.mxu0 0.0
    %150 = vmatpush.msra.mxu0 0.0
    %151 = vmatpush.msra.mxu0 0.0
    %152 = vmatpush.msra.mxu0 0.0
    %153 = vmatpush.msra.mxu0 0.0
    %154 = vmatpush.msra.mxu0 0.0
    %155 = vmatpush.msra.mxu0 0.0
    %156 = vmatpush.msra.mxu0 0.0
    %157 = vmatpush.msra.mxu0 %v107
    %158 = vmatpush.msra.mxu0 %v104
    %159 = vmatmul.f32.gmra.mxu0 %v120
    %v160 = vpop.f32.mrf.mxu0
    %v161 = vadd.f32 %v112, %v160
    %162 = vmatmul.f32.gmra.mxu0 %v123
    %v163 = vpop.f32.mrf.mxu0
    %v164 = vadd.f32 %v112, %v163
    %165 = vmatmul.f32.gmra.mxu0 %v126
    %v166 = vpop.f32.mrf.mxu0
    %v167 = vadd.f32 %v112, %v166
    %168 = vmatmul.f32.gmra.mxu0 %v129
    %v169 = vpop.f32.mrf.mxu0
    %v170 = vadd.f32 %v112, %v169
    %171 = vmatmul.f32.gmra.mxu0 %v132
    %v172 = vpop.f32.mrf.mxu0
    %v173 = vadd.f32 %v112, %v172
    %174 = vmatmul.f32.gmra.mxu0 %v135
    %v175 = vpop.f32.mrf.mxu0
    %v176 = vadd.f32 %v112, %v175
    %177 = vmatmul.f32.gmra.mxu0 %v138
    %v178 = vpop.f32.mrf.mxu0
    %v179 = vadd.f32 %v112, %v178
    %180 = vmatmul.f32.gmra.mxu0 %v141
    %v181 = vpop.f32.mrf.mxu0
    %v182 = vadd.f32 %v112, %v181
    %183 = vdwg.mxu0
    %184 = vmatpush.msra.mxu0 0.0
    %185 = vmatpush.msra.mxu0 0.0
    %186 = vmatpush.msra.mxu0 0.0
    %187 = vmatpush.msra.mxu0 0.0
    %188 = vmatpush.msra.mxu0 0.0
    %189 = vmatpush.msra.mxu0 0.0
    %190 = vmatpush.msra.mxu0 0.0
    %191 = vmatpush.msra.mxu0 0.0
    %192 = vmatpush.msra.mxu0 0.0
    %193 = vmatpush.msra.mxu0 0.0
    %194 = vmatpush.msra.mxu0 0.0
    %195 = vmatpush.msra.mxu0 0.0
    %196 = vmatpush.msra.mxu0 0.0
    %197 = vmatpush.msra.mxu0 0.0
    %198 = vmatpush.msra.mxu0 %v108
    %199 = vmatpush.msra.mxu0 %v105
    %200 = vmatmul.f32.gmra.mxu0 %v120
    %v201 = vpop.f32.mrf.mxu0
    %v202 = vadd.f32 %v113, %v201
    %203 = vmatmul.f32.gmra.mxu0 %v123
    %v204 = vpop.f32.mrf.mxu0
    %v205 = vadd.f32 %v113, %v204
    %206 = vmatmul.f32.gmra.mxu0 %v126
    %v207 = vpop.f32.mrf.mxu0
    %v208 = vadd.f32 %v113, %v207
    %209 = vmatmul.f32.gmra.mxu0 %v129
    %v210 = vpop.f32.mrf.mxu0
    %v211 = vadd.f32 %v113, %v210
    %212 = vmatmul.f32.gmra.mxu0 %v132
    %v213 = vpop.f32.mrf.mxu0
    %v214 = vadd.f32 %v113, %v213
    %215 = vmatmul.f32.gmra.mxu0 %v135
    %v216 = vpop.f32.mrf.mxu0
    %v217 = vadd.f32 %v113, %v216
    %218 = vmatmul.f32.gmra.mxu0 %v138
    %v219 = vpop.f32.mrf.mxu0
    %v220 = vadd.f32 %v113, %v219
    %221 = vmatmul.f32.gmra.mxu0 %v141
    %v222 = vpop.f32.mrf.mxu0
    %v223 = vadd.f32 %v113, %v222
    %224 = vdwg.mxu0
    %225 = vmatpush.msra.mxu0 0.0
    %226 = vmatpush.msra.mxu0 0.0
    %227 = vmatpush.msra.mxu0 0.0
    %228 = vmatpush.msra.mxu0 0.0
    %229 = vmatpush.msra.mxu0 0.0
    %230 = vmatpush.msra.mxu0 0.0
    %231 = vmatpush.msra.mxu0 0.0
    %232 = vmatpush.msra.mxu0 0.0
    %233 = vmatpush.msra.mxu0 0.0
    %234 = vmatpush.msra.mxu0 0.0
    %235 = vmatpush.msra.mxu0 0.0
    %236 = vmatpush.msra.mxu0 0.0
    %237 = vmatpush.msra.mxu0 0.0
    %238 = vmatpush.msra.mxu0 0.0
    %239 = vmatpush.msra.mxu0 %v109
    %240 = vmatpush.msra.mxu0 %v106
    %241 = vmatmul.f32.gmra.mxu0 %v120
    %v242 = vpop.f32.mrf.mxu0
    %v243 = vadd.f32 %v114, %v242
    %244 = vmatmul.f32.gmra.mxu0 %v123
    %v245 = vpop.f32.mrf.mxu0
    %v246 = vadd.f32 %v114, %v245
    %247 = vmatmul.f32.gmra.mxu0 %v126
    %v248 = vpop.f32.mrf.mxu0
    %v249 = vadd.f32 %v114, %v248
    %250 = vmatmul.f32.gmra.mxu0 %v129
    %v251 = vpop.f32.mrf.mxu0
    %v252 = vadd.f32 %v114, %v251
    %253 = vmatmul.f32.gmra.mxu0 %v132
    %v254 = vpop.f32.mrf.mxu0
    %v255 = vadd.f32 %v114, %v254
    %256 = vmatmul.f32.gmra.mxu0 %v135
    %v257 = vpop.f32.mrf.mxu0
    %v258 = vadd.f32 %v114, %v257
    %259 = vmatmul.f32.gmra.mxu0 %v138
    %v260 = vpop.f32.mrf.mxu0
    %v261 = vadd.f32 %v114, %v260
    %262 = vmatmul.f32.gmra.mxu0 %v141
    %v263 = vpop.f32.mrf.mxu0
    %v264 = vadd.f32 %v114, %v263
    %265 = vdwg.mxu0
    %266 = vst [vmem:[#allocation2] sm:$0xff] %v161
    %267 = vst [vmem:[#allocation2 + $0x8] sm:$0xff] %v202
    %268 = vst [vmem:[#allocation2 + $0x10] sm:$0xff] %v243
    %269 = vst [vmem:[#allocation2 + $0x18] sm:$0xff] %v164
    %270 = vst [vmem:[#allocation2 + $0x20] sm:$0xff] %v205
    %271 = vst [vmem:[#allocation2 + $0x28] sm:$0xff] %v246
    %272 = vst [vmem:[#allocation2 + $0x30] sm:$0xff] %v167
    %273 = vst [vmem:[#allocation2 + $0x38] sm:$0xff] %v208
    %274 = vst [vmem:[#allocation2 + $0x40] sm:$0xff] %v249
    %275 = vst [vmem:[#allocation2 + $0x48] sm:$0xff] %v170
    %276 = vst [vmem:[#allocation2 + $0x50] sm:$0xff] %v211
    %277 = vst [vmem:[#allocation2 + $0x58] sm:$0xff] %v252
    %278 = vst [vmem:[#allocation2 + $0x60] sm:$0xff] %v173
    %279 = vst [vmem:[#allocation2 + $0x68] sm:$0xff] %v214
    %280 = vst [vmem:[#allocation2 + $0x70] sm:$0xff] %v255
    %281 = vst [vmem:[#allocation2 + $0x78] sm:$0xff] %v176
    %282 = vst [vmem:[#allocation2 + $0x80] sm:$0xff] %v217
    %283 = vst [vmem:[#allocation2 + $0x88] sm:$0xff] %v258
    %284 = vst [vmem:[#allocation2 + $0x90] sm:$0xff] %v179
    %285 = vst [vmem:[#allocation2 + $0x98] sm:$0xff] %v220
    %286 = vst [vmem:[#allocation2 + $0xa0] sm:$0xff] %v261
    %287 = vst [vmem:[#allocation2 + $0xa8] sm:$0xff] %v182
    %288 = vst [vmem:[#allocation2 + $0xb0] sm:$0xff] %v223
    %289 = vst [vmem:[#allocation2 + $0xb8] sm:$0xff] %v264
    %v290 = vld [vmem:[#allocation6] sm:$0xff]
    %v291 = vld [vmem:[#allocation6 + $0x8] sm:$0xff]
    %v292 = vld [vmem:[#allocation6 + $0x10] sm:$0xff]
    %v293 = vld [vmem:[#allocation6 + $0x18] sm:$0xff]
    %v294 = vld [vmem:[#allocation6 + $0x20] sm:$0xff]
    %v295 = vld [vmem:[#allocation6 + $0x28] sm:$0xff]
    %v296 = vld [vmem:[#allocation6 + $0x30] sm:$0xff]
    %v297 = vld [vmem:[#allocation6 + $0x38] sm:$0xff]
    %v298 = vld [vmem:[#allocation6 + $0x40] sm:$0xff]
    %v299 = vld [vmem:[#allocation6 + $0x48] sm:$0xff]
    %v300 = vld [vmem:[#allocation6 + $0x50] sm:$0xff]
    %v301 = vld [vmem:[#allocation6 + $0x58] sm:$0xff]
    %v302 = vld [vmem:[#allocation6 + $0x60] sm:$0xff]
    %v303 = vld [vmem:[#allocation6 + $0x68] sm:$0xff]
    %v304 = vld [vmem:[#allocation6 + $0x70] sm:$0xff]
    %v305 = vld [vmem:[#allocation6 + $0x78] sm:$0xff]
    %v306 = vld [vmem:[#allocation6 + $0x80] sm:$0xff]
    %v307 = vld [vmem:[#allocation6 + $0x88] sm:$0xff]
    %v308 = vld [vmem:[#allocation6 + $0x90] sm:$0xff]
    %v309 = vld [vmem:[#allocation6 + $0x98] sm:$0xff]
    %v310 = vld [vmem:[#allocation6 + $0xa0] sm:$0xff]
    %v311 = vld [vmem:[#allocation6 + $0xa8] sm:$0xff]
    %v312 = vld [vmem:[#allocation6 + $0xb0] sm:$0xff]
    %v313 = vld [vmem:[#allocation6 + $0xb8] sm:$0xff]
    %v314 = vld [vmem:[#allocation6 + $0xc0] sm:$0xff]
    %v315 = vld [vmem:[#allocation6 + $0xc8] sm:$0xff]
    %v316 = vld [vmem:[#allocation6 + $0xd0] sm:$0xff]
    %v317 = vld [vmem:[#allocation6 + $0xd8] sm:$0xff]
    %v318 = vld [vmem:[#allocation6 + $0xe0] sm:$0xff]
    %v319 = vld [vmem:[#allocation6 + $0xe8] sm:$0xff]
    %v320 = vld [vmem:[#allocation6 + $0xf0] sm:$0xff]
    %v321 = vld [vmem:[#allocation6 + $0xf8] sm:$0xff]
    %v322 = vld [vmem:[#allocation6 + $0x100] sm:$0xff]
    %v323 = vld [vmem:[#allocation6 + $0x108] sm:$0xff]
    %v324 = vld [vmem:[#allocation6 + $0x110] sm:$0xff]
    %v325 = vld [vmem:[#allocation6 + $0x118] sm:$0xff]
    %v326 = vld [vmem:[#allocation6 + $0x120] sm:$0xff]
    %v327 = vld [vmem:[#allocation6 + $0x128] sm:$0xff]
    %v328 = vld [vmem:[#allocation6 + $0x130] sm:$0xff]
    %v329 = vld [vmem:[#allocation6 + $0x138] sm:$0xff]
    %v330 = vld [vmem:[#allocation6 + $0x140] sm:$0xff]
    %v331 = vld [vmem:[#allocation6 + $0x148] sm:$0xff]
    %v332 = vld [vmem:[#allocation6 + $0x150] sm:$0xff]
    %v333 = vld [vmem:[#allocation6 + $0x158] sm:$0xff]
    %v334 = vld [vmem:[#allocation6 + $0x160] sm:$0xff]
    %v335 = vld [vmem:[#allocation6 + $0x168] sm:$0xff]
    %v336 = vld [vmem:[#allocation6 + $0x170] sm:$0xff]
    %v337 = vld [vmem:[#allocation6 + $0x178] sm:$0xff]
    %v338 = vld [vmem:[%s4] sm:$0x1]
    %v340 = vperm.slane %v338, 0
    %v342 = vld [vmem:[#allocation3] sm:$0xff]
    %343 = vmatpush.msra.mxu0 %v335
    %344 = vmatpush.msra.mxu0 %v332
    %345 = vmatpush.msra.mxu0 %v329
    %346 = vmatpush.msra.mxu0 %v326
    %347 = vmatpush.msra.mxu0 %v323
    %348 = vmatpush.msra.mxu0 %v320
    %349 = vmatpush.msra.mxu0 %v317
    %350 = vmatpush.msra.mxu0 %v314
    %351 = vmatpush.msra.mxu0 %v311
    %352 = vmatpush.msra.mxu0 %v308
    %353 = vmatpush.msra.mxu0 %v305
    %354 = vmatpush.msra.mxu0 %v302
    %355 = vmatpush.msra.mxu0 %v299
    %356 = vmatpush.msra.mxu0 %v296
    %357 = vmatpush.msra.mxu0 %v293
    %358 = vmatpush.msra.mxu0 %v290
    %359 = vmatmul.f32.gmra.mxu0 %v342
    %v360 = vpop.f32.mrf.mxu0
    %v361 = vadd.f32 0.0, %v360
    %362 = vdwg.mxu0
    %363 = vmatpush.msra.mxu0 %v336
    %364 = vmatpush.msra.mxu0 %v333
    %365 = vmatpush.msra.mxu0 %v330
    %366 = vmatpush.msra.mxu0 %v327
    %367 = vmatpush.msra.mxu0 %v324
    %368 = vmatpush.msra.mxu0 %v321
    %369 = vmatpush.msra.mxu0 %v318
    %370 = vmatpush.msra.mxu0 %v315
    %371 = vmatpush.msra.mxu0 %v312
    %372 = vmatpush.msra.mxu0 %v309
    %373 = vmatpush.msra.mxu0 %v306
    %374 = vmatpush.msra.mxu0 %v303
    %375 = vmatpush.msra.mxu0 %v300
    %376 = vmatpush.msra.mxu0 %v297
    %377 = vmatpush.msra.mxu0 %v294
    %378 = vmatpush.msra.mxu0 %v291
    %379 = vmatmul.f32.gmra.mxu0 %v342
    %v380 = vpop.f32.mrf.mxu0
    %v381 = vadd.f32 0.0, %v380
    %382 = vdwg.mxu0
    %383 = vmatpush.msra.mxu0 %v337
    %384 = vmatpush.msra.mxu0 %v334
    %385 = vmatpush.msra.mxu0 %v331
    %386 = vmatpush.msra.mxu0 %v328
    %387 = vmatpush.msra.mxu0 %v325
    %388 = vmatpush.msra.mxu0 %v322
    %389 = vmatpush.msra.mxu0 %v319
    %390 = vmatpush.msra.mxu0 %v316
    %391 = vmatpush.msra.mxu0 %v313
    %392 = vmatpush.msra.mxu0 %v310
    %393 = vmatpush.msra.mxu0 %v307
    %394 = vmatpush.msra.mxu0 %v304
    %395 = vmatpush.msra.mxu0 %v301
    %396 = vmatpush.msra.mxu0 %v298
    %397 = vmatpush.msra.mxu0 %v295
    %398 = vmatpush.msra.mxu0 %v292
    %399 = vmatmul.f32.gmra.mxu0 %v342
    %v400 = vpop.f32.mrf.mxu0
    %v401 = vadd.f32 0.0, %v400
    %402 = vdwg.mxu0
    %s403 = smul.u32 0, 3
    %s404 = smul.addr %s403, 8
    %s405 = scalar_lea.vmem [#allocation2], %s404
    %v406 = vld [vmem:[%s405] sm:$0xff]
    %v407 = vld [vmem:[%s405 + $0x8] sm:$0xff]
    %v408 = vld [vmem:[%s405 + $0x10] sm:$0xff]
    %v409 = vadd.f32 %v406, %v361
    %v410 = vxor.u32 %v409, 2147483648
    %v411 = vmul.f32 %v410, 1.442695
    %v412 = vpow.pop %v411
    %v413 = vadd.f32 %v412, 1.0
    %v414 = vrcp.pop %v413
    %v415 = vmul.f32 %v413, %v414
    %v416 = vsub.f32 1.0, %v415
    %v417 = vmul.f32 %v414, %v416
    %v418 = vadd.f32 %v414, %v417
    %vm419 = vweird.f32 %v413
    %vm420 = vweird.f32 %v414
    %vm421 = vmor %vm419, %vm420
    %v422 = vsel %vm421, %v414, %v418
    %v423 = vand.u32 2147483647, %v413
    %vm424 = vcmp.eq.f32.partialorder %v423, 8.507059e+37
    %v425 = vand.u32 %v413, 2147483648
    %v426 = vor.u32 1.1754944e-38, %v425
    %v427 = vsel %vm424, %v426, %v422
    %v428 = vmul.f32 1.0, %v427
    %v429 = vadd.f32 %v407, %v381
    %v430 = vxor.u32 %v429, 2147483648
    %v431 = vmul.f32 %v430, 1.442695
    %v432 = vpow.pop %v431
    %v433 = vadd.f32 %v432, 1.0
    %v434 = vrcp.pop %v433
    %v435 = vmul.f32 %v433, %v434
    %v436 = vsub.f32 1.0, %v435
    %v437 = vmul.f32 %v434, %v436
    %v438 = vadd.f32 %v434, %v437
    %vm439 = vweird.f32 %v433
    %vm440 = vweird.f32 %v434
    %vm441 = vmor %vm439, %vm440
    %v442 = vsel %vm441, %v434, %v438
    %v443 = vand.u32 2147483647, %v433
    %vm444 = vcmp.eq.f32.partialorder %v443, 8.507059e+37
    %v445 = vand.u32 %v433, 2147483648
    %v446 = vor.u32 1.1754944e-38, %v445
    %v447 = vsel %vm444, %v446, %v442
    %v448 = vmul.f32 1.0, %v447
    %v449 = vadd.f32 %v401, %v340
    %v450 = vmul.f32 %v428, %v449
    %v451 = vadd.f32 %v408, %v450
    %v452 = vtanh.pop %v451
    %v453 = vsub.f32 %v342, %v452
    %v454 = vmul.f32 %v448, %v453
    %v455 = vadd.f32 %v452, %v454
    %456 = vst [vmem:[#allocation5] sm:$0xff] %v455
    %457 = vmatpush.msra.mxu0 %v335
    %458 = vmatpush.msra.mxu0 %v332
    %459 = vmatpush.msra.mxu0 %v329
    %460 = vmatpush.msra.mxu0 %v326
    %461 = vmatpush.msra.mxu0 %v323
    %462 = vmatpush.msra.mxu0 %v320
    %463 = vmatpush.msra.mxu0 %v317
    %464 = vmatpush.msra.mxu0 %v314
    %465 = vmatpush.msra.mxu0 %v311
    %466 = vmatpush.msra.mxu0 %v308
    %467 = vmatpush.msra.mxu0 %v305
    %468 = vmatpush.msra.mxu0 %v302
    %469 = vmatpush.msra.mxu0 %v299
    %470 = vmatpush.msra.mxu0 %v296
    %471 = vmatpush.msra.mxu0 %v293
    %472 = vmatpush.msra.mxu0 %v290
    %473 = vmatmul.f32.gmra.mxu0 %v455
    %v474 = vpop.f32.mrf.mxu0
    %v475 = vadd.f32 0.0, %v474
    %476 = vdwg.mxu0
    %477 = vmatpush.msra.mxu0 %v336
    %478 = vmatpush.msra.mxu0 %v333
    %479 = vmatpush.msra.mxu0 %v330
    %480 = vmatpush.msra.mxu0 %v327
    %481 = vmatpush.msra.mxu0 %v324
    %482 = vmatpush.msra.mxu0 %v321
    %483 = vmatpush.msra.mxu0 %v318
    %484 = vmatpush.msra.mxu0 %v315
    %485 = vmatpush.msra.mxu0 %v312
    %486 = vmatpush.msra.mxu0 %v309
    %487 = vmatpush.msra.mxu0 %v306
    %488 = vmatpush.msra.mxu0 %v303
    %489 = vmatpush.msra.mxu0 %v300
    %490 = vmatpush.msra.mxu0 %v297
    %491 = vmatpush.msra.mxu0 %v294
    %492 = vmatpush.msra.mxu0 %v291
    %493 = vmatmul.f32.gmra.mxu0 %v455
    %v494 = vpop.f32.mrf.mxu0
    %v495 = vadd.f32 0.0, %v494
    %496 = vdwg.mxu0
    %497 = vmatpush.msra.mxu0 %v337
    %498 = vmatpush.msra.mxu0 %v334
    %499 = vmatpush.msra.mxu0 %v331
    %500 = vmatpush.msra.mxu0 %v328
    %501 = vmatpush.msra.mxu0 %v325
    %502 = vmatpush.msra.mxu0 %v322
    %503 = vmatpush.msra.mxu0 %v319
    %504 = vmatpush.msra.mxu0 %v316
    %505 = vmatpush.msra.mxu0 %v313
    %506 = vmatpush.msra.mxu0 %v310
    %507 = vmatpush.msra.mxu0 %v307
    %508 = vmatpush.msra.mxu0 %v304
    %509 = vmatpush.msra.mxu0 %v301
    %510 = vmatpush.msra.mxu0 %v298
    %511 = vmatpush.msra.mxu0 %v295
    %512 = vmatpush.msra.mxu0 %v292
    %513 = vmatmul.f32.gmra.mxu0 %v455
    %v514 = vpop.f32.mrf.mxu0
    %v515 = vadd.f32 0.0, %v514
    %516 = vdwg.mxu0
    %s517 = smul.u32 1, 3
    %s518 = smul.addr %s517, 8
    %s519 = scalar_lea.vmem [#allocation2], %s518
    %v520 = vld [vmem:[%s519] sm:$0xff]
    %v521 = vld [vmem:[%s519 + $0x8] sm:$0xff]
    %v522 = vld [vmem:[%s519 + $0x10] sm:$0xff]
    %v523 = vadd.f32 %v520, %v475
    %v524 = vxor.u32 %v523, 2147483648
    %v525 = vmul.f32 %v524, 1.442695
    %v526 = vpow.pop %v525
    %v527 = vadd.f32 %v526, 1.0
    %v528 = vrcp.pop %v527
    %v529 = vmul.f32 %v527, %v528
    %v530 = vsub.f32 1.0, %v529
    %v531 = vmul.f32 %v528, %v530
    %v532 = vadd.f32 %v528, %v531
    %vm533 = vweird.f32 %v527
    %vm534 = vweird.f32 %v528
    %vm535 = vmor %vm533, %vm534
    %v536 = vsel %vm535, %v528, %v532
    %v537 = vand.u32 2147483647, %v527
    %vm538 = vcmp.eq.f32.partialorder %v537, 8.507059e+37
    %v539 = vand.u32 %v527, 2147483648
    %v540 = vor.u32 1.1754944e-38, %v539
    %v541 = vsel %vm538, %v540, %v536
    %v542 = vmul.f32 1.0, %v541
    %v543 = vadd.f32 %v521, %v495
    %v544 = vxor.u32 %v543, 2147483648
    %v545 = vmul.f32 %v544, 1.442695
    %v546 = vpow.pop %v545
    %v547 = vadd.f32 %v546, 1.0
    %v548 = vrcp.pop %v547
    %v549 = vmul.f32 %v547, %v548
    %v550 = vsub.f32 1.0, %v549
    %v551 = vmul.f32 %v548, %v550
    %v552 = vadd.f32 %v548, %v551
    %vm553 = vweird.f32 %v547
    %vm554 = vweird.f32 %v548
    %vm555 = vmor %vm553, %vm554
    %v556 = vsel %vm555, %v548, %v552
    %v557 = vand.u32 2147483647, %v547
    %vm558 = vcmp.eq.f32.partialorder %v557, 8.507059e+37
    %v559 = vand.u32 %v547, 2147483648
    %v560 = vor.u32 1.1754944e-38, %v559
    %v561 = vsel %vm558, %v560, %v556
    %v562 = vmul.f32 1.0, %v561
    %v563 = vadd.f32 %v515, %v340
    %v564 = vmul.f32 %v542, %v563
    %v565 = vadd.f32 %v522, %v564
    %v566 = vtanh.pop %v565
    %v567 = vsub.f32 %v455, %v566
    %v568 = vmul.f32 %v562, %v567
    %v569 = vadd.f32 %v566, %v568
    %s570 = scalar_lea.vmem [#allocation5], 8
    %571 = vst [vmem:[%s570] sm:$0xff] %v569
    %572 = vmatpush.msra.mxu0 %v335
    %573 = vmatpush.msra.mxu0 %v332
    %574 = vmatpush.msra.mxu0 %v329
    %575 = vmatpush.msra.mxu0 %v326
    %576 = vmatpush.msra.mxu0 %v323
    %577 = vmatpush.msra.mxu0 %v320
    %578 = vmatpush.msra.mxu0 %v317
    %579 = vmatpush.msra.mxu0 %v314
    %580 = vmatpush.msra.mxu0 %v311
    %581 = vmatpush.msra.mxu0 %v308
    %582 = vmatpush.msra.mxu0 %v305
    %583 = vmatpush.msra.mxu0 %v302
    %584 = vmatpush.msra.mxu0 %v299
    %585 = vmatpush.msra.mxu0 %v296
    %586 = vmatpush.msra.mxu0 %v293
    %587 = vmatpush.msra.mxu0 %v290
    %588 = vmatmul.f32.gmra.mxu0 %v569
    %v589 = vpop.f32.mrf.mxu0
    %v590 = vadd.f32 0.0, %v589
    %591 = vdwg.mxu0
    %592 = vmatpush.msra.mxu0 %v336
    %593 = vmatpush.msra.mxu0 %v333
    %594 = vmatpush.msra.mxu0 %v330
    %595 = vmatpush.msra.mxu0 %v327
    %596 = vmatpush.msra.mxu0 %v324
    %597 = vmatpush.msra.mxu0 %v321
    %598 = vmatpush.msra.mxu0 %v318
    %599 = vmatpush.msra.mxu0 %v315
    %600 = vmatpush.msra.mxu0 %v312
    %601 = vmatpush.msra.mxu0 %v309
    %602 = vmatpush.msra.mxu0 %v306
    %603 = vmatpush.msra.mxu0 %v303
    %604 = vmatpush.msra.mxu0 %v300
    %605 = vmatpush.msra.mxu0 %v297
    %606 = vmatpush.msra.mxu0 %v294
    %607 = vmatpush.msra.mxu0 %v291
    %608 = vmatmul.f32.gmra.mxu0 %v569
    %v609 = vpop.f32.mrf.mxu0
    %v610 = vadd.f32 0.0, %v609
    %611 = vdwg.mxu0
    %612 = vmatpush.msra.mxu0 %v337
    %613 = vmatpush.msra.mxu0 %v334
    %614 = vmatpush.msra.mxu0 %v331
    %615 = vmatpush.msra.mxu0 %v328
    %616 = vmatpush.msra.mxu0 %v325
    %617 = vmatpush.msra.mxu0 %v322
    %618 = vmatpush.msra.mxu0 %v319
    %619 = vmatpush.msra.mxu0 %v316
    %620 = vmatpush.msra.mxu0 %v313
    %621 = vmatpush.msra.mxu0 %v310
    %622 = vmatpush.msra.mxu0 %v307
    %623 = vmatpush.msra.mxu0 %v304
    %624 = vmatpush.msra.mxu0 %v301
    %625 = vmatpush.msra.mxu0 %v298
    %626 = vmatpush.msra.mxu0 %v295
    %627 = vmatpush.msra.mxu0 %v292
    %628 = vmatmul.f32.gmra.mxu0 %v569
    %v629 = vpop.f32.mrf.mxu0
    %v630 = vadd.f32 0.0, %v629
    %631 = vdwg.mxu0
    %s632 = smul.u32 2, 3
    %s633 = smul.addr %s632, 8
    %s634 = scalar_lea.vmem [#allocation2], %s633
    %v635 = vld [vmem:[%s634] sm:$0xff]
    %v636 = vld [vmem:[%s634 + $0x8] sm:$0xff]
    %v637 = vld [vmem:[%s634 + $0x10] sm:$0xff]
    %v638 = vadd.f32 %v635, %v590
    %v639 = vxor.u32 %v638, 2147483648
    %v640 = vmul.f32 %v639, 1.442695
    %v641 = vpow.pop %v640
    %v642 = vadd.f32 %v641, 1.0
    %v643 = vrcp.pop %v642
    %v644 = vmul.f32 %v642, %v643
    %v645 = vsub.f32 1.0, %v644
    %v646 = vmul.f32 %v643, %v645
    %v647 = vadd.f32 %v643, %v646
    %vm648 = vweird.f32 %v642
    %vm649 = vweird.f32 %v643
    %vm650 = vmor %vm648, %vm649
    %v651 = vsel %vm650, %v643, %v647
    %v652 = vand.u32 2147483647, %v642
    %vm653 = vcmp.eq.f32.partialorder %v652, 8.507059e+37
    %v654 = vand.u32 %v642, 2147483648
    %v655 = vor.u32 1.1754944e-38, %v654
    %v656 = vsel %vm653, %v655, %v651
    %v657 = vmul.f32 1.0, %v656
    %v658 = vadd.f32 %v636, %v610
    %v659 = vxor.u32 %v658, 2147483648
    %v660 = vmul.f32 %v659, 1.442695
    %v661 = vpow.pop %v660
    %v662 = vadd.f32 %v661, 1.0
    %v663 = vrcp.pop %v662
    %v664 = vmul.f32 %v662, %v663
    %v665 = vsub.f32 1.0, %v664
    %v666 = vmul.f32 %v663, %v665
    %v667 = vadd.f32 %v663, %v666
    %vm668 = vweird.f32 %v662
    %vm669 = vweird.f32 %v663
    %vm670 = vmor %vm668, %vm669
    %v671 = vsel %vm670, %v663, %v667
    %v672 = vand.u32 2147483647, %v662
    %vm673 = vcmp.eq.f32.partialorder %v672, 8.507059e+37
    %v674 = vand.u32 %v662, 2147483648
    %v675 = vor.u32 1.1754944e-38, %v674
    %v676 = vsel %vm673, %v675, %v671
    %v677 = vmul.f32 1.0, %v676
    %v678 = vadd.f32 %v630, %v340
    %v679 = vmul.f32 %v657, %v678
    %v680 = vadd.f32 %v637, %v679
    %v681 = vtanh.pop %v680
    %v682 = vsub.f32 %v569, %v681
    %v683 = vmul.f32 %v677, %v682
    %v684 = vadd.f32 %v681, %v683
    %s685 = scalar_lea.vmem [#allocation5], 16
    %686 = vst [vmem:[%s685] sm:$0xff] %v684
    %687 = vmatpush.msra.mxu0 %v335
    %688 = vmatpush.msra.mxu0 %v332
    %689 = vmatpush.msra.mxu0 %v329
    %690 = vmatpush.msra.mxu0 %v326
    %691 = vmatpush.msra.mxu0 %v323
    %692 = vmatpush.msra.mxu0 %v320
    %693 = vmatpush.msra.mxu0 %v317
    %694 = vmatpush.msra.mxu0 %v314
    %695 = vmatpush.msra.mxu0 %v311
    %696 = vmatpush.msra.mxu0 %v308
    %697 = vmatpush.msra.mxu0 %v305
    %698 = vmatpush.msra.mxu0 %v302
    %699 = vmatpush.msra.mxu0 %v299
    %700 = vmatpush.msra.mxu0 %v296
    %701 = vmatpush.msra.mxu0 %v293
    %702 = vmatpush.msra.mxu0 %v290
    %703 = vmatmul.f32.gmra.mxu0 %v684
    %v704 = vpop.f32.mrf.mxu0
    %v705 = vadd.f32 0.0, %v704
    %706 = vdwg.mxu0
    %707 = vmatpush.msra.mxu0 %v336
    %708 = vmatpush.msra.mxu0 %v333
    %709 = vmatpush.msra.mxu0 %v330
    %710 = vmatpush.msra.mxu0 %v327
    %711 = vmatpush.msra.mxu0 %v324
    %712 = vmatpush.msra.mxu0 %v321
    %713 = vmatpush.msra.mxu0 %v318
    %714 = vmatpush.msra.mxu0 %v315
    %715 = vmatpush.msra.mxu0 %v312
    %716 = vmatpush.msra.mxu0 %v309
    %717 = vmatpush.msra.mxu0 %v306
    %718 = vmatpush.msra.mxu0 %v303
    %719 = vmatpush.msra.mxu0 %v300
    %720 = vmatpush.msra.mxu0 %v297
    %721 = vmatpush.msra.mxu0 %v294
    %722 = vmatpush.msra.mxu0 %v291
    %723 = vmatmul.f32.gmra.mxu0 %v684
    %v724 = vpop.f32.mrf.mxu0
    %v725 = vadd.f32 0.0, %v724
    %726 = vdwg.mxu0
    %727 = vmatpush.msra.mxu0 %v337
    %728 = vmatpush.msra.mxu0 %v334
    %729 = vmatpush.msra.mxu0 %v331
    %730 = vmatpush.msra.mxu0 %v328
    %731 = vmatpush.msra.mxu0 %v325
    %732 = vmatpush.msra.mxu0 %v322
    %733 = vmatpush.msra.mxu0 %v319
    %734 = vmatpush.msra.mxu0 %v316
    %735 = vmatpush.msra.mxu0 %v313
    %736 = vmatpush.msra.mxu0 %v310
    %737 = vmatpush.msra.mxu0 %v307
    %738 = vmatpush.msra.mxu0 %v304
    %739 = vmatpush.msra.mxu0 %v301
    %740 = vmatpush.msra.mxu0 %v298
    %741 = vmatpush.msra.mxu0 %v295
    %742 = vmatpush.msra.mxu0 %v292
    %743 = vmatmul.f32.gmra.mxu0 %v684
    %v744 = vpop.f32.mrf.mxu0
    %v745 = vadd.f32 0.0, %v744
    %746 = vdwg.mxu0
    %s747 = smul.u32 3, 3
    %s748 = smul.addr %s747, 8
    %s749 = scalar_lea.vmem [#allocation2], %s748
    %v750 = vld [vmem:[%s749] sm:$0xff]
    %v751 = vld [vmem:[%s749 + $0x8] sm:$0xff]
    %v752 = vld [vmem:[%s749 + $0x10] sm:$0xff]
    %v753 = vadd.f32 %v750, %v705
    %v754 = vxor.u32 %v753, 2147483648
    %v755 = vmul.f32 %v754, 1.442695
    %v756 = vpow.pop %v755
    %v757 = vadd.f32 %v756, 1.0
    %v758 = vrcp.pop %v757
    %v759 = vmul.f32 %v757, %v758
    %v760 = vsub.f32 1.0, %v759
    %v761 = vmul.f32 %v758, %v760
    %v762 = vadd.f32 %v758, %v761
    %vm763 = vweird.f32 %v757
    %vm764 = vweird.f32 %v758
    %vm765 = vmor %vm763, %vm764
    %v766 = vsel %vm765, %v758, %v762
    %v767 = vand.u32 2147483647, %v757
    %vm768 = vcmp.eq.f32.partialorder %v767, 8.507059e+37
    %v769 = vand.u32 %v757, 2147483648
    %v770 = vor.u32 1.1754944e-38, %v769
    %v771 = vsel %vm768, %v770, %v766
    %v772 = vmul.f32 1.0, %v771
    %v773 = vadd.f32 %v751, %v725
    %v774 = vxor.u32 %v773, 2147483648
    %v775 = vmul.f32 %v774, 1.442695
    %v776 = vpow.pop %v775
    %v777 = vadd.f32 %v776, 1.0
    %v778 = vrcp.pop %v777
    %v779 = vmul.f32 %v777, %v778
    %v780 = vsub.f32 1.0, %v779
    %v781 = vmul.f32 %v778, %v780
    %v782 = vadd.f32 %v778, %v781
    %vm783 = vweird.f32 %v777
    %vm784 = vweird.f32 %v778
    %vm785 = vmor %vm783, %vm784
    %v786 = vsel %vm785, %v778, %v782
    %v787 = vand.u32 2147483647, %v777
    %vm788 = vcmp.eq.f32.partialorder %v787, 8.507059e+37
    %v789 = vand.u32 %v777, 2147483648
    %v790 = vor.u32 1.1754944e-38, %v789
    %v791 = vsel %vm788, %v790, %v786
    %v792 = vmul.f32 1.0, %v791
    %v793 = vadd.f32 %v745, %v340
    %v794 = vmul.f32 %v772, %v793
    %v795 = vadd.f32 %v752, %v794
    %v796 = vtanh.pop %v795
    %v797 = vsub.f32 %v684, %v796
    %v798 = vmul.f32 %v792, %v797
    %v799 = vadd.f32 %v796, %v798
    %s800 = scalar_lea.vmem [#allocation5], 24
    %801 = vst [vmem:[%s800] sm:$0xff] %v799
    %802 = vmatpush.msra.mxu0 %v335
    %803 = vmatpush.msra.mxu0 %v332
    %804 = vmatpush.msra.mxu0 %v329
    %805 = vmatpush.msra.mxu0 %v326
    %806 = vmatpush.msra.mxu0 %v323
    %807 = vmatpush.msra.mxu0 %v320
    %808 = vmatpush.msra.mxu0 %v317
    %809 = vmatpush.msra.mxu0 %v314
    %810 = vmatpush.msra.mxu0 %v311
    %811 = vmatpush.msra.mxu0 %v308
    %812 = vmatpush.msra.mxu0 %v305
    %813 = vmatpush.msra.mxu0 %v302
    %814 = vmatpush.msra.mxu0 %v299
    %815 = vmatpush.msra.mxu0 %v296
    %816 = vmatpush.msra.mxu0 %v293
    %817 = vmatpush.msra.mxu0 %v290
    %818 = vmatmul.f32.gmra.mxu0 %v799
    %v819 = vpop.f32.mrf.mxu0
    %v820 = vadd.f32 0.0, %v819
    %821 = vdwg.mxu0
    %822 = vmatpush.msra.mxu0 %v336
    %823 = vmatpush.msra.mxu0 %v333
    %824 = vmatpush.msra.mxu0 %v330
    %825 = vmatpush.msra.mxu0 %v327
    %826 = vmatpush.msra.mxu0 %v324
    %827 = vmatpush.msra.mxu0 %v321
    %828 = vmatpush.msra.mxu0 %v318
    %829 = vmatpush.msra.mxu0 %v315
    %830 = vmatpush.msra.mxu0 %v312
    %831 = vmatpush.msra.mxu0 %v309
    %832 = vmatpush.msra.mxu0 %v306
    %833 = vmatpush.msra.mxu0 %v303
    %834 = vmatpush.msra.mxu0 %v300
    %835 = vmatpush.msra.mxu0 %v297
    %836 = vmatpush.msra.mxu0 %v294
    %837 = vmatpush.msra.mxu0 %v291
    %838 = vmatmul.f32.gmra.mxu0 %v799
    %v839 = vpop.f32.mrf.mxu0
    %v840 = vadd.f32 0.0, %v839
    %841 = vdwg.mxu0
    %842 = vmatpush.msra.mxu0 %v337
    %843 = vmatpush.msra.mxu0 %v334
    %844 = vmatpush.msra.mxu0 %v331
    %845 = vmatpush.msra.mxu0 %v328
    %846 = vmatpush.msra.mxu0 %v325
    %847 = vmatpush.msra.mxu0 %v322
    %848 = vmatpush.msra.mxu0 %v319
    %849 = vmatpush.msra.mxu0 %v316
    %850 = vmatpush.msra.mxu0 %v313
    %851 = vmatpush.msra.mxu0 %v310
    %852 = vmatpush.msra.mxu0 %v307
    %853 = vmatpush.msra.mxu0 %v304
    %854 = vmatpush.msra.mxu0 %v301
    %855 = vmatpush.msra.mxu0 %v298
    %856 = vmatpush.msra.mxu0 %v295
    %857 = vmatpush.msra.mxu0 %v292
    %858 = vmatmul.f32.gmra.mxu0 %v799
    %v859 = vpop.f32.mrf.mxu0
    %v860 = vadd.f32 0.0, %v859
    %861 = vdwg.mxu0
    %s862 = smul.u32 4, 3
    %s863 = smul.addr %s862, 8
    %s864 = scalar_lea.vmem [#allocation2], %s863
    %v865 = vld [vmem:[%s864] sm:$0xff]
    %v866 = vld [vmem:[%s864 + $0x8] sm:$0xff]
    %v867 = vld [vmem:[%s864 + $0x10] sm:$0xff]
    %v868 = vadd.f32 %v865, %v820
    %v869 = vxor.u32 %v868, 2147483648
    %v870 = vmul.f32 %v869, 1.442695
    %v871 = vpow.pop %v870
    %v872 = vadd.f32 %v871, 1.0
    %v873 = vrcp.pop %v872
    %v874 = vmul.f32 %v872, %v873
    %v875 = vsub.f32 1.0, %v874
    %v876 = vmul.f32 %v873, %v875
    %v877 = vadd.f32 %v873, %v876
    %vm878 = vweird.f32 %v872
    %vm879 = vweird.f32 %v873
    %vm880 = vmor %vm878, %vm879
    %v881 = vsel %vm880, %v873, %v877
    %v882 = vand.u32 2147483647, %v872
    %vm883 = vcmp.eq.f32.partialorder %v882, 8.507059e+37
    %v884 = vand.u32 %v872, 2147483648
    %v885 = vor.u32 1.1754944e-38, %v884
    %v886 = vsel %vm883, %v885, %v881
    %v887 = vmul.f32 1.0, %v886
    %v888 = vadd.f32 %v866, %v840
    %v889 = vxor.u32 %v888, 2147483648
    %v890 = vmul.f32 %v889, 1.442695
    %v891 = vpow.pop %v890
    %v892 = vadd.f32 %v891, 1.0
    %v893 = vrcp.pop %v892
    %v894 = vmul.f32 %v892, %v893
    %v895 = vsub.f32 1.0, %v894
    %v896 = vmul.f32 %v893, %v895
    %v897 = vadd.f32 %v893, %v896
    %vm898 = vweird.f32 %v892
    %vm899 = vweird.f32 %v893
    %vm900 = vmor %vm898, %vm899
    %v901 = vsel %vm900, %v893, %v897
    %v902 = vand.u32 2147483647, %v892
    %vm903 = vcmp.eq.f32.partialorder %v902, 8.507059e+37
    %v904 = vand.u32 %v892, 2147483648
    %v905 = vor.u32 1.1754944e-38, %v904
    %v906 = vsel %vm903, %v905, %v901
    %v907 = vmul.f32 1.0, %v906
    %v908 = vadd.f32 %v860, %v340
    %v909 = vmul.f32 %v887, %v908
    %v910 = vadd.f32 %v867, %v909
    %v911 = vtanh.pop %v910
    %v912 = vsub.f32 %v799, %v911
    %v913 = vmul.f32 %v907, %v912
    %v914 = vadd.f32 %v911, %v913
    %s915 = scalar_lea.vmem [#allocation5], 32
    %916 = vst [vmem:[%s915] sm:$0xff] %v914
    %917 = vmatpush.msra.mxu0 %v335
    %918 = vmatpush.msra.mxu0 %v332
    %919 = vmatpush.msra.mxu0 %v329
    %920 = vmatpush.msra.mxu0 %v326
    %921 = vmatpush.msra.mxu0 %v323
    %922 = vmatpush.msra.mxu0 %v320
    %923 = vmatpush.msra.mxu0 %v317
    %924 = vmatpush.msra.mxu0 %v314
    %925 = vmatpush.msra.mxu0 %v311
    %926 = vmatpush.msra.mxu0 %v308
    %927 = vmatpush.msra.mxu0 %v305
    %928 = vmatpush.msra.mxu0 %v302
    %929 = vmatpush.msra.mxu0 %v299
    %930 = vmatpush.msra.mxu0 %v296
    %931 = vmatpush.msra.mxu0 %v293
    %932 = vmatpush.msra.mxu0 %v290
    %933 = vmatmul.f32.gmra.mxu0 %v914
    %v934 = vpop.f32.mrf.mxu0
    %v935 = vadd.f32 0.0, %v934
    %936 = vdwg.mxu0
    %937 = vmatpush.msra.mxu0 %v336
    %938 = vmatpush.msra.mxu0 %v333
    %939 = vmatpush.msra.mxu0 %v330
    %940 = vmatpush.msra.mxu0 %v327
    %941 = vmatpush.msra.mxu0 %v324
    %942 = vmatpush.msra.mxu0 %v321
    %943 = vmatpush.msra.mxu0 %v318
    %944 = vmatpush.msra.mxu0 %v315
    %945 = vmatpush.msra.mxu0 %v312
    %946 = vmatpush.msra.mxu0 %v309
    %947 = vmatpush.msra.mxu0 %v306
    %948 = vmatpush.msra.mxu0 %v303
    %949 = vmatpush.msra.mxu0 %v300
    %950 = vmatpush.msra.mxu0 %v297
    %951 = vmatpush.msra.mxu0 %v294
    %952 = vmatpush.msra.mxu0 %v291
    %953 = vmatmul.f32.gmra.mxu0 %v914
    %v954 = vpop.f32.mrf.mxu0
    %v955 = vadd.f32 0.0, %v954
    %956 = vdwg.mxu0
    %957 = vmatpush.msra.mxu0 %v337
    %958 = vmatpush.msra.mxu0 %v334
    %959 = vmatpush.msra.mxu0 %v331
    %960 = vmatpush.msra.mxu0 %v328
    %961 = vmatpush.msra.mxu0 %v325
    %962 = vmatpush.msra.mxu0 %v322
    %963 = vmatpush.msra.mxu0 %v319
    %964 = vmatpush.msra.mxu0 %v316
    %965 = vmatpush.msra.mxu0 %v313
    %966 = vmatpush.msra.mxu0 %v310
    %967 = vmatpush.msra.mxu0 %v307
    %968 = vmatpush.msra.mxu0 %v304
    %969 = vmatpush.msra.mxu0 %v301
    %970 = vmatpush.msra.mxu0 %v298
    %971 = vmatpush.msra.mxu0 %v295
    %972 = vmatpush.msra.mxu0 %v292
    %973 = vmatmul.f32.gmra.mxu0 %v914
    %v974 = vpop.f32.mrf.mxu0
    %v975 = vadd.f32 0.0, %v974
    %976 = vdwg.mxu0
    %s977 = smul.u32 5, 3
    %s978 = smul.addr %s977, 8
    %s979 = scalar_lea.vmem [#allocation2], %s978
    %v980 = vld [vmem:[%s979] sm:$0xff]
    %v981 = vld [vmem:[%s979 + $0x8] sm:$0xff]
    %v982 = vld [vmem:[%s979 + $0x10] sm:$0xff]
    %v983 = vadd.f32 %v980, %v935
    %v984 = vxor.u32 %v983, 2147483648
    %v985 = vmul.f32 %v984, 1.442695
    %v986 = vpow.pop %v985
    %v987 = vadd.f32 %v986, 1.0
    %v988 = vrcp.pop %v987
    %v989 = vmul.f32 %v987, %v988
    %v990 = vsub.f32 1.0, %v989
    %v991 = vmul.f32 %v988, %v990
    %v992 = vadd.f32 %v988, %v991
    %vm993 = vweird.f32 %v987
    %vm994 = vweird.f32 %v988
    %vm995 = vmor %vm993, %vm994
    %v996 = vsel %vm995, %v988, %v992
    %v997 = vand.u32 2147483647, %v987
    %vm998 = vcmp.eq.f32.partialorder %v997, 8.507059e+37
    %v999 = vand.u32 %v987, 2147483648
    %v1000 = vor.u32 1.1754944e-38, %v999
    %v1001 = vsel %vm998, %v1000, %v996
    %v1002 = vmul.f32 1.0, %v1001
    %v1003 = vadd.f32 %v981, %v955
    %v1004 = vxor.u32 %v1003, 2147483648
    %v1005 = vmul.f32 %v1004, 1.442695
    %v1006 = vpow.pop %v1005
    %v1007 = vadd.f32 %v1006, 1.0
    %v1008 = vrcp.pop %v1007
    %v1009 = vmul.f32 %v1007, %v1008
    %v1010 = vsub.f32 1.0, %v1009
    %v1011 = vmul.f32 %v1008, %v1010
    %v1012 = vadd.f32 %v1008, %v1011
    %vm1013 = vweird.f32 %v1007
    %vm1014 = vweird.f32 %v1008
    %vm1015 = vmor %vm1013, %vm1014
    %v1016 = vsel %vm1015, %v1008, %v1012
    %v1017 = vand.u32 2147483647, %v1007
    %vm1018 = vcmp.eq.f32.partialorder %v1017, 8.507059e+37
    %v1019 = vand.u32 %v1007, 2147483648
    %v1020 = vor.u32 1.1754944e-38, %v1019
    %v1021 = vsel %vm1018, %v1020, %v1016
    %v1022 = vmul.f32 1.0, %v1021
    %v1023 = vadd.f32 %v975, %v340
    %v1024 = vmul.f32 %v1002, %v1023
    %v1025 = vadd.f32 %v982, %v1024
    %v1026 = vtanh.pop %v1025
    %v1027 = vsub.f32 %v914, %v1026
    %v1028 = vmul.f32 %v1022, %v1027
    %v1029 = vadd.f32 %v1026, %v1028
    %s1030 = scalar_lea.vmem [#allocation5], 40
    %1031 = vst [vmem:[%s1030] sm:$0xff] %v1029
    %1032 = vmatpush.msra.mxu0 %v335
    %1033 = vmatpush.msra.mxu0 %v332
    %1034 = vmatpush.msra.mxu0 %v329
    %1035 = vmatpush.msra.mxu0 %v326
    %1036 = vmatpush.msra.mxu0 %v323
    %1037 = vmatpush.msra.mxu0 %v320
    %1038 = vmatpush.msra.mxu0 %v317
    %1039 = vmatpush.msra.mxu0 %v314
    %1040 = vmatpush.msra.mxu0 %v311
    %1041 = vmatpush.msra.mxu0 %v308
    %1042 = vmatpush.msra.mxu0 %v305
    %1043 = vmatpush.msra.mxu0 %v302
    %1044 = vmatpush.msra.mxu0 %v299
    %1045 = vmatpush.msra.mxu0 %v296
    %1046 = vmatpush.msra.mxu0 %v293
    %1047 = vmatpush.msra.mxu0 %v290
    %1048 = vmatmul.f32.gmra.mxu0 %v1029
    %v1049 = vpop.f32.mrf.mxu0
    %v1050 = vadd.f32 0.0, %v1049
    %1051 = vdwg.mxu0
    %1052 = vmatpush.msra.mxu0 %v336
    %1053 = vmatpush.msra.mxu0 %v333
    %1054 = vmatpush.msra.mxu0 %v330
    %1055 = vmatpush.msra.mxu0 %v327
    %1056 = vmatpush.msra.mxu0 %v324
    %1057 = vmatpush.msra.mxu0 %v321
    %1058 = vmatpush.msra.mxu0 %v318
    %1059 = vmatpush.msra.mxu0 %v315
    %1060 = vmatpush.msra.mxu0 %v312
    %1061 = vmatpush.msra.mxu0 %v309
    %1062 = vmatpush.msra.mxu0 %v306
    %1063 = vmatpush.msra.mxu0 %v303
    %1064 = vmatpush.msra.mxu0 %v300
    %1065 = vmatpush.msra.mxu0 %v297
    %1066 = vmatpush.msra.mxu0 %v294
    %1067 = vmatpush.msra.mxu0 %v291
    %1068 = vmatmul.f32.gmra.mxu0 %v1029
    %v1069 = vpop.f32.mrf.mxu0
    %v1070 = vadd.f32 0.0, %v1069
    %1071 = vdwg.mxu0
    %1072 = vmatpush.msra.mxu0 %v337
    %1073 = vmatpush.msra.mxu0 %v334
    %1074 = vmatpush.msra.mxu0 %v331
    %1075 = vmatpush.msra.mxu0 %v328
    %1076 = vmatpush.msra.mxu0 %v325
    %1077 = vmatpush.msra.mxu0 %v322
    %1078 = vmatpush.msra.mxu0 %v319
    %1079 = vmatpush.msra.mxu0 %v316
    %1080 = vmatpush.msra.mxu0 %v313
    %1081 = vmatpush.msra.mxu0 %v310
    %1082 = vmatpush.msra.mxu0 %v307
    %1083 = vmatpush.msra.mxu0 %v304
    %1084 = vmatpush.msra.mxu0 %v301
    %1085 = vmatpush.msra.mxu0 %v298
    %1086 = vmatpush.msra.mxu0 %v295
    %1087 = vmatpush.msra.mxu0 %v292
    %1088 = vmatmul.f32.gmra.mxu0 %v1029
    %v1089 = vpop.f32.mrf.mxu0
    %v1090 = vadd.f32 0.0, %v1089
    %1091 = vdwg.mxu0
    %s1092 = smul.u32 6, 3
    %s1093 = smul.addr %s1092, 8
    %s1094 = scalar_lea.vmem [#allocation2], %s1093
    %v1095 = vld [vmem:[%s1094] sm:$0xff]
    %v1096 = vld [vmem:[%s1094 + $0x8] sm:$0xff]
    %v1097 = vld [vmem:[%s1094 + $0x10] sm:$0xff]
    %v1098 = vadd.f32 %v1095, %v1050
    %v1099 = vxor.u32 %v1098, 2147483648
    %v1100 = vmul.f32 %v1099, 1.442695
    %v1101 = vpow.pop %v1100
    %v1102 = vadd.f32 %v1101, 1.0
    %v1103 = vrcp.pop %v1102
    %v1104 = vmul.f32 %v1102, %v1103
    %v1105 = vsub.f32 1.0, %v1104
    %v1106 = vmul.f32 %v1103, %v1105
    %v1107 = vadd.f32 %v1103, %v1106
    %vm1108 = vweird.f32 %v1102
    %vm1109 = vweird.f32 %v1103
    %vm1110 = vmor %vm1108, %vm1109
    %v1111 = vsel %vm1110, %v1103, %v1107
    %v1112 = vand.u32 2147483647, %v1102
    %vm1113 = vcmp.eq.f32.partialorder %v1112, 8.507059e+37
    %v1114 = vand.u32 %v1102, 2147483648
    %v1115 = vor.u32 1.1754944e-38, %v1114
    %v1116 = vsel %vm1113, %v1115, %v1111
    %v1117 = vmul.f32 1.0, %v1116
    %v1118 = vadd.f32 %v1096, %v1070
    %v1119 = vxor.u32 %v1118, 2147483648
    %v1120 = vmul.f32 %v1119, 1.442695
    %v1121 = vpow.pop %v1120
    %v1122 = vadd.f32 %v1121, 1.0
    %v1123 = vrcp.pop %v1122
    %v1124 = vmul.f32 %v1122, %v1123
    %v1125 = vsub.f32 1.0, %v1124
    %v1126 = vmul.f32 %v1123, %v1125
    %v1127 = vadd.f32 %v1123, %v1126
    %vm1128 = vweird.f32 %v1122
    %vm1129 = vweird.f32 %v1123
    %vm1130 = vmor %vm1128, %vm1129
    %v1131 = vsel %vm1130, %v1123, %v1127
    %v1132 = vand.u32 2147483647, %v1122
    %vm1133 = vcmp.eq.f32.partialorder %v1132, 8.507059e+37
    %v1134 = vand.u32 %v1122, 2147483648
    %v1135 = vor.u32 1.1754944e-38, %v1134
    %v1136 = vsel %vm1133, %v1135, %v1131
    %v1137 = vmul.f32 1.0, %v1136
    %v1138 = vadd.f32 %v1090, %v340
    %v1139 = vmul.f32 %v1117, %v1138
    %v1140 = vadd.f32 %v1097, %v1139
    %v1141 = vtanh.pop %v1140
    %v1142 = vsub.f32 %v1029, %v1141
    %v1143 = vmul.f32 %v1137, %v1142
    %v1144 = vadd.f32 %v1141, %v1143
    %s1145 = scalar_lea.vmem [#allocation5], 48
    %1146 = vst [vmem:[%s1145] sm:$0xff] %v1144
    %1147 = vmatpush.msra.mxu0 %v335
    %1148 = vmatpush.msra.mxu0 %v332
    %1149 = vmatpush.msra.mxu0 %v329
    %1150 = vmatpush.msra.mxu0 %v326
    %1151 = vmatpush.msra.mxu0 %v323
    %1152 = vmatpush.msra.mxu0 %v320
    %1153 = vmatpush.msra.mxu0 %v317
    %1154 = vmatpush.msra.mxu0 %v314
    %1155 = vmatpush.msra.mxu0 %v311
    %1156 = vmatpush.msra.mxu0 %v308
    %1157 = vmatpush.msra.mxu0 %v305
    %1158 = vmatpush.msra.mxu0 %v302
    %1159 = vmatpush.msra.mxu0 %v299
    %1160 = vmatpush.msra.mxu0 %v296
    %1161 = vmatpush.msra.mxu0 %v293
    %1162 = vmatpush.msra.mxu0 %v290
    %1163 = vmatmul.f32.gmra.mxu0 %v1144
    %v1164 = vpop.f32.mrf.mxu0
    %v1165 = vadd.f32 0.0, %v1164
    %1166 = vdwg.mxu0
    %1167 = vmatpush.msra.mxu0 %v336
    %1168 = vmatpush.msra.mxu0 %v333
    %1169 = vmatpush.msra.mxu0 %v330
    %1170 = vmatpush.msra.mxu0 %v327
    %1171 = vmatpush.msra.mxu0 %v324
    %1172 = vmatpush.msra.mxu0 %v321
    %1173 = vmatpush.msra.mxu0 %v318
    %1174 = vmatpush.msra.mxu0 %v315
    %1175 = vmatpush.msra.mxu0 %v312
    %1176 = vmatpush.msra.mxu0 %v309
    %1177 = vmatpush.msra.mxu0 %v306
    %1178 = vmatpush.msra.mxu0 %v303
    %1179 = vmatpush.msra.mxu0 %v300
    %1180 = vmatpush.msra.mxu0 %v297
    %1181 = vmatpush.msra.mxu0 %v294
    %1182 = vmatpush.msra.mxu0 %v291
    %1183 = vmatmul.f32.gmra.mxu0 %v1144
    %v1184 = vpop.f32.mrf.mxu0
    %v1185 = vadd.f32 0.0, %v1184
    %1186 = vdwg.mxu0
    %1187 = vmatpush.msra.mxu0 %v337
    %1188 = vmatpush.msra.mxu0 %v334
    %1189 = vmatpush.msra.mxu0 %v331
    %1190 = vmatpush.msra.mxu0 %v328
    %1191 = vmatpush.msra.mxu0 %v325
    %1192 = vmatpush.msra.mxu0 %v322
    %1193 = vmatpush.msra.mxu0 %v319
    %1194 = vmatpush.msra.mxu0 %v316
    %1195 = vmatpush.msra.mxu0 %v313
    %1196 = vmatpush.msra.mxu0 %v310
    %1197 = vmatpush.msra.mxu0 %v307
    %1198 = vmatpush.msra.mxu0 %v304
    %1199 = vmatpush.msra.mxu0 %v301
    %1200 = vmatpush.msra.mxu0 %v298
    %1201 = vmatpush.msra.mxu0 %v295
    %1202 = vmatpush.msra.mxu0 %v292
    %1203 = vmatmul.f32.gmra.mxu0 %v1144
    %v1204 = vpop.f32.mrf.mxu0
    %v1205 = vadd.f32 0.0, %v1204
    %1206 = vdwg.mxu0
    %s1207 = smul.u32 7, 3
    %s1208 = smul.addr %s1207, 8
    %s1209 = scalar_lea.vmem [#allocation2], %s1208
    %v1210 = vld [vmem:[%s1209] sm:$0xff]
    %v1211 = vld [vmem:[%s1209 + $0x8] sm:$0xff]
    %v1212 = vld [vmem:[%s1209 + $0x10] sm:$0xff]
    %v1213 = vadd.f32 %v1210, %v1165
    %v1214 = vxor.u32 %v1213, 2147483648
    %v1215 = vmul.f32 %v1214, 1.442695
    %v1216 = vpow.pop %v1215
    %v1217 = vadd.f32 %v1216, 1.0
    %v1218 = vrcp.pop %v1217
    %v1219 = vmul.f32 %v1217, %v1218
    %v1220 = vsub.f32 1.0, %v1219
    %v1221 = vmul.f32 %v1218, %v1220
    %v1222 = vadd.f32 %v1218, %v1221
    %vm1223 = vweird.f32 %v1217
    %vm1224 = vweird.f32 %v1218
    %vm1225 = vmor %vm1223, %vm1224
    %v1226 = vsel %vm1225, %v1218, %v1222
    %v1227 = vand.u32 2147483647, %v1217
    %vm1228 = vcmp.eq.f32.partialorder %v1227, 8.507059e+37
    %v1229 = vand.u32 %v1217, 2147483648
    %v1230 = vor.u32 1.1754944e-38, %v1229
    %v1231 = vsel %vm1228, %v1230, %v1226
    %v1232 = vmul.f32 1.0, %v1231
    %v1233 = vadd.f32 %v1211, %v1185
    %v1234 = vxor.u32 %v1233, 2147483648
    %v1235 = vmul.f32 %v1234, 1.442695
    %v1236 = vpow.pop %v1235
    %v1237 = vadd.f32 %v1236, 1.0
    %v1238 = vrcp.pop %v1237
    %v1239 = vmul.f32 %v1237, %v1238
    %v1240 = vsub.f32 1.0, %v1239
    %v1241 = vmul.f32 %v1238, %v1240
    %v1242 = vadd.f32 %v1238, %v1241
    %vm1243 = vweird.f32 %v1237
    %vm1244 = vweird.f32 %v1238
    %vm1245 = vmor %vm1243, %vm1244
    %v1246 = vsel %vm1245, %v1238, %v1242
    %v1247 = vand.u32 2147483647, %v1237
    %vm1248 = vcmp.eq.f32.partialorder %v1247, 8.507059e+37
    %v1249 = vand.u32 %v1237, 2147483648
    %v1250 = vor.u32 1.1754944e-38, %v1249
    %v1251 = vsel %vm1248, %v1250, %v1246
    %v1252 = vmul.f32 1.0, %v1251
    %v1253 = vadd.f32 %v1205, %v340
    %v1254 = vmul.f32 %v1232, %v1253
    %v1255 = vadd.f32 %v1212, %v1254
    %v1256 = vtanh.pop %v1255
    %v1257 = vsub.f32 %v1144, %v1256
    %v1258 = vmul.f32 %v1252, %v1257
    %v1259 = vadd.f32 %v1256, %v1258
    %s1260 = scalar_lea.vmem [#allocation5], 56
    %1261 = vst [vmem:[%s1260] sm:$0xff] %v1259
    %1262 = vst [vmem:[#allocation3] sm:$0xff] %v1259
    // Predicated region
    $region62: #{tpu_custom_call.1} parent=1 // pred_check
      %p1263 = pneg %p90
    $region63: #{tpu_custom_call.1} parent=1 // pred_check_branch
      %1265 = sbr.rel (%p1263) target = $region65
    $region64: #{tpu_custom_call.1} parent=1 // pred_region
      %1266 = vst [vmem:[#allocation13] sm:$0xff] %v1259
      %v1267 = vld [vmem:[%s10] sm:$0xff]
      %1268 = vst [vmem:[#allocation4] sm:$0xff] %v1267
    $region65: #{tpu_custom_call.1} parent=1 // pred_fallthru
      _
    %v1269 = vld [vmem:[#allocation5] sm:$0xff]
    %v1270 = vld [vmem:[#allocation5 + $0x8] sm:$0xff]
    %v1271 = vld [vmem:[#allocation5 + $0x10] sm:$0xff]
    %v1272 = vld [vmem:[#allocation5 + $0x18] sm:$0xff]
    %v1273 = vld [vmem:[#allocation5 + $0x20] sm:$0xff]
    %v1274 = vld [vmem:[#allocation5 + $0x28] sm:$0xff]
    %v1275 = vld [vmem:[#allocation5 + $0x30] sm:$0xff]
    %v1276 = vld [vmem:[#allocation5 + $0x38] sm:$0xff]
    %v1277 = vld [vmem:[#allocation9] sm:$0xff]
    %v1278 = vld [vmem:[#allocation9 + $0x8] sm:$0xff]
    %v1279 = vld [vmem:[#allocation9 + $0x10] sm:$0xff]
    %v1280 = vld [vmem:[#allocation9 + $0x18] sm:$0xff]
    %v1281 = vld [vmem:[#allocation9 + $0x20] sm:$0xff]
    %v1282 = vld [vmem:[#allocation9 + $0x28] sm:$0xff]
    %v1283 = vld [vmem:[#allocation9 + $0x30] sm:$0xff]
    %v1284 = vld [vmem:[#allocation9 + $0x38] sm:$0xff]
    %v1285 = vld [vmem:[#allocation9 + $0x40] sm:$0xff]
    %v1286 = vld [vmem:[#allocation9 + $0x48] sm:$0xff]
    %v1287 = vld [vmem:[#allocation9 + $0x50] sm:$0xff]
    %v1288 = vld [vmem:[#allocation9 + $0x58] sm:$0xff]
    %v1289 = vld [vmem:[#allocation9 + $0x60] sm:$0xff]
    %v1290 = vld [vmem:[#allocation9 + $0x68] sm:$0xff]
    %v1291 = vld [vmem:[#allocation9 + $0x70] sm:$0xff]
    %v1292 = vld [vmem:[#allocation9 + $0x78] sm:$0xff]
    %v1293 = vld [vmem:[#allocation9 + $0x80] sm:$0xff]
    %v1294 = vld [vmem:[#allocation9 + $0x88] sm:$0xff]
    %v1295 = vld [vmem:[#allocation9 + $0x90] sm:$0xff]
    %v1296 = vld [vmem:[#allocation9 + $0x98] sm:$0xff]
    %v1297 = vld [vmem:[#allocation9 + $0xa0] sm:$0xff]
    %v1298 = vld [vmem:[#allocation9 + $0xa8] sm:$0xff]
    %v1299 = vld [vmem:[#allocation9 + $0xb0] sm:$0xff]
    %v1300 = vld [vmem:[#allocation9 + $0xb8] sm:$0xff]
    %v1301 = vld [vmem:[#allocation9 + $0xc0] sm:$0xff]
    %v1302 = vld [vmem:[#allocation9 + $0xc8] sm:$0xff]
    %v1303 = vld [vmem:[#allocation9 + $0xd0] sm:$0xff]
    %v1304 = vld [vmem:[#allocation9 + $0xd8] sm:$0xff]
    %v1305 = vld [vmem:[#allocation9 + $0xe0] sm:$0xff]
    %v1306 = vld [vmem:[#allocation9 + $0xe8] sm:$0xff]
    %v1307 = vld [vmem:[#allocation9 + $0xf0] sm:$0xff]
    %v1308 = vld [vmem:[#allocation9 + $0xf8] sm:$0xff]
    %v1309 = vld [vmem:[#allocation9 + $0x100] sm:$0xff]
    %v1310 = vld [vmem:[#allocation9 + $0x108] sm:$0xff]
    %v1311 = vld [vmem:[#allocation9 + $0x110] sm:$0xff]
    %v1312 = vld [vmem:[#allocation9 + $0x118] sm:$0xff]
    %v1313 = vld [vmem:[#allocation9 + $0x120] sm:$0xff]
    %v1314 = vld [vmem:[#allocation9 + $0x128] sm:$0xff]
    %v1315 = vld [vmem:[#allocation9 + $0x130] sm:$0xff]
    %v1316 = vld [vmem:[#allocation9 + $0x138] sm:$0xff]
    %v1317 = vld [vmem:[#allocation9 + $0x140] sm:$0xff]
    %v1318 = vld [vmem:[#allocation9 + $0x148] sm:$0xff]
    %v1319 = vld [vmem:[#allocation9 + $0x150] sm:$0xff]
    %v1320 = vld [vmem:[#allocation9 + $0x158] sm:$0xff]
    %v1321 = vld [vmem:[#allocation9 + $0x160] sm:$0xff]
    %v1322 = vld [vmem:[#allocation9 + $0x168] sm:$0xff]
    %v1323 = vld [vmem:[#allocation9 + $0x170] sm:$0xff]
    %v1324 = vld [vmem:[#allocation9 + $0x178] sm:$0xff]
    %v1325 = vld [vmem:[%s8] sm:$0x7]
    %v1327 = vperm.slane %v1325, 0
    %v1328 = vperm.slane %v1325, 1
    %v1329 = vperm.slane %v1325, 2
    %1333 = vmatpush.msra.mxu0 %v1322
    %1334 = vmatpush.msra.mxu0 %v1319
    %1335 = vmatpush.msra.mxu0 %v1316
    %1336 = vmatpush.msra.mxu0 %v1313
    %1337 = vmatpush.msra.mxu0 %v1310
    %1338 = vmatpush.msra.mxu0 %v1307
    %1339 = vmatpush.msra.mxu0 %v1304
    %1340 = vmatpush.msra.mxu0 %v1301
    %1341 = vmatpush.msra.mxu0 %v1298
    %1342 = vmatpush.msra.mxu0 %v1295
    %1343 = vmatpush.msra.mxu0 %v1292
    %1344 = vmatpush.msra.mxu0 %v1289
    %1345 = vmatpush.msra.mxu0 %v1286
    %1346 = vmatpush.msra.mxu0 %v1283
    %1347 = vmatpush.msra.mxu0 %v1280
    %1348 = vmatpush.msra.mxu0 %v1277
    %1349 = vmatmul.f32.gmra.mxu0 %v1269
    %v1350 = vpop.f32.mrf.mxu0
    %v1351 = vadd.f32 %v1327, %v1350
    %1352 = vmatmul.f32.gmra.mxu0 %v1270
    %v1353 = vpop.f32.mrf.mxu0
    %v1354 = vadd.f32 %v1327, %v1353
    %1355 = vmatmul.f32.gmra.mxu0 %v1271
    %v1356 = vpop.f32.mrf.mxu0
    %v1357 = vadd.f32 %v1327, %v1356
    %1358 = vmatmul.f32.gmra.mxu0 %v1272
    %v1359 = vpop.f32.mrf.mxu0
    %v1360 = vadd.f32 %v1327, %v1359
    %1361 = vmatmul.f32.gmra.mxu0 %v1273
    %v1362 = vpop.f32.mrf.mxu0
    %v1363 = vadd.f32 %v1327, %v1362
    %1364 = vmatmul.f32.gmra.mxu0 %v1274
    %v1365 = vpop.f32.mrf.mxu0
    %v1366 = vadd.f32 %v1327, %v1365
    %1367 = vmatmul.f32.gmra.mxu0 %v1275
    %v1368 = vpop.f32.mrf.mxu0
    %v1369 = vadd.f32 %v1327, %v1368
    %1370 = vmatmul.f32.gmra.mxu0 %v1276
    %v1371 = vpop.f32.mrf.mxu0
    %v1372 = vadd.f32 %v1327, %v1371
    %1373 = vdwg.mxu0
    %1374 = vmatpush.msra.mxu0 %v1323
    %1375 = vmatpush.msra.mxu0 %v1320
    %1376 = vmatpush.msra.mxu0 %v1317
    %1377 = vmatpush.msra.mxu0 %v1314
    %1378 = vmatpush.msra.mxu0 %v1311
    %1379 = vmatpush.msra.mxu0 %v1308
    %1380 = vmatpush.msra.mxu0 %v1305
    %1381 = vmatpush.msra.mxu0 %v1302
    %1382 = vmatpush.msra.mxu0 %v1299
    %1383 = vmatpush.msra.mxu0 %v1296
    %1384 = vmatpush.msra.mxu0 %v1293
    %1385 = vmatpush.msra.mxu0 %v1290
    %1386 = vmatpush.msra.mxu0 %v1287
    %1387 = vmatpush.msra.mxu0 %v1284
    %1388 = vmatpush.msra.mxu0 %v1281
    %1389 = vmatpush.msra.mxu0 %v1278
    %1390 = vmatmul.f32.gmra.mxu0 %v1269
    %v1391 = vpop.f32.mrf.mxu0
    %v1392 = vadd.f32 %v1328, %v1391
    %1393 = vmatmul.f32.gmra.mxu0 %v1270
    %v1394 = vpop.f32.mrf.mxu0
    %v1395 = vadd.f32 %v1328, %v1394
    %1396 = vmatmul.f32.gmra.mxu0 %v1271
    %v1397 = vpop.f32.mrf.mxu0
    %v1398 = vadd.f32 %v1328, %v1397
    %1399 = vmatmul.f32.gmra.mxu0 %v1272
    %v1400 = vpop.f32.mrf.mxu0
    %v1401 = vadd.f32 %v1328, %v1400
    %1402 = vmatmul.f32.gmra.mxu0 %v1273
    %v1403 = vpop.f32.mrf.mxu0
    %v1404 = vadd.f32 %v1328, %v1403
    %1405 = vmatmul.f32.gmra.mxu0 %v1274
    %v1406 = vpop.f32.mrf.mxu0
    %v1407 = vadd.f32 %v1328, %v1406
    %1408 = vmatmul.f32.gmra.mxu0 %v1275
    %v1409 = vpop.f32.mrf.mxu0
    %v1410 = vadd.f32 %v1328, %v1409
    %1411 = vmatmul.f32.gmra.mxu0 %v1276
    %v1412 = vpop.f32.mrf.mxu0
    %v1413 = vadd.f32 %v1328, %v1412
    %1414 = vdwg.mxu0
    %1415 = vmatpush.msra.mxu0 %v1324
    %1416 = vmatpush.msra.mxu0 %v1321
    %1417 = vmatpush.msra.mxu0 %v1318
    %1418 = vmatpush.msra.mxu0 %v1315
    %1419 = vmatpush.msra.mxu0 %v1312
    %1420 = vmatpush.msra.mxu0 %v1309
    %1421 = vmatpush.msra.mxu0 %v1306
    %1422 = vmatpush.msra.mxu0 %v1303
    %1423 = vmatpush.msra.mxu0 %v1300
    %1424 = vmatpush.msra.mxu0 %v1297
    %1425 = vmatpush.msra.mxu0 %v1294
    %1426 = vmatpush.msra.mxu0 %v1291
    %1427 = vmatpush.msra.mxu0 %v1288
    %1428 = vmatpush.msra.mxu0 %v1285
    %1429 = vmatpush.msra.mxu0 %v1282
    %1430 = vmatpush.msra.mxu0 %v1279
    %1431 = vmatmul.f32.gmra.mxu0 %v1269
    %v1432 = vpop.f32.mrf.mxu0
    %v1433 = vadd.f32 %v1329, %v1432
    %1434 = vmatmul.f32.gmra.mxu0 %v1270
    %v1435 = vpop.f32.mrf.mxu0
    %v1436 = vadd.f32 %v1329, %v1435
    %1437 = vmatmul.f32.gmra.mxu0 %v1271
    %v1438 = vpop.f32.mrf.mxu0
    %v1439 = vadd.f32 %v1329, %v1438
    %1440 = vmatmul.f32.gmra.mxu0 %v1272
    %v1441 = vpop.f32.mrf.mxu0
    %v1442 = vadd.f32 %v1329, %v1441
    %1443 = vmatmul.f32.gmra.mxu0 %v1273
    %v1444 = vpop.f32.mrf.mxu0
    %v1445 = vadd.f32 %v1329, %v1444
    %1446 = vmatmul.f32.gmra.mxu0 %v1274
    %v1447 = vpop.f32.mrf.mxu0
    %v1448 = vadd.f32 %v1329, %v1447
    %1449 = vmatmul.f32.gmra.mxu0 %v1275
    %v1450 = vpop.f32.mrf.mxu0
    %v1451 = vadd.f32 %v1329, %v1450
    %1452 = vmatmul.f32.gmra.mxu0 %v1276
    %v1453 = vpop.f32.mrf.mxu0
    %v1454 = vadd.f32 %v1329, %v1453
    %1455 = vdwg.mxu0
    %1456 = vst [vmem:[#allocation2] sm:$0xff] %v1351
    %1457 = vst [vmem:[#allocation2 + $0x8] sm:$0xff] %v1392
    %1458 = vst [vmem:[#allocation2 + $0x10] sm:$0xff] %v1433
    %1459 = vst [vmem:[#allocation2 + $0x18] sm:$0xff] %v1354
    %1460 = vst [vmem:[#allocation2 + $0x20] sm:$0xff] %v1395
    %1461 = vst [vmem:[#allocation2 + $0x28] sm:$0xff] %v1436
    %1462 = vst [vmem:[#allocation2 + $0x30] sm:$0xff] %v1357
    %1463 = vst [vmem:[#allocation2 + $0x38] sm:$0xff] %v1398
    %1464 = vst [vmem:[#allocation2 + $0x40] sm:$0xff] %v1439
    %1465 = vst [vmem:[#allocation2 + $0x48] sm:$0xff] %v1360
    %1466 = vst [vmem:[#allocation2 + $0x50] sm:$0xff] %v1401
    %1467 = vst [vmem:[#allocation2 + $0x58] sm:$0xff] %v1442
    %1468 = vst [vmem:[#allocation2 + $0x60] sm:$0xff] %v1363
    %1469 = vst [vmem:[#allocation2 + $0x68] sm:$0xff] %v1404
    %1470 = vst [vmem:[#allocation2 + $0x70] sm:$0xff] %v1445
    %1471 = vst [vmem:[#allocation2 + $0x78] sm:$0xff] %v1366
    %1472 = vst [vmem:[#allocation2 + $0x80] sm:$0xff] %v1407
    %1473 = vst [vmem:[#allocation2 + $0x88] sm:$0xff] %v1448
    %1474 = vst [vmem:[#allocation2 + $0x90] sm:$0xff] %v1369
    %1475 = vst [vmem:[#allocation2 + $0x98] sm:$0xff] %v1410
    %1476 = vst [vmem:[#allocation2 + $0xa0] sm:$0xff] %v1451
    %1477 = vst [vmem:[#allocation2 + $0xa8] sm:$0xff] %v1372
    %1478 = vst [vmem:[#allocation2 + $0xb0] sm:$0xff] %v1413
    %1479 = vst [vmem:[#allocation2 + $0xb8] sm:$0xff] %v1454
    %v1480 = vld [vmem:[#allocation11] sm:$0xff]
    %v1481 = vld [vmem:[#allocation11 + $0x8] sm:$0xff]
    %v1482 = vld [vmem:[#allocation11 + $0x10] sm:$0xff]
    %v1483 = vld [vmem:[#allocation11 + $0x18] sm:$0xff]
    %v1484 = vld [vmem:[#allocation11 + $0x20] sm:$0xff]
    %v1485 = vld [vmem:[#allocation11 + $0x28] sm:$0xff]
    %v1486 = vld [vmem:[#allocation11 + $0x30] sm:$0xff]
    %v1487 = vld [vmem:[#allocation11 + $0x38] sm:$0xff]
    %v1488 = vld [vmem:[#allocation11 + $0x40] sm:$0xff]
    %v1489 = vld [vmem:[#allocation11 + $0x48] sm:$0xff]
    %v1490 = vld [vmem:[#allocation11 + $0x50] sm:$0xff]
    %v1491 = vld [vmem:[#allocation11 + $0x58] sm:$0xff]
    %v1492 = vld [vmem:[#allocation11 + $0x60] sm:$0xff]
    %v1493 = vld [vmem:[#allocation11 + $0x68] sm:$0xff]
    %v1494 = vld [vmem:[#allocation11 + $0x70] sm:$0xff]
    %v1495 = vld [vmem:[#allocation11 + $0x78] sm:$0xff]
    %v1496 = vld [vmem:[#allocation11 + $0x80] sm:$0xff]
    %v1497 = vld [vmem:[#allocation11 + $0x88] sm:$0xff]
    %v1498 = vld [vmem:[#allocation11 + $0x90] sm:$0xff]
    %v1499 = vld [vmem:[#allocation11 + $0x98] sm:$0xff]
    %v1500 = vld [vmem:[#allocation11 + $0xa0] sm:$0xff]
    %v1501 = vld [vmem:[#allocation11 + $0xa8] sm:$0xff]
    %v1502 = vld [vmem:[#allocation11 + $0xb0] sm:$0xff]
    %v1503 = vld [vmem:[#allocation11 + $0xb8] sm:$0xff]
    %v1504 = vld [vmem:[#allocation11 + $0xc0] sm:$0xff]
    %v1505 = vld [vmem:[#allocation11 + $0xc8] sm:$0xff]
    %v1506 = vld [vmem:[#allocation11 + $0xd0] sm:$0xff]
    %v1507 = vld [vmem:[#allocation11 + $0xd8] sm:$0xff]
    %v1508 = vld [vmem:[#allocation11 + $0xe0] sm:$0xff]
    %v1509 = vld [vmem:[#allocation11 + $0xe8] sm:$0xff]
    %v1510 = vld [vmem:[#allocation11 + $0xf0] sm:$0xff]
    %v1511 = vld [vmem:[#allocation11 + $0xf8] sm:$0xff]
    %v1512 = vld [vmem:[#allocation11 + $0x100] sm:$0xff]
    %v1513 = vld [vmem:[#allocation11 + $0x108] sm:$0xff]
    %v1514 = vld [vmem:[#allocation11 + $0x110] sm:$0xff]
    %v1515 = vld [vmem:[#allocation11 + $0x118] sm:$0xff]
    %v1516 = vld [vmem:[#allocation11 + $0x120] sm:$0xff]
    %v1517 = vld [vmem:[#allocation11 + $0x128] sm:$0xff]
    %v1518 = vld [vmem:[#allocation11 + $0x130] sm:$0xff]
    %v1519 = vld [vmem:[#allocation11 + $0x138] sm:$0xff]
    %v1520 = vld [vmem:[#allocation11 + $0x140] sm:$0xff]
    %v1521 = vld [vmem:[#allocation11 + $0x148] sm:$0xff]
    %v1522 = vld [vmem:[#allocation11 + $0x150] sm:$0xff]
    %v1523 = vld [vmem:[#allocation11 + $0x158] sm:$0xff]
    %v1524 = vld [vmem:[#allocation11 + $0x160] sm:$0xff]
    %v1525 = vld [vmem:[#allocation11 + $0x168] sm:$0xff]
    %v1526 = vld [vmem:[#allocation11 + $0x170] sm:$0xff]
    %v1527 = vld [vmem:[#allocation11 + $0x178] sm:$0xff]
    %v1528 = vld [vmem:[%s9] sm:$0x1]
    %v1530 = vperm.slane %v1528, 0
    %v1532 = vld [vmem:[#allocation4] sm:$0xff]
    %1533 = vmatpush.msra.mxu0 %v1525
    %1534 = vmatpush.msra.mxu0 %v1522
    %1535 = vmatpush.msra.mxu0 %v1519
    %1536 = vmatpush.msra.mxu0 %v1516
    %1537 = vmatpush.msra.mxu0 %v1513
    %1538 = vmatpush.msra.mxu0 %v1510
    %1539 = vmatpush.msra.mxu0 %v1507
    %1540 = vmatpush.msra.mxu0 %v1504
    %1541 = vmatpush.msra.mxu0 %v1501
    %1542 = vmatpush.msra.mxu0 %v1498
    %1543 = vmatpush.msra.mxu0 %v1495
    %1544 = vmatpush.msra.mxu0 %v1492
    %1545 = vmatpush.msra.mxu0 %v1489
    %1546 = vmatpush.msra.mxu0 %v1486
    %1547 = vmatpush.msra.mxu0 %v1483
    %1548 = vmatpush.msra.mxu0 %v1480
    %1549 = vmatmul.f32.gmra.mxu0 %v1532
    %v1550 = vpop.f32.mrf.mxu0
    %v1551 = vadd.f32 0.0, %v1550
    %1552 = vdwg.mxu0
    %1553 = vmatpush.msra.mxu0 %v1526
    %1554 = vmatpush.msra.mxu0 %v1523
    %1555 = vmatpush.msra.mxu0 %v1520
    %1556 = vmatpush.msra.mxu0 %v1517
    %1557 = vmatpush.msra.mxu0 %v1514
    %1558 = vmatpush.msra.mxu0 %v1511
    %1559 = vmatpush.msra.mxu0 %v1508
    %1560 = vmatpush.msra.mxu0 %v1505
    %1561 = vmatpush.msra.mxu0 %v1502
    %1562 = vmatpush.msra.mxu0 %v1499
    %1563 = vmatpush.msra.mxu0 %v1496
    %1564 = vmatpush.msra.mxu0 %v1493
    %1565 = vmatpush.msra.mxu0 %v1490
    %1566 = vmatpush.msra.mxu0 %v1487
    %1567 = vmatpush.msra.mxu0 %v1484
    %1568 = vmatpush.msra.mxu0 %v1481
    %1569 = vmatmul.f32.gmra.mxu0 %v1532
    %v1570 = vpop.f32.mrf.mxu0
    %v1571 = vadd.f32 0.0, %v1570
    %1572 = vdwg.mxu0
    %1573 = vmatpush.msra.mxu0 %v1527
    %1574 = vmatpush.msra.mxu0 %v1524
    %1575 = vmatpush.msra.mxu0 %v1521
    %1576 = vmatpush.msra.mxu0 %v1518
    %1577 = vmatpush.msra.mxu0 %v1515
    %1578 = vmatpush.msra.mxu0 %v1512
    %1579 = vmatpush.msra.mxu0 %v1509
    %1580 = vmatpush.msra.mxu0 %v1506
    %1581 = vmatpush.msra.mxu0 %v1503
    %1582 = vmatpush.msra.mxu0 %v1500
    %1583 = vmatpush.msra.mxu0 %v1497
    %1584 = vmatpush.msra.mxu0 %v1494
    %1585 = vmatpush.msra.mxu0 %v1491
    %1586 = vmatpush.msra.mxu0 %v1488
    %1587 = vmatpush.msra.mxu0 %v1485
    %1588 = vmatpush.msra.mxu0 %v1482
    %1589 = vmatmul.f32.gmra.mxu0 %v1532
    %v1590 = vpop.f32.mrf.mxu0
    %v1591 = vadd.f32 0.0, %v1590
    %1592 = vdwg.mxu0
    %v1593 = vld [vmem:[%s405] sm:$0xff]
    %v1594 = vld [vmem:[%s405 + $0x8] sm:$0xff]
    %v1595 = vld [vmem:[%s405 + $0x10] sm:$0xff]
    %v1596 = vadd.f32 %v1593, %v1551
    %v1597 = vxor.u32 %v1596, 2147483648
    %v1598 = vmul.f32 %v1597, 1.442695
    %v1599 = vpow.pop %v1598
    %v1600 = vadd.f32 %v1599, 1.0
    %v1601 = vrcp.pop %v1600
    %v1602 = vmul.f32 %v1600, %v1601
    %v1603 = vsub.f32 1.0, %v1602
    %v1604 = vmul.f32 %v1601, %v1603
    %v1605 = vadd.f32 %v1601, %v1604
    %vm1606 = vweird.f32 %v1600
    %vm1607 = vweird.f32 %v1601
    %vm1608 = vmor %vm1606, %vm1607
    %v1609 = vsel %vm1608, %v1601, %v1605
    %v1610 = vand.u32 2147483647, %v1600
    %vm1611 = vcmp.eq.f32.partialorder %v1610, 8.507059e+37
    %v1612 = vand.u32 %v1600, 2147483648
    %v1613 = vor.u32 1.1754944e-38, %v1612
    %v1614 = vsel %vm1611, %v1613, %v1609
    %v1615 = vmul.f32 1.0, %v1614
    %v1616 = vadd.f32 %v1594, %v1571
    %v1617 = vxor.u32 %v1616, 2147483648
    %v1618 = vmul.f32 %v1617, 1.442695
    %v1619 = vpow.pop %v1618
    %v1620 = vadd.f32 %v1619, 1.0
    %v1621 = vrcp.pop %v1620
    %v1622 = vmul.f32 %v1620, %v1621
    %v1623 = vsub.f32 1.0, %v1622
    %v1624 = vmul.f32 %v1621, %v1623
    %v1625 = vadd.f32 %v1621, %v1624
    %vm1626 = vweird.f32 %v1620
    %vm1627 = vweird.f32 %v1621
    %vm1628 = vmor %vm1626, %vm1627
    %v1629 = vsel %vm1628, %v1621, %v1625
    %v1630 = vand.u32 2147483647, %v1620
    %vm1631 = vcmp.eq.f32.partialorder %v1630, 8.507059e+37
    %v1632 = vand.u32 %v1620, 2147483648
    %v1633 = vor.u32 1.1754944e-38, %v1632
    %v1634 = vsel %vm1631, %v1633, %v1629
    %v1635 = vmul.f32 1.0, %v1634
    %v1636 = vadd.f32 %v1591, %v1530
    %v1637 = vmul.f32 %v1615, %v1636
    %v1638 = vadd.f32 %v1595, %v1637
    %v1639 = vtanh.pop %v1638
    %v1640 = vsub.f32 %v1532, %v1639
    %v1641 = vmul.f32 %v1635, %v1640
    %v1642 = vadd.f32 %v1639, %v1641
    %1643 = vst [vmem:[#allocation12] sm:$0xff] %v1642
    %1644 = vmatpush.msra.mxu0 %v1525
    %1645 = vmatpush.msra.mxu0 %v1522
    %1646 = vmatpush.msra.mxu0 %v1519
    %1647 = vmatpush.msra.mxu0 %v1516
    %1648 = vmatpush.msra.mxu0 %v1513
    %1649 = vmatpush.msra.mxu0 %v1510
    %1650 = vmatpush.msra.mxu0 %v1507
    %1651 = vmatpush.msra.mxu0 %v1504
    %1652 = vmatpush.msra.mxu0 %v1501
    %1653 = vmatpush.msra.mxu0 %v1498
    %1654 = vmatpush.msra.mxu0 %v1495
    %1655 = vmatpush.msra.mxu0 %v1492
    %1656 = vmatpush.msra.mxu0 %v1489
    %1657 = vmatpush.msra.mxu0 %v1486
    %1658 = vmatpush.msra.mxu0 %v1483
    %1659 = vmatpush.msra.mxu0 %v1480
    %1660 = vmatmul.f32.gmra.mxu0 %v1642
    %v1661 = vpop.f32.mrf.mxu0
    %v1662 = vadd.f32 0.0, %v1661
    %1663 = vdwg.mxu0
    %1664 = vmatpush.msra.mxu0 %v1526
    %1665 = vmatpush.msra.mxu0 %v1523
    %1666 = vmatpush.msra.mxu0 %v1520
    %1667 = vmatpush.msra.mxu0 %v1517
    %1668 = vmatpush.msra.mxu0 %v1514
    %1669 = vmatpush.msra.mxu0 %v1511
    %1670 = vmatpush.msra.mxu0 %v1508
    %1671 = vmatpush.msra.mxu0 %v1505
    %1672 = vmatpush.msra.mxu0 %v1502
    %1673 = vmatpush.msra.mxu0 %v1499
    %1674 = vmatpush.msra.mxu0 %v1496
    %1675 = vmatpush.msra.mxu0 %v1493
    %1676 = vmatpush.msra.mxu0 %v1490
    %1677 = vmatpush.msra.mxu0 %v1487
    %1678 = vmatpush.msra.mxu0 %v1484
    %1679 = vmatpush.msra.mxu0 %v1481
    %1680 = vmatmul.f32.gmra.mxu0 %v1642
    %v1681 = vpop.f32.mrf.mxu0
    %v1682 = vadd.f32 0.0, %v1681
    %1683 = vdwg.mxu0
    %1684 = vmatpush.msra.mxu0 %v1527
    %1685 = vmatpush.msra.mxu0 %v1524
    %1686 = vmatpush.msra.mxu0 %v1521
    %1687 = vmatpush.msra.mxu0 %v1518
    %1688 = vmatpush.msra.mxu0 %v1515
    %1689 = vmatpush.msra.mxu0 %v1512
    %1690 = vmatpush.msra.mxu0 %v1509
    %1691 = vmatpush.msra.mxu0 %v1506
    %1692 = vmatpush.msra.mxu0 %v1503
    %1693 = vmatpush.msra.mxu0 %v1500
    %1694 = vmatpush.msra.mxu0 %v1497
    %1695 = vmatpush.msra.mxu0 %v1494
    %1696 = vmatpush.msra.mxu0 %v1491
    %1697 = vmatpush.msra.mxu0 %v1488
    %1698 = vmatpush.msra.mxu0 %v1485
    %1699 = vmatpush.msra.mxu0 %v1482
    %1700 = vmatmul.f32.gmra.mxu0 %v1642
    %v1701 = vpop.f32.mrf.mxu0
    %v1702 = vadd.f32 0.0, %v1701
    %1703 = vdwg.mxu0
    %v1704 = vld [vmem:[%s519] sm:$0xff]
    %v1705 = vld [vmem:[%s519 + $0x8] sm:$0xff]
    %v1706 = vld [vmem:[%s519 + $0x10] sm:$0xff]
    %v1707 = vadd.f32 %v1704, %v1662
    %v1708 = vxor.u32 %v1707, 2147483648
    %v1709 = vmul.f32 %v1708, 1.442695
    %v1710 = vpow.pop %v1709
    %v1711 = vadd.f32 %v1710, 1.0
    %v1712 = vrcp.pop %v1711
    %v1713 = vmul.f32 %v1711, %v1712
    %v1714 = vsub.f32 1.0, %v1713
    %v1715 = vmul.f32 %v1712, %v1714
    %v1716 = vadd.f32 %v1712, %v1715
    %vm1717 = vweird.f32 %v1711
    %vm1718 = vweird.f32 %v1712
    %vm1719 = vmor %vm1717, %vm1718
    %v1720 = vsel %vm1719, %v1712, %v1716
    %v1721 = vand.u32 2147483647, %v1711
    %vm1722 = vcmp.eq.f32.partialorder %v1721, 8.507059e+37
    %v1723 = vand.u32 %v1711, 2147483648
    %v1724 = vor.u32 1.1754944e-38, %v1723
    %v1725 = vsel %vm1722, %v1724, %v1720
    %v1726 = vmul.f32 1.0, %v1725
    %v1727 = vadd.f32 %v1705, %v1682
    %v1728 = vxor.u32 %v1727, 2147483648
    %v1729 = vmul.f32 %v1728, 1.442695
    %v1730 = vpow.pop %v1729
    %v1731 = vadd.f32 %v1730, 1.0
    %v1732 = vrcp.pop %v1731
    %v1733 = vmul.f32 %v1731, %v1732
    %v1734 = vsub.f32 1.0, %v1733
    %v1735 = vmul.f32 %v1732, %v1734
    %v1736 = vadd.f32 %v1732, %v1735
    %vm1737 = vweird.f32 %v1731
    %vm1738 = vweird.f32 %v1732
    %vm1739 = vmor %vm1737, %vm1738
    %v1740 = vsel %vm1739, %v1732, %v1736
    %v1741 = vand.u32 2147483647, %v1731
    %vm1742 = vcmp.eq.f32.partialorder %v1741, 8.507059e+37
    %v1743 = vand.u32 %v1731, 2147483648
    %v1744 = vor.u32 1.1754944e-38, %v1743
    %v1745 = vsel %vm1742, %v1744, %v1740
    %v1746 = vmul.f32 1.0, %v1745
    %v1747 = vadd.f32 %v1702, %v1530
    %v1748 = vmul.f32 %v1726, %v1747
    %v1749 = vadd.f32 %v1706, %v1748
    %v1750 = vtanh.pop %v1749
    %v1751 = vsub.f32 %v1642, %v1750
    %v1752 = vmul.f32 %v1746, %v1751
    %v1753 = vadd.f32 %v1750, %v1752
    %s1754 = scalar_lea.vmem [#allocation12], 8
    %1755 = vst [vmem:[%s1754] sm:$0xff] %v1753
    %1756 = vmatpush.msra.mxu0 %v1525
    %1757 = vmatpush.msra.mxu0 %v1522
    %1758 = vmatpush.msra.mxu0 %v1519
    %1759 = vmatpush.msra.mxu0 %v1516
    %1760 = vmatpush.msra.mxu0 %v1513
    %1761 = vmatpush.msra.mxu0 %v1510
    %1762 = vmatpush.msra.mxu0 %v1507
    %1763 = vmatpush.msra.mxu0 %v1504
    %1764 = vmatpush.msra.mxu0 %v1501
    %1765 = vmatpush.msra.mxu0 %v1498
    %1766 = vmatpush.msra.mxu0 %v1495
    %1767 = vmatpush.msra.mxu0 %v1492
    %1768 = vmatpush.msra.mxu0 %v1489
    %1769 = vmatpush.msra.mxu0 %v1486
    %1770 = vmatpush.msra.mxu0 %v1483
    %1771 = vmatpush.msra.mxu0 %v1480
    %1772 = vmatmul.f32.gmra.mxu0 %v1753
    %v1773 = vpop.f32.mrf.mxu0
    %v1774 = vadd.f32 0.0, %v1773
    %1775 = vdwg.mxu0
    %1776 = vmatpush.msra.mxu0 %v1526
    %1777 = vmatpush.msra.mxu0 %v1523
    %1778 = vmatpush.msra.mxu0 %v1520
    %1779 = vmatpush.msra.mxu0 %v1517
    %1780 = vmatpush.msra.mxu0 %v1514
    %1781 = vmatpush.msra.mxu0 %v1511
    %1782 = vmatpush.msra.mxu0 %v1508
    %1783 = vmatpush.msra.mxu0 %v1505
    %1784 = vmatpush.msra.mxu0 %v1502
    %1785 = vmatpush.msra.mxu0 %v1499
    %1786 = vmatpush.msra.mxu0 %v1496
    %1787 = vmatpush.msra.mxu0 %v1493
    %1788 = vmatpush.msra.mxu0 %v1490
    %1789 = vmatpush.msra.mxu0 %v1487
    %1790 = vmatpush.msra.mxu0 %v1484
    %1791 = vmatpush.msra.mxu0 %v1481
    %1792 = vmatmul.f32.gmra.mxu0 %v1753
    %v1793 = vpop.f32.mrf.mxu0
    %v1794 = vadd.f32 0.0, %v1793
    %1795 = vdwg.mxu0
    %1796 = vmatpush.msra.mxu0 %v1527
    %1797 = vmatpush.msra.mxu0 %v1524
    %1798 = vmatpush.msra.mxu0 %v1521
    %1799 = vmatpush.msra.mxu0 %v1518
    %1800 = vmatpush.msra.mxu0 %v1515
    %1801 = vmatpush.msra.mxu0 %v1512
    %1802 = vmatpush.msra.mxu0 %v1509
    %1803 = vmatpush.msra.mxu0 %v1506
    %1804 = vmatpush.msra.mxu0 %v1503
    %1805 = vmatpush.msra.mxu0 %v1500
    %1806 = vmatpush.msra.mxu0 %v1497
    %1807 = vmatpush.msra.mxu0 %v1494
    %1808 = vmatpush.msra.mxu0 %v1491
    %1809 = vmatpush.msra.mxu0 %v1488
    %1810 = vmatpush.msra.mxu0 %v1485
    %1811 = vmatpush.msra.mxu0 %v1482
    %1812 = vmatmul.f32.gmra.mxu0 %v1753
    %v1813 = vpop.f32.mrf.mxu0
    %v1814 = vadd.f32 0.0, %v1813
    %1815 = vdwg.mxu0
    %v1816 = vld [vmem:[%s634] sm:$0xff]
    %v1817 = vld [vmem:[%s634 + $0x8] sm:$0xff]
    %v1818 = vld [vmem:[%s634 + $0x10] sm:$0xff]
    %v1819 = vadd.f32 %v1816, %v1774
    %v1820 = vxor.u32 %v1819, 2147483648
    %v1821 = vmul.f32 %v1820, 1.442695
    %v1822 = vpow.pop %v1821
    %v1823 = vadd.f32 %v1822, 1.0
    %v1824 = vrcp.pop %v1823
    %v1825 = vmul.f32 %v1823, %v1824
    %v1826 = vsub.f32 1.0, %v1825
    %v1827 = vmul.f32 %v1824, %v1826
    %v1828 = vadd.f32 %v1824, %v1827
    %vm1829 = vweird.f32 %v1823
    %vm1830 = vweird.f32 %v1824
    %vm1831 = vmor %vm1829, %vm1830
    %v1832 = vsel %vm1831, %v1824, %v1828
    %v1833 = vand.u32 2147483647, %v1823
    %vm1834 = vcmp.eq.f32.partialorder %v1833, 8.507059e+37
    %v1835 = vand.u32 %v1823, 2147483648
    %v1836 = vor.u32 1.1754944e-38, %v1835
    %v1837 = vsel %vm1834, %v1836, %v1832
    %v1838 = vmul.f32 1.0, %v1837
    %v1839 = vadd.f32 %v1817, %v1794
    %v1840 = vxor.u32 %v1839, 2147483648
    %v1841 = vmul.f32 %v1840, 1.442695
    %v1842 = vpow.pop %v1841
    %v1843 = vadd.f32 %v1842, 1.0
    %v1844 = vrcp.pop %v1843
    %v1845 = vmul.f32 %v1843, %v1844
    %v1846 = vsub.f32 1.0, %v1845
    %v1847 = vmul.f32 %v1844, %v1846
    %v1848 = vadd.f32 %v1844, %v1847
    %vm1849 = vweird.f32 %v1843
    %vm1850 = vweird.f32 %v1844
    %vm1851 = vmor %vm1849, %vm1850
    %v1852 = vsel %vm1851, %v1844, %v1848
    %v1853 = vand.u32 2147483647, %v1843
    %vm1854 = vcmp.eq.f32.partialorder %v1853, 8.507059e+37
    %v1855 = vand.u32 %v1843, 2147483648
    %v1856 = vor.u32 1.1754944e-38, %v1855
    %v1857 = vsel %vm1854, %v1856, %v1852
    %v1858 = vmul.f32 1.0, %v1857
    %v1859 = vadd.f32 %v1814, %v1530
    %v1860 = vmul.f32 %v1838, %v1859
    %v1861 = vadd.f32 %v1818, %v1860
    %v1862 = vtanh.pop %v1861
    %v1863 = vsub.f32 %v1753, %v1862
    %v1864 = vmul.f32 %v1858, %v1863
    %v1865 = vadd.f32 %v1862, %v1864
    %s1866 = scalar_lea.vmem [#allocation12], 16
    %1867 = vst [vmem:[%s1866] sm:$0xff] %v1865
    %1868 = vmatpush.msra.mxu0 %v1525
    %1869 = vmatpush.msra.mxu0 %v1522
    %1870 = vmatpush.msra.mxu0 %v1519
    %1871 = vmatpush.msra.mxu0 %v1516
    %1872 = vmatpush.msra.mxu0 %v1513
    %1873 = vmatpush.msra.mxu0 %v1510
    %1874 = vmatpush.msra.mxu0 %v1507
    %1875 = vmatpush.msra.mxu0 %v1504
    %1876 = vmatpush.msra.mxu0 %v1501
    %1877 = vmatpush.msra.mxu0 %v1498
    %1878 = vmatpush.msra.mxu0 %v1495
    %1879 = vmatpush.msra.mxu0 %v1492
    %1880 = vmatpush.msra.mxu0 %v1489
    %1881 = vmatpush.msra.mxu0 %v1486
    %1882 = vmatpush.msra.mxu0 %v1483
    %1883 = vmatpush.msra.mxu0 %v1480
    %1884 = vmatmul.f32.gmra.mxu0 %v1865
    %v1885 = vpop.f32.mrf.mxu0
    %v1886 = vadd.f32 0.0, %v1885
    %1887 = vdwg.mxu0
    %1888 = vmatpush.msra.mxu0 %v1526
    %1889 = vmatpush.msra.mxu0 %v1523
    %1890 = vmatpush.msra.mxu0 %v1520
    %1891 = vmatpush.msra.mxu0 %v1517
    %1892 = vmatpush.msra.mxu0 %v1514
    %1893 = vmatpush.msra.mxu0 %v1511
    %1894 = vmatpush.msra.mxu0 %v1508
    %1895 = vmatpush.msra.mxu0 %v1505
    %1896 = vmatpush.msra.mxu0 %v1502
    %1897 = vmatpush.msra.mxu0 %v1499
    %1898 = vmatpush.msra.mxu0 %v1496
    %1899 = vmatpush.msra.mxu0 %v1493
    %1900 = vmatpush.msra.mxu0 %v1490
    %1901 = vmatpush.msra.mxu0 %v1487
    %1902 = vmatpush.msra.mxu0 %v1484
    %1903 = vmatpush.msra.mxu0 %v1481
    %1904 = vmatmul.f32.gmra.mxu0 %v1865
    %v1905 = vpop.f32.mrf.mxu0
    %v1906 = vadd.f32 0.0, %v1905
    %1907 = vdwg.mxu0
    %1908 = vmatpush.msra.mxu0 %v1527
    %1909 = vmatpush.msra.mxu0 %v1524
    %1910 = vmatpush.msra.mxu0 %v1521
    %1911 = vmatpush.msra.mxu0 %v1518
    %1912 = vmatpush.msra.mxu0 %v1515
    %1913 = vmatpush.msra.mxu0 %v1512
    %1914 = vmatpush.msra.mxu0 %v1509
    %1915 = vmatpush.msra.mxu0 %v1506
    %1916 = vmatpush.msra.mxu0 %v1503
    %1917 = vmatpush.msra.mxu0 %v1500
    %1918 = vmatpush.msra.mxu0 %v1497
    %1919 = vmatpush.msra.mxu0 %v1494
    %1920 = vmatpush.msra.mxu0 %v1491
    %1921 = vmatpush.msra.mxu0 %v1488
    %1922 = vmatpush.msra.mxu0 %v1485
    %1923 = vmatpush.msra.mxu0 %v1482
    %1924 = vmatmul.f32.gmra.mxu0 %v1865
    %v1925 = vpop.f32.mrf.mxu0
    %v1926 = vadd.f32 0.0, %v1925
    %1927 = vdwg.mxu0
    %v1928 = vld [vmem:[%s749] sm:$0xff]
    %v1929 = vld [vmem:[%s749 + $0x8] sm:$0xff]
    %v1930 = vld [vmem:[%s749 + $0x10] sm:$0xff]
    %v1931 = vadd.f32 %v1928, %v1886
    %v1932 = vxor.u32 %v1931, 2147483648
    %v1933 = vmul.f32 %v1932, 1.442695
    %v1934 = vpow.pop %v1933
    %v1935 = vadd.f32 %v1934, 1.0
    %v1936 = vrcp.pop %v1935
    %v1937 = vmul.f32 %v1935, %v1936
    %v1938 = vsub.f32 1.0, %v1937
    %v1939 = vmul.f32 %v1936, %v1938
    %v1940 = vadd.f32 %v1936, %v1939
    %vm1941 = vweird.f32 %v1935
    %vm1942 = vweird.f32 %v1936
    %vm1943 = vmor %vm1941, %vm1942
    %v1944 = vsel %vm1943, %v1936, %v1940
    %v1945 = vand.u32 2147483647, %v1935
    %vm1946 = vcmp.eq.f32.partialorder %v1945, 8.507059e+37
    %v1947 = vand.u32 %v1935, 2147483648
    %v1948 = vor.u32 1.1754944e-38, %v1947
    %v1949 = vsel %vm1946, %v1948, %v1944
    %v1950 = vmul.f32 1.0, %v1949
    %v1951 = vadd.f32 %v1929, %v1906
    %v1952 = vxor.u32 %v1951, 2147483648
    %v1953 = vmul.f32 %v1952, 1.442695
    %v1954 = vpow.pop %v1953
    %v1955 = vadd.f32 %v1954, 1.0
    %v1956 = vrcp.pop %v1955
    %v1957 = vmul.f32 %v1955, %v1956
    %v1958 = vsub.f32 1.0, %v1957
    %v1959 = vmul.f32 %v1956, %v1958
    %v1960 = vadd.f32 %v1956, %v1959
    %vm1961 = vweird.f32 %v1955
    %vm1962 = vweird.f32 %v1956
    %vm1963 = vmor %vm1961, %vm1962
    %v1964 = vsel %vm1963, %v1956, %v1960
    %v1965 = vand.u32 2147483647, %v1955
    %vm1966 = vcmp.eq.f32.partialorder %v1965, 8.507059e+37
    %v1967 = vand.u32 %v1955, 2147483648
    %v1968 = vor.u32 1.1754944e-38, %v1967
    %v1969 = vsel %vm1966, %v1968, %v1964
    %v1970 = vmul.f32 1.0, %v1969
    %v1971 = vadd.f32 %v1926, %v1530
    %v1972 = vmul.f32 %v1950, %v1971
    %v1973 = vadd.f32 %v1930, %v1972
    %v1974 = vtanh.pop %v1973
    %v1975 = vsub.f32 %v1865, %v1974
    %v1976 = vmul.f32 %v1970, %v1975
    %v1977 = vadd.f32 %v1974, %v1976
    %s1978 = scalar_lea.vmem [#allocation12], 24
    %1979 = vst [vmem:[%s1978] sm:$0xff] %v1977
    %1980 = vmatpush.msra.mxu0 %v1525
    %1981 = vmatpush.msra.mxu0 %v1522
    %1982 = vmatpush.msra.mxu0 %v1519
    %1983 = vmatpush.msra.mxu0 %v1516
    %1984 = vmatpush.msra.mxu0 %v1513
    %1985 = vmatpush.msra.mxu0 %v1510
    %1986 = vmatpush.msra.mxu0 %v1507
    %1987 = vmatpush.msra.mxu0 %v1504
    %1988 = vmatpush.msra.mxu0 %v1501
    %1989 = vmatpush.msra.mxu0 %v1498
    %1990 = vmatpush.msra.mxu0 %v1495
    %1991 = vmatpush.msra.mxu0 %v1492
    %1992 = vmatpush.msra.mxu0 %v1489
    %1993 = vmatpush.msra.mxu0 %v1486
    %1994 = vmatpush.msra.mxu0 %v1483
    %1995 = vmatpush.msra.mxu0 %v1480
    %1996 = vmatmul.f32.gmra.mxu0 %v1977
    %v1997 = vpop.f32.mrf.mxu0
    %v1998 = vadd.f32 0.0, %v1997
    %1999 = vdwg.mxu0
    %2000 = vmatpush.msra.mxu0 %v1526
    %2001 = vmatpush.msra.mxu0 %v1523
    %2002 = vmatpush.msra.mxu0 %v1520
    %2003 = vmatpush.msra.mxu0 %v1517
    %2004 = vmatpush.msra.mxu0 %v1514
    %2005 = vmatpush.msra.mxu0 %v1511
    %2006 = vmatpush.msra.mxu0 %v1508
    %2007 = vmatpush.msra.mxu0 %v1505
    %2008 = vmatpush.msra.mxu0 %v1502
    %2009 = vmatpush.msra.mxu0 %v1499
    %2010 = vmatpush.msra.mxu0 %v1496
    %2011 = vmatpush.msra.mxu0 %v1493
    %2012 = vmatpush.msra.mxu0 %v1490
    %2013 = vmatpush.msra.mxu0 %v1487
    %2014 = vmatpush.msra.mxu0 %v1484
    %2015 = vmatpush.msra.mxu0 %v1481
    %2016 = vmatmul.f32.gmra.mxu0 %v1977
    %v2017 = vpop.f32.mrf.mxu0
    %v2018 = vadd.f32 0.0, %v2017
    %2019 = vdwg.mxu0
    %2020 = vmatpush.msra.mxu0 %v1527
    %2021 = vmatpush.msra.mxu0 %v1524
    %2022 = vmatpush.msra.mxu0 %v1521
    %2023 = vmatpush.msra.mxu0 %v1518
    %2024 = vmatpush.msra.mxu0 %v1515
    %2025 = vmatpush.msra.mxu0 %v1512
    %2026 = vmatpush.msra.mxu0 %v1509
    %2027 = vmatpush.msra.mxu0 %v1506
    %2028 = vmatpush.msra.mxu0 %v1503
    %2029 = vmatpush.msra.mxu0 %v1500
    %2030 = vmatpush.msra.mxu0 %v1497
    %2031 = vmatpush.msra.mxu0 %v1494
    %2032 = vmatpush.msra.mxu0 %v1491
    %2033 = vmatpush.msra.mxu0 %v1488
    %2034 = vmatpush.msra.mxu0 %v1485
    %2035 = vmatpush.msra.mxu0 %v1482
    %2036 = vmatmul.f32.gmra.mxu0 %v1977
    %v2037 = vpop.f32.mrf.mxu0
    %v2038 = vadd.f32 0.0, %v2037
    %2039 = vdwg.mxu0
    %v2040 = vld [vmem:[%s864] sm:$0xff]
    %v2041 = vld [vmem:[%s864 + $0x8] sm:$0xff]
    %v2042 = vld [vmem:[%s864 + $0x10] sm:$0xff]
    %v2043 = vadd.f32 %v2040, %v1998
    %v2044 = vxor.u32 %v2043, 2147483648
    %v2045 = vmul.f32 %v2044, 1.442695
    %v2046 = vpow.pop %v2045
    %v2047 = vadd.f32 %v2046, 1.0
    %v2048 = vrcp.pop %v2047
    %v2049 = vmul.f32 %v2047, %v2048
    %v2050 = vsub.f32 1.0, %v2049
    %v2051 = vmul.f32 %v2048, %v2050
    %v2052 = vadd.f32 %v2048, %v2051
    %vm2053 = vweird.f32 %v2047
    %vm2054 = vweird.f32 %v2048
    %vm2055 = vmor %vm2053, %vm2054
    %v2056 = vsel %vm2055, %v2048, %v2052
    %v2057 = vand.u32 2147483647, %v2047
    %vm2058 = vcmp.eq.f32.partialorder %v2057, 8.507059e+37
    %v2059 = vand.u32 %v2047, 2147483648
    %v2060 = vor.u32 1.1754944e-38, %v2059
    %v2061 = vsel %vm2058, %v2060, %v2056
    %v2062 = vmul.f32 1.0, %v2061
    %v2063 = vadd.f32 %v2041, %v2018
    %v2064 = vxor.u32 %v2063, 2147483648
    %v2065 = vmul.f32 %v2064, 1.442695
    %v2066 = vpow.pop %v2065
    %v2067 = vadd.f32 %v2066, 1.0
    %v2068 = vrcp.pop %v2067
    %v2069 = vmul.f32 %v2067, %v2068
    %v2070 = vsub.f32 1.0, %v2069
    %v2071 = vmul.f32 %v2068, %v2070
    %v2072 = vadd.f32 %v2068, %v2071
    %vm2073 = vweird.f32 %v2067
    %vm2074 = vweird.f32 %v2068
    %vm2075 = vmor %vm2073, %vm2074
    %v2076 = vsel %vm2075, %v2068, %v2072
    %v2077 = vand.u32 2147483647, %v2067
    %vm2078 = vcmp.eq.f32.partialorder %v2077, 8.507059e+37
    %v2079 = vand.u32 %v2067, 2147483648
    %v2080 = vor.u32 1.1754944e-38, %v2079
    %v2081 = vsel %vm2078, %v2080, %v2076
    %v2082 = vmul.f32 1.0, %v2081
    %v2083 = vadd.f32 %v2038, %v1530
    %v2084 = vmul.f32 %v2062, %v2083
    %v2085 = vadd.f32 %v2042, %v2084
    %v2086 = vtanh.pop %v2085
    %v2087 = vsub.f32 %v1977, %v2086
    %v2088 = vmul.f32 %v2082, %v2087
    %v2089 = vadd.f32 %v2086, %v2088
    %s2090 = scalar_lea.vmem [#allocation12], 32
    %2091 = vst [vmem:[%s2090] sm:$0xff] %v2089
    %2092 = vmatpush.msra.mxu0 %v1525
    %2093 = vmatpush.msra.mxu0 %v1522
    %2094 = vmatpush.msra.mxu0 %v1519
    %2095 = vmatpush.msra.mxu0 %v1516
    %2096 = vmatpush.msra.mxu0 %v1513
    %2097 = vmatpush.msra.mxu0 %v1510
    %2098 = vmatpush.msra.mxu0 %v1507
    %2099 = vmatpush.msra.mxu0 %v1504
    %2100 = vmatpush.msra.mxu0 %v1501
    %2101 = vmatpush.msra.mxu0 %v1498
    %2102 = vmatpush.msra.mxu0 %v1495
    %2103 = vmatpush.msra.mxu0 %v1492
    %2104 = vmatpush.msra.mxu0 %v1489
    %2105 = vmatpush.msra.mxu0 %v1486
    %2106 = vmatpush.msra.mxu0 %v1483
    %2107 = vmatpush.msra.mxu0 %v1480
    %2108 = vmatmul.f32.gmra.mxu0 %v2089
    %v2109 = vpop.f32.mrf.mxu0
    %v2110 = vadd.f32 0.0, %v2109
    %2111 = vdwg.mxu0
    %2112 = vmatpush.msra.mxu0 %v1526
    %2113 = vmatpush.msra.mxu0 %v1523
    %2114 = vmatpush.msra.mxu0 %v1520
    %2115 = vmatpush.msra.mxu0 %v1517
    %2116 = vmatpush.msra.mxu0 %v1514
    %2117 = vmatpush.msra.mxu0 %v1511
    %2118 = vmatpush.msra.mxu0 %v1508
    %2119 = vmatpush.msra.mxu0 %v1505
    %2120 = vmatpush.msra.mxu0 %v1502
    %2121 = vmatpush.msra.mxu0 %v1499
    %2122 = vmatpush.msra.mxu0 %v1496
    %2123 = vmatpush.msra.mxu0 %v1493
    %2124 = vmatpush.msra.mxu0 %v1490
    %2125 = vmatpush.msra.mxu0 %v1487
    %2126 = vmatpush.msra.mxu0 %v1484
    %2127 = vmatpush.msra.mxu0 %v1481
    %2128 = vmatmul.f32.gmra.mxu0 %v2089
    %v2129 = vpop.f32.mrf.mxu0
    %v2130 = vadd.f32 0.0, %v2129
    %2131 = vdwg.mxu0
    %2132 = vmatpush.msra.mxu0 %v1527
    %2133 = vmatpush.msra.mxu0 %v1524
    %2134 = vmatpush.msra.mxu0 %v1521
    %2135 = vmatpush.msra.mxu0 %v1518
    %2136 = vmatpush.msra.mxu0 %v1515
    %2137 = vmatpush.msra.mxu0 %v1512
    %2138 = vmatpush.msra.mxu0 %v1509
    %2139 = vmatpush.msra.mxu0 %v1506
    %2140 = vmatpush.msra.mxu0 %v1503
    %2141 = vmatpush.msra.mxu0 %v1500
    %2142 = vmatpush.msra.mxu0 %v1497
    %2143 = vmatpush.msra.mxu0 %v1494
    %2144 = vmatpush.msra.mxu0 %v1491
    %2145 = vmatpush.msra.mxu0 %v1488
    %2146 = vmatpush.msra.mxu0 %v1485
    %2147 = vmatpush.msra.mxu0 %v1482
    %2148 = vmatmul.f32.gmra.mxu0 %v2089
    %v2149 = vpop.f32.mrf.mxu0
    %v2150 = vadd.f32 0.0, %v2149
    %2151 = vdwg.mxu0
    %v2152 = vld [vmem:[%s979] sm:$0xff]
    %v2153 = vld [vmem:[%s979 + $0x8] sm:$0xff]
    %v2154 = vld [vmem:[%s979 + $0x10] sm:$0xff]
    %v2155 = vadd.f32 %v2152, %v2110
    %v2156 = vxor.u32 %v2155, 2147483648
    %v2157 = vmul.f32 %v2156, 1.442695
    %v2158 = vpow.pop %v2157
    %v2159 = vadd.f32 %v2158, 1.0
    %v2160 = vrcp.pop %v2159
    %v2161 = vmul.f32 %v2159, %v2160
    %v2162 = vsub.f32 1.0, %v2161
    %v2163 = vmul.f32 %v2160, %v2162
    %v2164 = vadd.f32 %v2160, %v2163
    %vm2165 = vweird.f32 %v2159
    %vm2166 = vweird.f32 %v2160
    %vm2167 = vmor %vm2165, %vm2166
    %v2168 = vsel %vm2167, %v2160, %v2164
    %v2169 = vand.u32 2147483647, %v2159
    %vm2170 = vcmp.eq.f32.partialorder %v2169, 8.507059e+37
    %v2171 = vand.u32 %v2159, 2147483648
    %v2172 = vor.u32 1.1754944e-38, %v2171
    %v2173 = vsel %vm2170, %v2172, %v2168
    %v2174 = vmul.f32 1.0, %v2173
    %v2175 = vadd.f32 %v2153, %v2130
    %v2176 = vxor.u32 %v2175, 2147483648
    %v2177 = vmul.f32 %v2176, 1.442695
    %v2178 = vpow.pop %v2177
    %v2179 = vadd.f32 %v2178, 1.0
    %v2180 = vrcp.pop %v2179
    %v2181 = vmul.f32 %v2179, %v2180
    %v2182 = vsub.f32 1.0, %v2181
    %v2183 = vmul.f32 %v2180, %v2182
    %v2184 = vadd.f32 %v2180, %v2183
    %vm2185 = vweird.f32 %v2179
    %vm2186 = vweird.f32 %v2180
    %vm2187 = vmor %vm2185, %vm2186
    %v2188 = vsel %vm2187, %v2180, %v2184
    %v2189 = vand.u32 2147483647, %v2179
    %vm2190 = vcmp.eq.f32.partialorder %v2189, 8.507059e+37
    %v2191 = vand.u32 %v2179, 2147483648
    %v2192 = vor.u32 1.1754944e-38, %v2191
    %v2193 = vsel %vm2190, %v2192, %v2188
    %v2194 = vmul.f32 1.0, %v2193
    %v2195 = vadd.f32 %v2150, %v1530
    %v2196 = vmul.f32 %v2174, %v2195
    %v2197 = vadd.f32 %v2154, %v2196
    %v2198 = vtanh.pop %v2197
    %v2199 = vsub.f32 %v2089, %v2198
    %v2200 = vmul.f32 %v2194, %v2199
    %v2201 = vadd.f32 %v2198, %v2200
    %s2202 = scalar_lea.vmem [#allocation12], 40
    %2203 = vst [vmem:[%s2202] sm:$0xff] %v2201
    %2204 = vmatpush.msra.mxu0 %v1525
    %2205 = vmatpush.msra.mxu0 %v1522
    %2206 = vmatpush.msra.mxu0 %v1519
    %2207 = vmatpush.msra.mxu0 %v1516
    %2208 = vmatpush.msra.mxu0 %v1513
    %2209 = vmatpush.msra.mxu0 %v1510
    %2210 = vmatpush.msra.mxu0 %v1507
    %2211 = vmatpush.msra.mxu0 %v1504
    %2212 = vmatpush.msra.mxu0 %v1501
    %2213 = vmatpush.msra.mxu0 %v1498
    %2214 = vmatpush.msra.mxu0 %v1495
    %2215 = vmatpush.msra.mxu0 %v1492
    %2216 = vmatpush.msra.mxu0 %v1489
    %2217 = vmatpush.msra.mxu0 %v1486
    %2218 = vmatpush.msra.mxu0 %v1483
    %2219 = vmatpush.msra.mxu0 %v1480
    %2220 = vmatmul.f32.gmra.mxu0 %v2201
    %v2221 = vpop.f32.mrf.mxu0
    %v2222 = vadd.f32 0.0, %v2221
    %2223 = vdwg.mxu0
    %2224 = vmatpush.msra.mxu0 %v1526
    %2225 = vmatpush.msra.mxu0 %v1523
    %2226 = vmatpush.msra.mxu0 %v1520
    %2227 = vmatpush.msra.mxu0 %v1517
    %2228 = vmatpush.msra.mxu0 %v1514
    %2229 = vmatpush.msra.mxu0 %v1511
    %2230 = vmatpush.msra.mxu0 %v1508
    %2231 = vmatpush.msra.mxu0 %v1505
    %2232 = vmatpush.msra.mxu0 %v1502
    %2233 = vmatpush.msra.mxu0 %v1499
    %2234 = vmatpush.msra.mxu0 %v1496
    %2235 = vmatpush.msra.mxu0 %v1493
    %2236 = vmatpush.msra.mxu0 %v1490
    %2237 = vmatpush.msra.mxu0 %v1487
    %2238 = vmatpush.msra.mxu0 %v1484
    %2239 = vmatpush.msra.mxu0 %v1481
    %2240 = vmatmul.f32.gmra.mxu0 %v2201
    %v2241 = vpop.f32.mrf.mxu0
    %v2242 = vadd.f32 0.0, %v2241
    %2243 = vdwg.mxu0
    %2244 = vmatpush.msra.mxu0 %v1527
    %2245 = vmatpush.msra.mxu0 %v1524
    %2246 = vmatpush.msra.mxu0 %v1521
    %2247 = vmatpush.msra.mxu0 %v1518
    %2248 = vmatpush.msra.mxu0 %v1515
    %2249 = vmatpush.msra.mxu0 %v1512
    %2250 = vmatpush.msra.mxu0 %v1509
    %2251 = vmatpush.msra.mxu0 %v1506
    %2252 = vmatpush.msra.mxu0 %v1503
    %2253 = vmatpush.msra.mxu0 %v1500
    %2254 = vmatpush.msra.mxu0 %v1497
    %2255 = vmatpush.msra.mxu0 %v1494
    %2256 = vmatpush.msra.mxu0 %v1491
    %2257 = vmatpush.msra.mxu0 %v1488
    %2258 = vmatpush.msra.mxu0 %v1485
    %2259 = vmatpush.msra.mxu0 %v1482
    %2260 = vmatmul.f32.gmra.mxu0 %v2201
    %v2261 = vpop.f32.mrf.mxu0
    %v2262 = vadd.f32 0.0, %v2261
    %2263 = vdwg.mxu0
    %v2264 = vld [vmem:[%s1094] sm:$0xff]
    %v2265 = vld [vmem:[%s1094 + $0x8] sm:$0xff]
    %v2266 = vld [vmem:[%s1094 + $0x10] sm:$0xff]
    %v2267 = vadd.f32 %v2264, %v2222
    %v2268 = vxor.u32 %v2267, 2147483648
    %v2269 = vmul.f32 %v2268, 1.442695
    %v2270 = vpow.pop %v2269
    %v2271 = vadd.f32 %v2270, 1.0
    %v2272 = vrcp.pop %v2271
    %v2273 = vmul.f32 %v2271, %v2272
    %v2274 = vsub.f32 1.0, %v2273
    %v2275 = vmul.f32 %v2272, %v2274
    %v2276 = vadd.f32 %v2272, %v2275
    %vm2277 = vweird.f32 %v2271
    %vm2278 = vweird.f32 %v2272
    %vm2279 = vmor %vm2277, %vm2278
    %v2280 = vsel %vm2279, %v2272, %v2276
    %v2281 = vand.u32 2147483647, %v2271
    %vm2282 = vcmp.eq.f32.partialorder %v2281, 8.507059e+37
    %v2283 = vand.u32 %v2271, 2147483648
    %v2284 = vor.u32 1.1754944e-38, %v2283
    %v2285 = vsel %vm2282, %v2284, %v2280
    %v2286 = vmul.f32 1.0, %v2285
    %v2287 = vadd.f32 %v2265, %v2242
    %v2288 = vxor.u32 %v2287, 2147483648
    %v2289 = vmul.f32 %v2288, 1.442695
    %v2290 = vpow.pop %v2289
    %v2291 = vadd.f32 %v2290, 1.0
    %v2292 = vrcp.pop %v2291
    %v2293 = vmul.f32 %v2291, %v2292
    %v2294 = vsub.f32 1.0, %v2293
    %v2295 = vmul.f32 %v2292, %v2294
    %v2296 = vadd.f32 %v2292, %v2295
    %vm2297 = vweird.f32 %v2291
    %vm2298 = vweird.f32 %v2292
    %vm2299 = vmor %vm2297, %vm2298
    %v2300 = vsel %vm2299, %v2292, %v2296
    %v2301 = vand.u32 2147483647, %v2291
    %vm2302 = vcmp.eq.f32.partialorder %v2301, 8.507059e+37
    %v2303 = vand.u32 %v2291, 2147483648
    %v2304 = vor.u32 1.1754944e-38, %v2303
    %v2305 = vsel %vm2302, %v2304, %v2300
    %v2306 = vmul.f32 1.0, %v2305
    %v2307 = vadd.f32 %v2262, %v1530
    %v2308 = vmul.f32 %v2286, %v2307
    %v2309 = vadd.f32 %v2266, %v2308
    %v2310 = vtanh.pop %v2309
    %v2311 = vsub.f32 %v2201, %v2310
    %v2312 = vmul.f32 %v2306, %v2311
    %v2313 = vadd.f32 %v2310, %v2312
    %s2314 = scalar_lea.vmem [#allocation12], 48
    %2315 = vst [vmem:[%s2314] sm:$0xff] %v2313
    %2316 = vmatpush.msra.mxu0 %v1525
    %2317 = vmatpush.msra.mxu0 %v1522
    %2318 = vmatpush.msra.mxu0 %v1519
    %2319 = vmatpush.msra.mxu0 %v1516
    %2320 = vmatpush.msra.mxu0 %v1513
    %2321 = vmatpush.msra.mxu0 %v1510
    %2322 = vmatpush.msra.mxu0 %v1507
    %2323 = vmatpush.msra.mxu0 %v1504
    %2324 = vmatpush.msra.mxu0 %v1501
    %2325 = vmatpush.msra.mxu0 %v1498
    %2326 = vmatpush.msra.mxu0 %v1495
    %2327 = vmatpush.msra.mxu0 %v1492
    %2328 = vmatpush.msra.mxu0 %v1489
    %2329 = vmatpush.msra.mxu0 %v1486
    %2330 = vmatpush.msra.mxu0 %v1483
    %2331 = vmatpush.msra.mxu0 %v1480
    %2332 = vmatmul.f32.gmra.mxu0 %v2313
    %v2333 = vpop.f32.mrf.mxu0
    %v2334 = vadd.f32 0.0, %v2333
    %2335 = vdwg.mxu0
    %2336 = vmatpush.msra.mxu0 %v1526
    %2337 = vmatpush.msra.mxu0 %v1523
    %2338 = vmatpush.msra.mxu0 %v1520
    %2339 = vmatpush.msra.mxu0 %v1517
    %2340 = vmatpush.msra.mxu0 %v1514
    %2341 = vmatpush.msra.mxu0 %v1511
    %2342 = vmatpush.msra.mxu0 %v1508
    %2343 = vmatpush.msra.mxu0 %v1505
    %2344 = vmatpush.msra.mxu0 %v1502
    %2345 = vmatpush.msra.mxu0 %v1499
    %2346 = vmatpush.msra.mxu0 %v1496
    %2347 = vmatpush.msra.mxu0 %v1493
    %2348 = vmatpush.msra.mxu0 %v1490
    %2349 = vmatpush.msra.mxu0 %v1487
    %2350 = vmatpush.msra.mxu0 %v1484
    %2351 = vmatpush.msra.mxu0 %v1481
    %2352 = vmatmul.f32.gmra.mxu0 %v2313
    %v2353 = vpop.f32.mrf.mxu0
    %v2354 = vadd.f32 0.0, %v2353
    %2355 = vdwg.mxu0
    %2356 = vmatpush.msra.mxu0 %v1527
    %2357 = vmatpush.msra.mxu0 %v1524
    %2358 = vmatpush.msra.mxu0 %v1521
    %2359 = vmatpush.msra.mxu0 %v1518
    %2360 = vmatpush.msra.mxu0 %v1515
    %2361 = vmatpush.msra.mxu0 %v1512
    %2362 = vmatpush.msra.mxu0 %v1509
    %2363 = vmatpush.msra.mxu0 %v1506
    %2364 = vmatpush.msra.mxu0 %v1503
    %2365 = vmatpush.msra.mxu0 %v1500
    %2366 = vmatpush.msra.mxu0 %v1497
    %2367 = vmatpush.msra.mxu0 %v1494
    %2368 = vmatpush.msra.mxu0 %v1491
    %2369 = vmatpush.msra.mxu0 %v1488
    %2370 = vmatpush.msra.mxu0 %v1485
    %2371 = vmatpush.msra.mxu0 %v1482
    %2372 = vmatmul.f32.gmra.mxu0 %v2313
    %v2373 = vpop.f32.mrf.mxu0
    %v2374 = vadd.f32 0.0, %v2373
    %2375 = vdwg.mxu0
    %v2376 = vld [vmem:[%s1209] sm:$0xff]
    %v2377 = vld [vmem:[%s1209 + $0x8] sm:$0xff]
    %v2378 = vld [vmem:[%s1209 + $0x10] sm:$0xff]
    %v2379 = vadd.f32 %v2376, %v2334
    %v2380 = vxor.u32 %v2379, 2147483648
    %v2381 = vmul.f32 %v2380, 1.442695
    %v2382 = vpow.pop %v2381
    %v2383 = vadd.f32 %v2382, 1.0
    %v2384 = vrcp.pop %v2383
    %v2385 = vmul.f32 %v2383, %v2384
    %v2386 = vsub.f32 1.0, %v2385
    %v2387 = vmul.f32 %v2384, %v2386
    %v2388 = vadd.f32 %v2384, %v2387
    %vm2389 = vweird.f32 %v2383
    %vm2390 = vweird.f32 %v2384
    %vm2391 = vmor %vm2389, %vm2390
    %v2392 = vsel %vm2391, %v2384, %v2388
    %v2393 = vand.u32 2147483647, %v2383
    %vm2394 = vcmp.eq.f32.partialorder %v2393, 8.507059e+37
    %v2395 = vand.u32 %v2383, 2147483648
    %v2396 = vor.u32 1.1754944e-38, %v2395
    %v2397 = vsel %vm2394, %v2396, %v2392
    %v2398 = vmul.f32 1.0, %v2397
    %v2399 = vadd.f32 %v2377, %v2354
    %v2400 = vxor.u32 %v2399, 2147483648
    %v2401 = vmul.f32 %v2400, 1.442695
    %v2402 = vpow.pop %v2401
    %v2403 = vadd.f32 %v2402, 1.0
    %v2404 = vrcp.pop %v2403
    %v2405 = vmul.f32 %v2403, %v2404
    %v2406 = vsub.f32 1.0, %v2405
    %v2407 = vmul.f32 %v2404, %v2406
    %v2408 = vadd.f32 %v2404, %v2407
    %vm2409 = vweird.f32 %v2403
    %vm2410 = vweird.f32 %v2404
    %vm2411 = vmor %vm2409, %vm2410
    %v2412 = vsel %vm2411, %v2404, %v2408
    %v2413 = vand.u32 2147483647, %v2403
    %vm2414 = vcmp.eq.f32.partialorder %v2413, 8.507059e+37
    %v2415 = vand.u32 %v2403, 2147483648
    %v2416 = vor.u32 1.1754944e-38, %v2415
    %v2417 = vsel %vm2414, %v2416, %v2412
    %v2418 = vmul.f32 1.0, %v2417
    %v2419 = vadd.f32 %v2374, %v1530
    %v2420 = vmul.f32 %v2398, %v2419
    %v2421 = vadd.f32 %v2378, %v2420
    %v2422 = vtanh.pop %v2421
    %v2423 = vsub.f32 %v2313, %v2422
    %v2424 = vmul.f32 %v2418, %v2423
    %v2425 = vadd.f32 %v2422, %v2424
    %s2426 = scalar_lea.vmem [#allocation12], 56
    %2427 = vst [vmem:[%s2426] sm:$0xff] %v2425
    %2428 = vst [vmem:[#allocation4] sm:$0xff] %v2425
    // Predicated region
    $region66: #{tpu_custom_call.1} parent=1 // pred_check
      %p2429 = pneg %p90
    $region67: #{tpu_custom_call.1} parent=1 // pred_check_branch
      %2431 = sbr.rel (%p2429) target = $region69
    $region68: #{tpu_custom_call.1} parent=1 // pred_region
      %2432 = vst [vmem:[#allocation15] sm:$0xff] %v2425
    $region69: #{tpu_custom_call.1} parent=1 // pred_fallthru
      _
    // Predicated region
    $region70: #{tpu_custom_call.1} parent=1 // pred_check
      _
    $region71: #{tpu_custom_call.1} parent=1 // pred_check_branch
      %2434 = sbr.rel (0) target = $region73
    $region72: #{tpu_custom_call.1} parent=1 // pred_region
      %2436 = vsyncadd [#allocation8], 0
      %s2437 = sshll.u32 [#allocation12], 4
      %s2438 = int_to_ptr.vmem [resolvable:$true] %s2437
      %s2439 = sshll.u32 %s11, 4
      %s2440 = int_to_ptr.hbm [resolvable:$true] %s2439
      %2445 = dma.vmem_to_hbm [thread:$0]  %s2438, 1024, %s2440, [#allocation8], 128, 128, 8
    $region73: #{tpu_custom_call.1} parent=1 // pred_fallthru
      _
    // Predicated region
    $region74: #{tpu_custom_call.1} parent=1 // pred_check
      _
    $region75: #{tpu_custom_call.1} parent=1 // pred_check_branch
      %2447 = sbr.rel (0) target = $region77
    $region76: #{tpu_custom_call.1} parent=1 // pred_region
      %2449 = vsyncadd [#allocation14], 0
      %s2451 = sshll.u32 [#allocation13], 4
      %s2452 = int_to_ptr.vmem [resolvable:$true] %s2451
      %s2453 = sshll.u32 %s12, 4
      %s2454 = int_to_ptr.hbm [resolvable:$true] %s2453
      %2456 = dma.vmem_to_hbm [thread:$0]  %s2452, 128, %s2454, [#allocation14]
    $region77: #{tpu_custom_call.1} parent=1 // pred_fallthru
      _
    // Predicated region
    $region78: #{tpu_custom_call.1} parent=1 // pred_check
      _
    $region79: #{tpu_custom_call.1} parent=1 // pred_check_branch
      %2458 = sbr.rel (0) target = $region81
    $region80: #{tpu_custom_call.1} parent=1 // pred_region
      %2460 = vsyncadd [#allocation14], 0
      %s2462 = sshll.u32 [#allocation15], 4
      %s2463 = int_to_ptr.vmem [resolvable:$true] %s2462
      %s2464 = sshll.u32 %s13, 4
      %s2465 = int_to_ptr.hbm [resolvable:$true] %s2464
      %2467 = dma.vmem_to_hbm [thread:$0]  %s2463, 128, %s2465, [#allocation14]
    $region81: #{tpu_custom_call.1} parent=1 // pred_fallthru
      _
    // Predicated region
    $region82: #{tpu_custom_call.1} parent=1 // pred_check
      _
    $region83: #{tpu_custom_call.1} parent=1 // pred_check_branch
      %2469 = sbr.rel (0) target = $region85
    $region84: #{tpu_custom_call.1} parent=1 // pred_region
      %2471 = dma.done [#allocation8], 1024
    $region85: #{tpu_custom_call.1} parent=1 // pred_fallthru
      _
    // Predicated region
    $region86: #{tpu_custom_call.1} parent=1 // pred_check
      _
    $region87: #{tpu_custom_call.1} parent=1 // pred_check_branch
      %2473 = sbr.rel (0) target = $region89
    $region88: #{tpu_custom_call.1} parent=1 // pred_region
      %2475 = dma.done [#allocation14], 128
    $region89: #{tpu_custom_call.1} parent=1 // pred_fallthru
      _
    // Predicated region
    $region90: #{tpu_custom_call.1} parent=1 // pred_check
      _
    $region91: #{tpu_custom_call.1} parent=1 // pred_check_branch
      %2477 = sbr.rel (0) target = $region93
    $region92: #{tpu_custom_call.1} parent=1 // pred_region
      %2479 = dma.done [#allocation14], 128
    $region93: #{tpu_custom_call.1} parent=1 // pred_fallthru
      _
    %2480 = vsyncpa [#allocation7], 1
    %2481 = vsyncpa [#allocation10], 1
    %2482 = vsyncpa [#allocation8], 1
    %2483 = vsyncpa [#allocation14], 1

</llo_original>
